<compile_context>
chip_gen: v5e
topology: v5e:2x2
jax: 0.10.0
libtpu: 0.0.40
codegen_flags: <defaults>
</compile_context>

<pallas_src>
import functools

import jax
import jax.numpy as jnp
import numpy as np
from jax.experimental import pallas as pl
from jax.experimental.pallas import tpu as pltpu

K = 7          # module's default kernel size
SLOPE = 0.2    # LeakyReLU negative slope
EPS = 1e-5     # InstanceNorm2d eps


def _round_up(v, m):
    return ((v + m - 1) // m) * m


def _gcn_kernel(x_ref, w1l_ref, w1r_ref, w2l_ref, w2r_ref,
                b1l_ref, b1r_ref, b2_ref, l2m_ref, r1m_ref,
                o_ref,
                xhp_ref, xl1e_ref, r1_ref, stk1l_ref, stk1r_ref, stk2_ref,
                *, bt, cin_r, cout, h, w, k):
    """One batch tile of `bt` images, flat (lane-dense) spatial layout.

    x_ref    : (bt, cin_r, h*w)       input tile (channels pre-padded to cin_r)
    w1l_ref  : (cout, k*cin_r) bf16   conv_l1 taps stacked along contraction
    w1r_ref  : (cout, k*cin_r) bf16   conv_r1 taps stacked
    w2l_ref  : (cout, k*cout)  bf16   conv_l2 taps stacked
    w2r_ref  : (k, cout, cout) bf16   conv_r2 per-tap matrices
    b1l/b1r/b2 : (cout, 1) f32        biases (b2 = conv_l2 bias + conv_r2 bias)
    l2m_ref  : (k, h*w)        f32    conv_l2 W-boundary mask per tap
    r1m_ref  : (1, bt*h2w)     f32    conv_r1 valid-column mask per image
    o_ref    : (bt, cout, h*w)        output tile
    xhp_ref  : (cin_r, bt*(h2w+2p))   scratch: per-image H-padded input + halo
    xl1e_ref : (cout, bt*(h*w+2p))    scratch: conv_l1 output + flat halo
    r1_ref   : (cout, bt*h2w)         scratch: conv_r1 output (W pad embedded)
    stk1l/stk1r : (k*cin_r, bt*hw / bt*h2w) scratch: layer-1 shifted-tap stacks
    stk2_ref : (k*cout, bt*hw)        scratch: conv_l2 shifted-tap stack
    """
    p = (k - 1) // 2
    hw = h * w
    h2w = (h + 2 * p) * w
    seg_x = h2w + 2 * p          # per-image xhp segment length
    seg_e = hw + 2 * p           # per-image xl1e segment length
    lb = p * w + p               # offset of x inside its xhp segment
    f32 = jnp.float32
    bf16 = jnp.bfloat16

    # --- stage 0: per-image H-padded flat input. Only the halo lanes are
    # zeroed (the interior is fully overwritten); done every step so the
    # "parallel" batch-tile axis stays correct under megacore sharding.
    for b in range(bt):
        s0 = b * seg_x
        xhp_ref[:, s0:s0 + lb] = jnp.zeros((cin_r, lb), f32)
        xhp_ref[:, s0 + lb:s0 + lb + hw] = x_ref[b].astype(f32)
        xhp_ref[:, s0 + lb + hw:s0 + seg_x] = jnp.zeros(
            (cin_r, seg_x - lb - hw), f32)

    # --- stage 1: layer 1 (both branches) as ONE MXU dot each over a
    # shifted-tap stack (contraction k*cin_r, width bt*hw / bt*h2w).
    for t in range(k):
        r0 = t * cin_r
        for b in range(bt):
            s0 = b * seg_x
            # conv_l1 tap t shifts by whole rows (t*w lanes) on the H-padded grid.
            stk1l_ref[r0:r0 + cin_r, b * hw:(b + 1) * hw] = \
                xhp_ref[:, s0 + p + t * w:s0 + p + t * w + hw]
            # conv_r1 tap t shifts by t lanes (quirk: the (1,k) conv runs on
            # the H-padded grid).
            stk1r_ref[r0:r0 + cin_r, b * h2w:(b + 1) * h2w] = \
                xhp_ref[:, s0 + t:s0 + t + h2w]

    xl1 = jnp.dot(w1l_ref[...], stk1l_ref[...].astype(bf16),
                  preferred_element_type=f32) + b1l_ref[...]
    # conv_r1 output with conv_r2's W padding embedded as zero columns.
    r1_ref[...] = (jnp.dot(w1r_ref[...], stk1r_ref[...].astype(bf16),
                           preferred_element_type=f32)
                   + b1r_ref[...]) * r1m_ref[...]

    # conv_l1 output with a +-p flat halo per image (for conv_l2's lane taps).
    for b in range(bt):
        e0 = b * seg_e
        xl1e_ref[:, e0:e0 + p] = jnp.zeros((cout, p), f32)
        xl1e_ref[:, e0 + p:e0 + p + hw] = xl1[:, b * hw:(b + 1) * hw]
        xl1e_ref[:, e0 + p + hw:e0 + seg_e] = jnp.zeros((cout, p), f32)

    # --- stage 2: conv_l2 as one fused dot over a masked shifted-tap stack.
    for t in range(k):
        r0 = t * cout
        m_t = l2m_ref[t:t + 1, :]                       # (1, hw) boundary mask
        for b in range(bt):
            e0 = b * seg_e
            stk2_ref[r0:r0 + cout, b * hw:(b + 1) * hw] = \
                xl1e_ref[:, e0 + t:e0 + t + hw] * m_t
    s_l = jnp.dot(w2l_ref[...], stk2_ref[...].astype(bf16),
                  preferred_element_type=f32)

    # --- stage 3: conv_r2 accumulated with per-tap dots straight off r1
    # (no shifted copies), then InstanceNorm2d + LeakyReLU(0.2) per image.
    inv_hw = 1.0 / float(hw)
    for b in range(bt):
        q0 = b * h2w
        acc = s_l[:, b * hw:(b + 1) * hw] + b2_ref[...]
        for t in range(k):
            acc = acc + jnp.dot(
                w2r_ref[t],
                r1_ref[:, q0 + t * w:q0 + t * w + hw].astype(bf16),
                preferred_element_type=f32)
        mean = jnp.sum(acc, axis=1, keepdims=True) * inv_hw
        cen = acc - mean
        var = jnp.sum(cen * cen, axis=1, keepdims=True) * inv_hw
        y = cen * jax.lax.rsqrt(var + EPS)
        y = jnp.maximum(y, SLOPE * y)                   # LeakyReLU(0.2)
        o_ref[b] = y.astype(o_ref.dtype)


def gcn_block_forward(x, params, k=K, batch_tile=None):
    """x: (N, Cin, H, W) float32.  params: the 8 conv weights/biases."""
    wl1, bl1, wl2, bl2, wr1, br1, wr2, br2 = params
    n, cin, h, w = x.shape
    cout = wl1.shape[0]
    p = (k - 1) // 2
    assert w > k - 1, "conv_r1's padding quirk requires W > k-1"

    hw = h * w
    h2w = (h + 2 * p) * w
    cin_r = _round_up(cin, 8)
    bt = batch_tile if batch_tile is not None else max(1, min(8, n))
    n_pad = _round_up(n, bt)
    f32, bf16 = jnp.float32, jnp.bfloat16

    # ---- weight / bias repack (tiny, wrapper-side); bf16 MXU operands. ----
    # layer-1 stacked taps: column t*cin_r + ci multiplies tap t, channel ci.
    pad_ci = ((0, 0), (0, 0), (0, cin_r - cin))
    w1l = jnp.pad(jnp.transpose(wl1[:, :, :, 0], (0, 2, 1)), pad_ci)
    w1l = w1l.reshape(cout, k * cin_r).astype(bf16)
    w1r = jnp.pad(jnp.transpose(wr1[:, :, 0, :], (0, 2, 1)), pad_ci)
    w1r = w1r.reshape(cout, k * cin_r).astype(bf16)
    # conv_l2 stacked taps (cout, k*cout); conv_r2 per-tap (k, cout, cout).
    w2l = jnp.transpose(wl2[:, :, 0, :], (0, 2, 1)).reshape(
        cout, k * cout).astype(bf16)
    w2r = jnp.transpose(wr2[:, :, :, 0], (2, 0, 1)).astype(bf16)

    b1l = bl1.reshape(cout, 1).astype(f32)
    b1r = br1.reshape(cout, 1).astype(f32)
    b2 = (bl2 + br2).reshape(cout, 1).astype(f32)

    # ---- static W-boundary masks (host numpy, tiny VMEM inputs). ----
    cols = np.arange(hw) % w
    taps = np.arange(k)[:, None] - p
    l2mask = jnp.asarray(((cols[None, :] + taps >= 0)
                          & (cols[None, :] + taps < w)).astype(np.float32))
    qcols = np.arange(h2w) % w
    r1m_img = ((qcols >= p) & (qcols < p + (w - k + 1))).astype(np.float32)
    r1mask = jnp.asarray(np.tile(r1m_img, bt)[None, :])          # (1, bt*h2w)

    # ---- input: pad channels to a sublane multiple and batch to bt multiple.
    xin = jnp.pad(x.reshape(n, cin, hw).astype(f32),
                  ((0, n_pad - n), (0, cin_r - cin), (0, 0)))

    kernel = functools.partial(_gcn_kernel, bt=bt, cin_r=cin_r, cout=cout,
                               h=h, w=w, k=k)

    def full_spec(a):
        zeros = (0,) * a.ndim
        return pl.BlockSpec(a.shape, lambda i, z=zeros: z)

    # TODO(synk): for very large H*W add a spatial (row-tile + halo) grid axis
    # so per-step scratch (which scales with bt*H*W) fits v7x's 64 MiB VMEM;
    # unnecessary at these shapes.
    scratch = [
        pltpu.VMEM((cin_r, bt * (h2w + 2 * p)), f32),   # H-padded flat input
        pltpu.VMEM((cout, bt * (hw + 2 * p)), f32),     # conv_l1 output + halo
        pltpu.VMEM((cout, bt * h2w), f32),              # conv_r1 output
        pltpu.VMEM((k * cin_r, bt * hw), f32),          # layer-1 left tap stack
        pltpu.VMEM((k * cin_r, bt * h2w), f32),         # layer-1 right tap stack
        pltpu.VMEM((k * cout, bt * hw), f32),           # conv_l2 tap stack
    ]

    out_flat = pl.pallas_call(
        kernel,
        out_shape=jax.ShapeDtypeStruct((n_pad, cout, hw), x.dtype),
        grid_spec=pltpu.PrefetchScalarGridSpec(
            num_scalar_prefetch=0,
            grid=(n_pad // bt,),
            in_specs=[
                pl.BlockSpec((bt, cin_r, hw), lambda i: (i, 0, 0)),
                full_spec(w1l), full_spec(w1r), full_spec(w2l), full_spec(w2r),
                full_spec(b1l), full_spec(b1r), full_spec(b2),
                full_spec(l2mask), full_spec(r1mask),
            ],
            out_specs=pl.BlockSpec((bt, cout, hw), lambda i: (i, 0, 0)),
            scratch_shapes=scratch,
        ),
        compiler_params=pltpu.CompilerParams(
            dimension_semantics=("parallel",)),
    )(xin, w1l, w1r, w2l, w2r, b1l, b1r, b2, l2mask, r1mask)

    return out_flat[:n].reshape(n, cout, h, w)


# ----------------------------- pure-JAX reference -----------------------------
def _conv2d(x, w, b, pad_hw):
    out = jax.lax.conv_general_dilated(
        x, w, window_strides=(1, 1),
        padding=((pad_hw[0], pad_hw[0]), (pad_hw[1], pad_hw[1])),
        dimension_numbers=("NCHW", "OIHW", "NCHW"),
        precision=jax.lax.Precision.HIGHEST)
    return out + b[None, :, None, None]


def gcn_block_reference(x, params):
    wl1, bl1, wl2, bl2, wr1, br1, wr2, br2 = params
    p = (K - 1) // 2
    xl = _conv2d(x, wl1, bl1, (p, 0))
    xl = _conv2d(xl, wl2, bl2, (0, p))
    xr = _conv2d(x, wr1, br1, (p, 0))   # quirk: pads H even though kernel is (1,k)
    xr = _conv2d(xr, wr2, br2, (0, p))  # quirk: pads W even though kernel is (k,1)
    s = xl + xr
    mean = jnp.mean(s, axis=(2, 3), keepdims=True)
    var = jnp.mean((s - mean) ** 2, axis=(2, 3), keepdims=True)
    y = (s - mean) / jnp.sqrt(var + EPS)
    return jnp.where(y >= 0, y, SLOPE * y)


if __name__ == "__main__":
    N, Cin, Cout, H, W = 2, 4, 8, 16, 16

    key = jax.random.PRNGKey(0)
    ks = jax.random.split(key, 9)
    params = (
        jax.random.normal(ks[0], (Cout, Cin, K, 1), jnp.float32) * 0.1,   # conv_l1 w
        jax.random.normal(ks[1], (Cout,), jnp.float32) * 0.1,             # conv_l1 b
        jax.random.normal(ks[2], (Cout, Cout, 1, K), jnp.float32) * 0.1,  # conv_l2 w
        jax.random.normal(ks[3], (Cout,), jnp.float32) * 0.1,             # conv_l2 b
        jax.random.normal(ks[4], (Cout, Cin, 1, K), jnp.float32) * 0.1,   # conv_r1 w
        jax.random.normal(ks[5], (Cout,), jnp.float32) * 0.1,             # conv_r1 b
        jax.random.normal(ks[6], (Cout, Cout, K, 1), jnp.float32) * 0.1,  # conv_r2 w
        jax.random.normal(ks[7], (Cout,), jnp.float32) * 0.1,             # conv_r2 b
    )
    x = jax.random.normal(ks[8], (N, Cin, H, W), jnp.float32)

    out = jax.block_until_ready(gcn_block_forward(x, params))
    ref = jax.block_until_ready(gcn_block_reference(x, params))

    # Kernel uses single-pass bf16 MXU matmuls (f32 accumulate) against an
    # f32/HIGHEST conv reference; after InstanceNorm the worst-case deviation
    # is ~1e-2, so use a 2e-2 bound.
    np.testing.assert_allclose(np.asarray(out), np.asarray(ref),
                               rtol=2e-2, atol=2e-2)
    print("KERNEL_OK")
</pallas_src>

<mosaic_0001>
module attributes {stable_mosaic.version = 11 : i64} {
  func.func @_gcn_kernel(%arg0: i32, %arg1: memref<2x8x256xf32, #tpu.memory_space<vmem>>, %arg2: memref<8x56xbf16, #tpu.memory_space<vmem>>, %arg3: memref<8x56xbf16, #tpu.memory_space<vmem>>, %arg4: memref<8x56xbf16, #tpu.memory_space<vmem>>, %arg5: memref<7x8x8xbf16, #tpu.memory_space<vmem>>, %arg6: memref<8x1xf32, #tpu.memory_space<vmem>>, %arg7: memref<8x1xf32, #tpu.memory_space<vmem>>, %arg8: memref<8x1xf32, #tpu.memory_space<vmem>>, %arg9: memref<7x256xf32, #tpu.memory_space<vmem>>, %arg10: memref<1x704xf32, #tpu.memory_space<vmem>>, %arg11: memref<2x8x256xf32, #tpu.memory_space<vmem>>, %arg12: memref<8x716xf32, #tpu.memory_space<vmem>>, %arg13: memref<8x524xf32, #tpu.memory_space<vmem>>, %arg14: memref<8x704xf32, #tpu.memory_space<vmem>>, %arg15: memref<56x512xf32, #tpu.memory_space<vmem>>, %arg16: memref<56x704xf32, #tpu.memory_space<vmem>>, %arg17: memref<56x512xf32, #tpu.memory_space<vmem>>) attributes {dimension_semantics = [#tpu.dimension_semantics<parallel>], iteration_bounds = array<i64: 1>, scalar_prefetch = 0 : i64, scratch_operands = 6 : i64, tpu.core_type = #tpu.core_type<tc>, window_params = [{transform_indices = @transform_0, window_bounds = array<i64: 2, 8, 256>}, {pipeline_mode = #tpu.pipeline_mode<synchronous>, transform_indices = @transform_1, window_bounds = array<i64: 8, 56>}, {pipeline_mode = #tpu.pipeline_mode<synchronous>, transform_indices = @transform_2, window_bounds = array<i64: 8, 56>}, {pipeline_mode = #tpu.pipeline_mode<synchronous>, transform_indices = @transform_3, window_bounds = array<i64: 8, 56>}, {pipeline_mode = #tpu.pipeline_mode<synchronous>, transform_indices = @transform_4, window_bounds = array<i64: 7, 8, 8>}, {pipeline_mode = #tpu.pipeline_mode<synchronous>, transform_indices = @transform_5, window_bounds = array<i64: 8, 1>}, {pipeline_mode = #tpu.pipeline_mode<synchronous>, transform_indices = @transform_6, window_bounds = array<i64: 8, 1>}, {pipeline_mode = #tpu.pipeline_mode<synchronous>, transform_indices = @transform_7, window_bounds = array<i64: 8, 1>}, {pipeline_mode = #tpu.pipeline_mode<synchronous>, transform_indices = @transform_8, window_bounds = array<i64: 7, 256>}, {pipeline_mode = #tpu.pipeline_mode<synchronous>, transform_indices = @transform_9, window_bounds = array<i64: 1, 704>}, {transform_indices = @transform_10, window_bounds = array<i64: 2, 8, 256>}]} {
    %cst = arith.constant 0.000000e+00 : f32
    %0 = vector.broadcast %cst : f32 to vector<8x51xf32>
    %c0 = arith.constant 0 : index
    %c0_0 = arith.constant 0 : index
    %1 = vector.load %arg12[%c0, %c0_0] : memref<8x716xf32, #tpu.memory_space<vmem>>, vector<8x51xf32>
    tpu.vector_store %arg12[%c0, %c0_0], %0 {strides = array<i32>} : memref<8x716xf32, #tpu.memory_space<vmem>>, vector<8x51xf32>,
    %c0_1 = arith.constant 0 : index
    %c0_2 = arith.constant 0 : index
    %c0_3 = arith.constant 0 : index
    %2 = vector.load %arg1[%c0_1, %c0_2, %c0_3] : memref<2x8x256xf32, #tpu.memory_space<vmem>>, vector<1x8x256xf32>
    %3 = vector.shape_cast %2 : vector<1x8x256xf32> to vector<8x256xf32>
    %c0_4 = arith.constant 0 : index
    %c51 = arith.constant 51 : index
    %4 = vector.load %arg12[%c0_4, %c51] : memref<8x716xf32, #tpu.memory_space<vmem>>, vector<8x256xf32>
    tpu.vector_store %arg12[%c0_4, %c51], %3 {strides = array<i32>} : memref<8x716xf32, #tpu.memory_space<vmem>>, vector<8x256xf32>,
    %cst_5 = arith.constant 0.000000e+00 : f32
    %5 = vector.broadcast %cst_5 : f32 to vector<8x51xf32>
    %c0_6 = arith.constant 0 : index
    %c307 = arith.constant 307 : index
    %6 = vector.load %arg12[%c0_6, %c307] : memref<8x716xf32, #tpu.memory_space<vmem>>, vector<8x51xf32>
    tpu.vector_store %arg12[%c0_6, %c307], %5 {strides = array<i32>} : memref<8x716xf32, #tpu.memory_space<vmem>>, vector<8x51xf32>,
    %cst_7 = arith.constant 0.000000e+00 : f32
    %7 = vector.broadcast %cst_7 : f32 to vector<8x51xf32>
    %c0_8 = arith.constant 0 : index
    %c358 = arith.constant 358 : index
    %8 = vector.load %arg12[%c0_8, %c358] : memref<8x716xf32, #tpu.memory_space<vmem>>, vector<8x51xf32>
    tpu.vector_store %arg12[%c0_8, %c358], %7 {strides = array<i32>} : memref<8x716xf32, #tpu.memory_space<vmem>>, vector<8x51xf32>,
    %c1 = arith.constant 1 : index
    %c0_9 = arith.constant 0 : index
    %c0_10 = arith.constant 0 : index
    %9 = vector.load %arg1[%c1, %c0_9, %c0_10] : memref<2x8x256xf32, #tpu.memory_space<vmem>>, vector<1x8x256xf32>
    %10 = vector.shape_cast %9 : vector<1x8x256xf32> to vector<8x256xf32>
    %c0_11 = arith.constant 0 : index
    %c409 = arith.constant 409 : index
    %11 = vector.load %arg12[%c0_11, %c409] : memref<8x716xf32, #tpu.memory_space<vmem>>, vector<8x256xf32>
    tpu.vector_store %arg12[%c0_11, %c409], %10 {strides = array<i32>} : memref<8x716xf32, #tpu.memory_space<vmem>>, vector<8x256xf32>,
    %cst_12 = arith.constant 0.000000e+00 : f32
    %12 = vector.broadcast %cst_12 : f32 to vector<8x51xf32>
    %c0_13 = arith.constant 0 : index
    %c665 = arith.constant 665 : index
    %13 = vector.load %arg12[%c0_13, %c665] : memref<8x716xf32, #tpu.memory_space<vmem>>, vector<8x51xf32>
    tpu.vector_store %arg12[%c0_13, %c665], %12 {strides = array<i32>} : memref<8x716xf32, #tpu.memory_space<vmem>>, vector<8x51xf32>,
    %c0_14 = arith.constant 0 : index
    %c3 = arith.constant 3 : index
    %14 = vector.load %arg12[%c0_14, %c3] : memref<8x716xf32, #tpu.memory_space<vmem>>, vector<8x256xf32>
    %c0_15 = arith.constant 0 : index
    %c0_16 = arith.constant 0 : index
    %15 = vector.load %arg15[%c0_15, %c0_16] : memref<56x512xf32, #tpu.memory_space<vmem>>, vector<8x256xf32>
    tpu.vector_store %arg15[%c0_15, %c0_16], %14 {strides = array<i32>} : memref<56x512xf32, #tpu.memory_space<vmem>>, vector<8x256xf32>,
    %c0_17 = arith.constant 0 : index
    %c0_18 = arith.constant 0 : index
    %16 = vector.load %arg12[%c0_17, %c0_18] : memref<8x716xf32, #tpu.memory_space<vmem>>, vector<8x352xf32>
    %c0_19 = arith.constant 0 : index
    %c0_20 = arith.constant 0 : index
    %17 = vector.load %arg16[%c0_19, %c0_20] : memref<56x704xf32, #tpu.memory_space<vmem>>, vector<8x352xf32>
    tpu.vector_store %arg16[%c0_19, %c0_20], %16 {strides = array<i32>} : memref<56x704xf32, #tpu.memory_space<vmem>>, vector<8x352xf32>,
    %c0_21 = arith.constant 0 : index
    %c361 = arith.constant 361 : index
    %18 = vector.load %arg12[%c0_21, %c361] : memref<8x716xf32, #tpu.memory_space<vmem>>, vector<8x256xf32>
    %c0_22 = arith.constant 0 : index
    %c256 = arith.constant 256 : index
    %19 = vector.load %arg15[%c0_22, %c256] : memref<56x512xf32, #tpu.memory_space<vmem>>, vector<8x256xf32>
    tpu.vector_store %arg15[%c0_22, %c256], %18 {strides = array<i32>} : memref<56x512xf32, #tpu.memory_space<vmem>>, vector<8x256xf32>,
    %c0_23 = arith.constant 0 : index
    %c358_24 = arith.constant 358 : index
    %20 = vector.load %arg12[%c0_23, %c358_24] : memref<8x716xf32, #tpu.memory_space<vmem>>, vector<8x352xf32>
    %c0_25 = arith.constant 0 : index
    %c352 = arith.constant 352 : index
    %21 = vector.load %arg16[%c0_25, %c352] : memref<56x704xf32, #tpu.memory_space<vmem>>, vector<8x352xf32>
    tpu.vector_store %arg16[%c0_25, %c352], %20 {strides = array<i32>} : memref<56x704xf32, #tpu.memory_space<vmem>>, vector<8x352xf32>,
    %c0_26 = arith.constant 0 : index
    %c19 = arith.constant 19 : index
    %22 = vector.load %arg12[%c0_26, %c19] : memref<8x716xf32, #tpu.memory_space<vmem>>, vector<8x256xf32>
    %c8 = arith.constant 8 : index
    %c0_27 = arith.constant 0 : index
    %23 = vector.load %arg15[%c8, %c0_27] : memref<56x512xf32, #tpu.memory_space<vmem>>, vector<8x256xf32>
    tpu.vector_store %arg15[%c8, %c0_27], %22 {strides = array<i32>} : memref<56x512xf32, #tpu.memory_space<vmem>>, vector<8x256xf32>,
    %c0_28 = arith.constant 0 : index
    %c1_29 = arith.constant 1 : index
    %24 = vector.load %arg12[%c0_28, %c1_29] : memref<8x716xf32, #tpu.memory_space<vmem>>, vector<8x352xf32>
    %c8_30 = arith.constant 8 : index
    %c0_31 = arith.constant 0 : index
    %25 = vector.load %arg16[%c8_30, %c0_31] : memref<56x704xf32, #tpu.memory_space<vmem>>, vector<8x352xf32>
    tpu.vector_store %arg16[%c8_30, %c0_31], %24 {strides = array<i32>} : memref<56x704xf32, #tpu.memory_space<vmem>>, vector<8x352xf32>,
    %c0_32 = arith.constant 0 : index
    %c377 = arith.constant 377 : index
    %26 = vector.load %arg12[%c0_32, %c377] : memref<8x716xf32, #tpu.memory_space<vmem>>, vector<8x256xf32>
    %c8_33 = arith.constant 8 : index
    %c256_34 = arith.constant 256 : index
    %27 = vector.load %arg15[%c8_33, %c256_34] : memref<56x512xf32, #tpu.memory_space<vmem>>, vector<8x256xf32>
    tpu.vector_store %arg15[%c8_33, %c256_34], %26 {strides = array<i32>} : memref<56x512xf32, #tpu.memory_space<vmem>>, vector<8x256xf32>,
    %c0_35 = arith.constant 0 : index
    %c359 = arith.constant 359 : index
    %28 = vector.load %arg12[%c0_35, %c359] : memref<8x716xf32, #tpu.memory_space<vmem>>, vector<8x352xf32>
    %c8_36 = arith.constant 8 : index
    %c352_37 = arith.constant 352 : index
    %29 = vector.load %arg16[%c8_36, %c352_37] : memref<56x704xf32, #tpu.memory_space<vmem>>, vector<8x352xf32>
    tpu.vector_store %arg16[%c8_36, %c352_37], %28 {strides = array<i32>} : memref<56x704xf32, #tpu.memory_space<vmem>>, vector<8x352xf32>,
    %c0_38 = arith.constant 0 : index
    %c35 = arith.constant 35 : index
    %30 = vector.load %arg12[%c0_38, %c35] : memref<8x716xf32, #tpu.memory_space<vmem>>, vector<8x256xf32>
    %c16 = arith.constant 16 : index
    %c0_39 = arith.constant 0 : index
    %31 = vector.load %arg15[%c16, %c0_39] : memref<56x512xf32, #tpu.memory_space<vmem>>, vector<8x256xf32>
    tpu.vector_store %arg15[%c16, %c0_39], %30 {strides = array<i32>} : memref<56x512xf32, #tpu.memory_space<vmem>>, vector<8x256xf32>,
    %c0_40 = arith.constant 0 : index
    %c2 = arith.constant 2 : index
    %32 = vector.load %arg12[%c0_40, %c2] : memref<8x716xf32, #tpu.memory_space<vmem>>, vector<8x352xf32>
    %c16_41 = arith.constant 16 : index
    %c0_42 = arith.constant 0 : index
    %33 = vector.load %arg16[%c16_41, %c0_42] : memref<56x704xf32, #tpu.memory_space<vmem>>, vector<8x352xf32>
    tpu.vector_store %arg16[%c16_41, %c0_42], %32 {strides = array<i32>} : memref<56x704xf32, #tpu.memory_space<vmem>>, vector<8x352xf32>,
    %c0_43 = arith.constant 0 : index
    %c393 = arith.constant 393 : index
    %34 = vector.load %arg12[%c0_43, %c393] : memref<8x716xf32, #tpu.memory_space<vmem>>, vector<8x256xf32>
    %c16_44 = arith.constant 16 : index
    %c256_45 = arith.constant 256 : index
    %35 = vector.load %arg15[%c16_44, %c256_45] : memref<56x512xf32, #tpu.memory_space<vmem>>, vector<8x256xf32>
    tpu.vector_store %arg15[%c16_44, %c256_45], %34 {strides = array<i32>} : memref<56x512xf32, #tpu.memory_space<vmem>>, vector<8x256xf32>,
    %c0_46 = arith.constant 0 : index
    %c360 = arith.constant 360 : index
    %36 = vector.load %arg12[%c0_46, %c360] : memref<8x716xf32, #tpu.memory_space<vmem>>, vector<8x352xf32>
    %c16_47 = arith.constant 16 : index
    %c352_48 = arith.constant 352 : index
    %37 = vector.load %arg16[%c16_47, %c352_48] : memref<56x704xf32, #tpu.memory_space<vmem>>, vector<8x352xf32>
    tpu.vector_store %arg16[%c16_47, %c352_48], %36 {strides = array<i32>} : memref<56x704xf32, #tpu.memory_space<vmem>>, vector<8x352xf32>,
    %c0_49 = arith.constant 0 : index
    %c51_50 = arith.constant 51 : index
    %38 = vector.load %arg12[%c0_49, %c51_50] : memref<8x716xf32, #tpu.memory_space<vmem>>, vector<8x256xf32>
    %c24 = arith.constant 24 : index
    %c0_51 = arith.constant 0 : index
    %39 = vector.load %arg15[%c24, %c0_51] : memref<56x512xf32, #tpu.memory_space<vmem>>, vector<8x256xf32>
    tpu.vector_store %arg15[%c24, %c0_51], %38 {strides = array<i32>} : memref<56x512xf32, #tpu.memory_space<vmem>>, vector<8x256xf32>,
    %c0_52 = arith.constant 0 : index
    %c3_53 = arith.constant 3 : index
    %40 = vector.load %arg12[%c0_52, %c3_53] : memref<8x716xf32, #tpu.memory_space<vmem>>, vector<8x352xf32>
    %c24_54 = arith.constant 24 : index
    %c0_55 = arith.constant 0 : index
    %41 = vector.load %arg16[%c24_54, %c0_55] : memref<56x704xf32, #tpu.memory_space<vmem>>, vector<8x352xf32>
    tpu.vector_store %arg16[%c24_54, %c0_55], %40 {strides = array<i32>} : memref<56x704xf32, #tpu.memory_space<vmem>>, vector<8x352xf32>,
    %c0_56 = arith.constant 0 : index
    %c409_57 = arith.constant 409 : index
    %42 = vector.load %arg12[%c0_56, %c409_57] : memref<8x716xf32, #tpu.memory_space<vmem>>, vector<8x256xf32>
    %c24_58 = arith.constant 24 : index
    %c256_59 = arith.constant 256 : index
    %43 = vector.load %arg15[%c24_58, %c256_59] : memref<56x512xf32, #tpu.memory_space<vmem>>, vector<8x256xf32>
    tpu.vector_store %arg15[%c24_58, %c256_59], %42 {strides = array<i32>} : memref<56x512xf32, #tpu.memory_space<vmem>>, vector<8x256xf32>,
    %c0_60 = arith.constant 0 : index
    %c361_61 = arith.constant 361 : index
    %44 = vector.load %arg12[%c0_60, %c361_61] : memref<8x716xf32, #tpu.memory_space<vmem>>, vector<8x352xf32>
    %c24_62 = arith.constant 24 : index
    %c352_63 = arith.constant 352 : index
    %45 = vector.load %arg16[%c24_62, %c352_63] : memref<56x704xf32, #tpu.memory_space<vmem>>, vector<8x352xf32>
    tpu.vector_store %arg16[%c24_62, %c352_63], %44 {strides = array<i32>} : memref<56x704xf32, #tpu.memory_space<vmem>>, vector<8x352xf32>,
    %c0_64 = arith.constant 0 : index
    %c67 = arith.constant 67 : index
    %46 = vector.load %arg12[%c0_64, %c67] : memref<8x716xf32, #tpu.memory_space<vmem>>, vector<8x256xf32>
    %c32 = arith.constant 32 : index
    %c0_65 = arith.constant 0 : index
    %47 = vector.load %arg15[%c32, %c0_65] : memref<56x512xf32, #tpu.memory_space<vmem>>, vector<8x256xf32>
    tpu.vector_store %arg15[%c32, %c0_65], %46 {strides = array<i32>} : memref<56x512xf32, #tpu.memory_space<vmem>>, vector<8x256xf32>,
    %c0_66 = arith.constant 0 : index
    %c4 = arith.constant 4 : index
    %48 = vector.load %arg12[%c0_66, %c4] : memref<8x716xf32, #tpu.memory_space<vmem>>, vector<8x352xf32>
    %c32_67 = arith.constant 32 : index
    %c0_68 = arith.constant 0 : index
    %49 = vector.load %arg16[%c32_67, %c0_68] : memref<56x704xf32, #tpu.memory_space<vmem>>, vector<8x352xf32>
    tpu.vector_store %arg16[%c32_67, %c0_68], %48 {strides = array<i32>} : memref<56x704xf32, #tpu.memory_space<vmem>>, vector<8x352xf32>,
    %c0_69 = arith.constant 0 : index
    %c425 = arith.constant 425 : index
    %50 = vector.load %arg12[%c0_69, %c425] : memref<8x716xf32, #tpu.memory_space<vmem>>, vector<8x256xf32>
    %c32_70 = arith.constant 32 : index
    %c256_71 = arith.constant 256 : index
    %51 = vector.load %arg15[%c32_70, %c256_71] : memref<56x512xf32, #tpu.memory_space<vmem>>, vector<8x256xf32>
    tpu.vector_store %arg15[%c32_70, %c256_71], %50 {strides = array<i32>} : memref<56x512xf32, #tpu.memory_space<vmem>>, vector<8x256xf32>,
    %c0_72 = arith.constant 0 : index
    %c362 = arith.constant 362 : index
    %52 = vector.load %arg12[%c0_72, %c362] : memref<8x716xf32, #tpu.memory_space<vmem>>, vector<8x352xf32>
    %c32_73 = arith.constant 32 : index
    %c352_74 = arith.constant 352 : index
    %53 = vector.load %arg16[%c32_73, %c352_74] : memref<56x704xf32, #tpu.memory_space<vmem>>, vector<8x352xf32>
    tpu.vector_store %arg16[%c32_73, %c352_74], %52 {strides = array<i32>} : memref<56x704xf32, #tpu.memory_space<vmem>>, vector<8x352xf32>,
    %c0_75 = arith.constant 0 : index
    %c83 = arith.constant 83 : index
    %54 = vector.load %arg12[%c0_75, %c83] : memref<8x716xf32, #tpu.memory_space<vmem>>, vector<8x256xf32>
    %c40 = arith.constant 40 : index
    %c0_76 = arith.constant 0 : index
    %55 = vector.load %arg15[%c40, %c0_76] : memref<56x512xf32, #tpu.memory_space<vmem>>, vector<8x256xf32>
    tpu.vector_store %arg15[%c40, %c0_76], %54 {strides = array<i32>} : memref<56x512xf32, #tpu.memory_space<vmem>>, vector<8x256xf32>,
    %c0_77 = arith.constant 0 : index
    %c5 = arith.constant 5 : index
    %56 = vector.load %arg12[%c0_77, %c5] : memref<8x716xf32, #tpu.memory_space<vmem>>, vector<8x352xf32>
    %c40_78 = arith.constant 40 : index
    %c0_79 = arith.constant 0 : index
    %57 = vector.load %arg16[%c40_78, %c0_79] : memref<56x704xf32, #tpu.memory_space<vmem>>, vector<8x352xf32>
    tpu.vector_store %arg16[%c40_78, %c0_79], %56 {strides = array<i32>} : memref<56x704xf32, #tpu.memory_space<vmem>>, vector<8x352xf32>,
    %c0_80 = arith.constant 0 : index
    %c441 = arith.constant 441 : index
    %58 = vector.load %arg12[%c0_80, %c441] : memref<8x716xf32, #tpu.memory_space<vmem>>, vector<8x256xf32>
    %c40_81 = arith.constant 40 : index
    %c256_82 = arith.constant 256 : index
    %59 = vector.load %arg15[%c40_81, %c256_82] : memref<56x512xf32, #tpu.memory_space<vmem>>, vector<8x256xf32>
    tpu.vector_store %arg15[%c40_81, %c256_82], %58 {strides = array<i32>} : memref<56x512xf32, #tpu.memory_space<vmem>>, vector<8x256xf32>,
    %c0_83 = arith.constant 0 : index
    %c363 = arith.constant 363 : index
    %60 = vector.load %arg12[%c0_83, %c363] : memref<8x716xf32, #tpu.memory_space<vmem>>, vector<8x352xf32>
    %c40_84 = arith.constant 40 : index
    %c352_85 = arith.constant 352 : index
    %61 = vector.load %arg16[%c40_84, %c352_85] : memref<56x704xf32, #tpu.memory_space<vmem>>, vector<8x352xf32>
    tpu.vector_store %arg16[%c40_84, %c352_85], %60 {strides = array<i32>} : memref<56x704xf32, #tpu.memory_space<vmem>>, vector<8x352xf32>,
    %c0_86 = arith.constant 0 : index
    %c99 = arith.constant 99 : index
    %62 = vector.load %arg12[%c0_86, %c99] : memref<8x716xf32, #tpu.memory_space<vmem>>, vector<8x256xf32>
    %c48 = arith.constant 48 : index
    %c0_87 = arith.constant 0 : index
    %63 = vector.load %arg15[%c48, %c0_87] : memref<56x512xf32, #tpu.memory_space<vmem>>, vector<8x256xf32>
    tpu.vector_store %arg15[%c48, %c0_87], %62 {strides = array<i32>} : memref<56x512xf32, #tpu.memory_space<vmem>>, vector<8x256xf32>,
    %c0_88 = arith.constant 0 : index
    %c6 = arith.constant 6 : index
    %64 = vector.load %arg12[%c0_88, %c6] : memref<8x716xf32, #tpu.memory_space<vmem>>, vector<8x352xf32>
    %c48_89 = arith.constant 48 : index
    %c0_90 = arith.constant 0 : index
    %65 = vector.load %arg16[%c48_89, %c0_90] : memref<56x704xf32, #tpu.memory_space<vmem>>, vector<8x352xf32>
    tpu.vector_store %arg16[%c48_89, %c0_90], %64 {strides = array<i32>} : memref<56x704xf32, #tpu.memory_space<vmem>>, vector<8x352xf32>,
    %c0_91 = arith.constant 0 : index
    %c457 = arith.constant 457 : index
    %66 = vector.load %arg12[%c0_91, %c457] : memref<8x716xf32, #tpu.memory_space<vmem>>, vector<8x256xf32>
    %c48_92 = arith.constant 48 : index
    %c256_93 = arith.constant 256 : index
    %67 = vector.load %arg15[%c48_92, %c256_93] : memref<56x512xf32, #tpu.memory_space<vmem>>, vector<8x256xf32>
    tpu.vector_store %arg15[%c48_92, %c256_93], %66 {strides = array<i32>} : memref<56x512xf32, #tpu.memory_space<vmem>>, vector<8x256xf32>,
    %c0_94 = arith.constant 0 : index
    %c364 = arith.constant 364 : index
    %68 = vector.load %arg12[%c0_94, %c364] : memref<8x716xf32, #tpu.memory_space<vmem>>, vector<8x352xf32>
    %c48_95 = arith.constant 48 : index
    %c352_96 = arith.constant 352 : index
    %69 = vector.load %arg16[%c48_95, %c352_96] : memref<56x704xf32, #tpu.memory_space<vmem>>, vector<8x352xf32>
    tpu.vector_store %arg16[%c48_95, %c352_96], %68 {strides = array<i32>} : memref<56x704xf32, #tpu.memory_space<vmem>>, vector<8x352xf32>,
    %c0_97 = arith.constant 0 : index
    %c0_98 = arith.constant 0 : index
    %70 = vector.load %arg2[%c0_97, %c0_98] : memref<8x56xbf16, #tpu.memory_space<vmem>>, vector<8x56xbf16>
    %c0_99 = arith.constant 0 : index
    %c0_100 = arith.constant 0 : index
    %71 = vector.load %arg15[%c0_99, %c0_100] : memref<56x512xf32, #tpu.memory_space<vmem>>, vector<56x512xf32>
    %72 = arith.truncf %71 : vector<56x512xf32> to vector<56x512xbf16>
    %cst_101 = arith.constant dense<0.000000e+00> : vector<8x512xf32>
    %73 = tpu.matmul %70, %72, %cst_101 {dimension_numbers = #tpu.dot_dimension_numbers<[1], [0], [0], [1], [0, 0, 1, 1], [], []>} : vector<8x56xbf16>, vector<56x512xbf16>, vector<8x512xf32> -> vector<8x512xf32>
    %c0_102 = arith.constant 0 : index
    %c0_103 = arith.constant 0 : index
    %74 = vector.load %arg6[%c0_102, %c0_103] : memref<8x1xf32, #tpu.memory_space<vmem>>, vector<8x1xf32>
    %75 = vector.broadcast %74 : vector<8x1xf32> to vector<8x512xf32>
    %76 = arith.addf %73, %75 : vector<8x512xf32>
    %c0_104 = arith.constant 0 : index
    %c0_105 = arith.constant 0 : index
    %77 = vector.load %arg3[%c0_104, %c0_105] : memref<8x56xbf16, #tpu.memory_space<vmem>>, vector<8x56xbf16>
    %c0_106 = arith.constant 0 : index
    %c0_107 = arith.constant 0 : index
    %78 = vector.load %arg16[%c0_106, %c0_107] : memref<56x704xf32, #tpu.memory_space<vmem>>, vector<56x704xf32>
    %79 = arith.truncf %78 : vector<56x704xf32> to vector<56x704xbf16>
    %cst_108 = arith.constant dense<0.000000e+00> : vector<8x704xf32>
    %80 = tpu.matmul %77, %79, %cst_108 {dimension_numbers = #tpu.dot_dimension_numbers<[1], [0], [0], [1], [0, 0, 1, 1], [], []>} : vector<8x56xbf16>, vector<56x704xbf16>, vector<8x704xf32> -> vector<8x704xf32>
    %c0_109 = arith.constant 0 : index
    %c0_110 = arith.constant 0 : index
    %81 = vector.load %arg7[%c0_109, %c0_110] : memref<8x1xf32, #tpu.memory_space<vmem>>, vector<8x1xf32>
    %82 = vector.broadcast %81 : vector<8x1xf32> to vector<8x704xf32>
    %83 = arith.addf %80, %82 : vector<8x704xf32>
    %c0_111 = arith.constant 0 : index
    %c0_112 = arith.constant 0 : index
    %84 = vector.load %arg10[%c0_111, %c0_112] : memref<1x704xf32, #tpu.memory_space<vmem>>, vector<1x704xf32>
    %85 = vector.broadcast %84 : vector<1x704xf32> to vector<8x704xf32>
    %86 = arith.mulf %83, %85 : vector<8x704xf32>
    %c0_113 = arith.constant 0 : index
    %c0_114 = arith.constant 0 : index
    %87 = vector.load %arg14[%c0_113, %c0_114] : memref<8x704xf32, #tpu.memory_space<vmem>>, vector<8x704xf32>
    tpu.vector_store %arg14[%c0_113, %c0_114], %86 {strides = array<i32>} : memref<8x704xf32, #tpu.memory_space<vmem>>, vector<8x704xf32>,
    %cst_115 = arith.constant 0.000000e+00 : f32
    %88 = vector.broadcast %cst_115 : f32 to vector<8x3xf32>
    %c0_116 = arith.constant 0 : index
    %c0_117 = arith.constant 0 : index
    %89 = vector.load %arg13[%c0_116, %c0_117] : memref<8x524xf32, #tpu.memory_space<vmem>>, vector<8x3xf32>
    tpu.vector_store %arg13[%c0_116, %c0_117], %88 {strides = array<i32>} : memref<8x524xf32, #tpu.memory_space<vmem>>, vector<8x3xf32>,
    %90 = vector.extract_strided_slice %76 {offsets = [0, 0], sizes = [8, 256], strides = [1, 1]} : vector<8x512xf32> to vector<8x256xf32>
    %c0_118 = arith.constant 0 : index
    %c3_119 = arith.constant 3 : index
    %91 = vector.load %arg13[%c0_118, %c3_119] : memref<8x524xf32, #tpu.memory_space<vmem>>, vector<8x256xf32>
    tpu.vector_store %arg13[%c0_118, %c3_119], %90 {strides = array<i32>} : memref<8x524xf32, #tpu.memory_space<vmem>>, vector<8x256xf32>,
    %cst_120 = arith.constant 0.000000e+00 : f32
    %92 = vector.broadcast %cst_120 : f32 to vector<8x3xf32>
    %c0_121 = arith.constant 0 : index
    %c259 = arith.constant 259 : index
    %93 = vector.load %arg13[%c0_121, %c259] : memref<8x524xf32, #tpu.memory_space<vmem>>, vector<8x3xf32>
    tpu.vector_store %arg13[%c0_121, %c259], %92 {strides = array<i32>} : memref<8x524xf32, #tpu.memory_space<vmem>>, vector<8x3xf32>,
    %cst_122 = arith.constant 0.000000e+00 : f32
    %94 = vector.broadcast %cst_122 : f32 to vector<8x3xf32>
    %c0_123 = arith.constant 0 : index
    %c262 = arith.constant 262 : index
    %95 = vector.load %arg13[%c0_123, %c262] : memref<8x524xf32, #tpu.memory_space<vmem>>, vector<8x3xf32>
    tpu.vector_store %arg13[%c0_123, %c262], %94 {strides = array<i32>} : memref<8x524xf32, #tpu.memory_space<vmem>>, vector<8x3xf32>,
    %96 = vector.extract_strided_slice %76 {offsets = [0, 256], sizes = [8, 256], strides = [1, 1]} : vector<8x512xf32> to vector<8x256xf32>
    %c0_124 = arith.constant 0 : index
    %c265 = arith.constant 265 : index
    %97 = vector.load %arg13[%c0_124, %c265] : memref<8x524xf32, #tpu.memory_space<vmem>>, vector<8x256xf32>
    tpu.vector_store %arg13[%c0_124, %c265], %96 {strides = array<i32>} : memref<8x524xf32, #tpu.memory_space<vmem>>, vector<8x256xf32>,
    %cst_125 = arith.constant 0.000000e+00 : f32
    %98 = vector.broadcast %cst_125 : f32 to vector<8x3xf32>
    %c0_126 = arith.constant 0 : index
    %c521 = arith.constant 521 : index
    %99 = vector.load %arg13[%c0_126, %c521] : memref<8x524xf32, #tpu.memory_space<vmem>>, vector<8x3xf32>
    tpu.vector_store %arg13[%c0_126, %c521], %98 {strides = array<i32>} : memref<8x524xf32, #tpu.memory_space<vmem>>, vector<8x3xf32>,
    %c0_127 = arith.constant 0 : index
    %c0_128 = arith.constant 0 : index
    %100 = vector.load %arg9[%c0_127, %c0_128] : memref<7x256xf32, #tpu.memory_space<vmem>>, vector<1x256xf32>
    %c0_129 = arith.constant 0 : index
    %c0_130 = arith.constant 0 : index
    %101 = vector.load %arg13[%c0_129, %c0_130] : memref<8x524xf32, #tpu.memory_space<vmem>>, vector<8x256xf32>
    %102 = vector.broadcast %100 : vector<1x256xf32> to vector<8x256xf32>
    %103 = arith.mulf %101, %102 : vector<8x256xf32>
    %c0_131 = arith.constant 0 : index
    %c0_132 = arith.constant 0 : index
    %104 = vector.load %arg17[%c0_131, %c0_132] : memref<56x512xf32, #tpu.memory_space<vmem>>, vector<8x256xf32>
    tpu.vector_store %arg17[%c0_131, %c0_132], %103 {strides = array<i32>} : memref<56x512xf32, #tpu.memory_space<vmem>>, vector<8x256xf32>,
    %c0_133 = arith.constant 0 : index
    %c262_134 = arith.constant 262 : index
    %105 = vector.load %arg13[%c0_133, %c262_134] : memref<8x524xf32, #tpu.memory_space<vmem>>, vector<8x256xf32>
    %106 = vector.broadcast %100 : vector<1x256xf32> to vector<8x256xf32>
    %107 = arith.mulf %105, %106 : vector<8x256xf32>
    %c0_135 = arith.constant 0 : index
    %c256_136 = arith.constant 256 : index
    %108 = vector.load %arg17[%c0_135, %c256_136] : memref<56x512xf32, #tpu.memory_space<vmem>>, vector<8x256xf32>
    tpu.vector_store %arg17[%c0_135, %c256_136], %107 {strides = array<i32>} : memref<56x512xf32, #tpu.memory_space<vmem>>, vector<8x256xf32>,
    %c1_137 = arith.constant 1 : index
    %c0_138 = arith.constant 0 : index
    %109 = vector.load %arg9[%c1_137, %c0_138] : memref<7x256xf32, #tpu.memory_space<vmem>>, vector<1x256xf32>
    %c0_139 = arith.constant 0 : index
    %c1_140 = arith.constant 1 : index
    %110 = vector.load %arg13[%c0_139, %c1_140] : memref<8x524xf32, #tpu.memory_space<vmem>>, vector<8x256xf32>
    %111 = vector.broadcast %109 : vector<1x256xf32> to vector<8x256xf32>
    %112 = arith.mulf %110, %111 : vector<8x256xf32>
    %c8_141 = arith.constant 8 : index
    %c0_142 = arith.constant 0 : index
    %113 = vector.load %arg17[%c8_141, %c0_142] : memref<56x512xf32, #tpu.memory_space<vmem>>, vector<8x256xf32>
    tpu.vector_store %arg17[%c8_141, %c0_142], %112 {strides = array<i32>} : memref<56x512xf32, #tpu.memory_space<vmem>>, vector<8x256xf32>,
    %c0_143 = arith.constant 0 : index
    %c263 = arith.constant 263 : index
    %114 = vector.load %arg13[%c0_143, %c263] : memref<8x524xf32, #tpu.memory_space<vmem>>, vector<8x256xf32>
    %115 = vector.broadcast %109 : vector<1x256xf32> to vector<8x256xf32>
    %116 = arith.mulf %114, %115 : vector<8x256xf32>
    %c8_144 = arith.constant 8 : index
    %c256_145 = arith.constant 256 : index
    %117 = vector.load %arg17[%c8_144, %c256_145] : memref<56x512xf32, #tpu.memory_space<vmem>>, vector<8x256xf32>
    tpu.vector_store %arg17[%c8_144, %c256_145], %116 {strides = array<i32>} : memref<56x512xf32, #tpu.memory_space<vmem>>, vector<8x256xf32>,
    %c2_146 = arith.constant 2 : index
    %c0_147 = arith.constant 0 : index
    %118 = vector.load %arg9[%c2_146, %c0_147] : memref<7x256xf32, #tpu.memory_space<vmem>>, vector<1x256xf32>
    %c0_148 = arith.constant 0 : index
    %c2_149 = arith.constant 2 : index
    %119 = vector.load %arg13[%c0_148, %c2_149] : memref<8x524xf32, #tpu.memory_space<vmem>>, vector<8x256xf32>
    %120 = vector.broadcast %118 : vector<1x256xf32> to vector<8x256xf32>
    %121 = arith.mulf %119, %120 : vector<8x256xf32>
    %c16_150 = arith.constant 16 : index
    %c0_151 = arith.constant 0 : index
    %122 = vector.load %arg17[%c16_150, %c0_151] : memref<56x512xf32, #tpu.memory_space<vmem>>, vector<8x256xf32>
    tpu.vector_store %arg17[%c16_150, %c0_151], %121 {strides = array<i32>} : memref<56x512xf32, #tpu.memory_space<vmem>>, vector<8x256xf32>,
    %c0_152 = arith.constant 0 : index
    %c264 = arith.constant 264 : index
    %123 = vector.load %arg13[%c0_152, %c264] : memref<8x524xf32, #tpu.memory_space<vmem>>, vector<8x256xf32>
    %124 = vector.broadcast %118 : vector<1x256xf32> to vector<8x256xf32>
    %125 = arith.mulf %123, %124 : vector<8x256xf32>
    %c16_153 = arith.constant 16 : index
    %c256_154 = arith.constant 256 : index
    %126 = vector.load %arg17[%c16_153, %c256_154] : memref<56x512xf32, #tpu.memory_space<vmem>>, vector<8x256xf32>
    tpu.vector_store %arg17[%c16_153, %c256_154], %125 {strides = array<i32>} : memref<56x512xf32, #tpu.memory_space<vmem>>, vector<8x256xf32>,
    %c3_155 = arith.constant 3 : index
    %c0_156 = arith.constant 0 : index
    %127 = vector.load %arg9[%c3_155, %c0_156] : memref<7x256xf32, #tpu.memory_space<vmem>>, vector<1x256xf32>
    %c0_157 = arith.constant 0 : index
    %c3_158 = arith.constant 3 : index
    %128 = vector.load %arg13[%c0_157, %c3_158] : memref<8x524xf32, #tpu.memory_space<vmem>>, vector<8x256xf32>
    %129 = vector.broadcast %127 : vector<1x256xf32> to vector<8x256xf32>
    %130 = arith.mulf %128, %129 : vector<8x256xf32>
    %c24_159 = arith.constant 24 : index
    %c0_160 = arith.constant 0 : index
    %131 = vector.load %arg17[%c24_159, %c0_160] : memref<56x512xf32, #tpu.memory_space<vmem>>, vector<8x256xf32>
    tpu.vector_store %arg17[%c24_159, %c0_160], %130 {strides = array<i32>} : memref<56x512xf32, #tpu.memory_space<vmem>>, vector<8x256xf32>,
    %c0_161 = arith.constant 0 : index
    %c265_162 = arith.constant 265 : index
    %132 = vector.load %arg13[%c0_161, %c265_162] : memref<8x524xf32, #tpu.memory_space<vmem>>, vector<8x256xf32>
    %133 = vector.broadcast %127 : vector<1x256xf32> to vector<8x256xf32>
    %134 = arith.mulf %132, %133 : vector<8x256xf32>
    %c24_163 = arith.constant 24 : index
    %c256_164 = arith.constant 256 : index
    %135 = vector.load %arg17[%c24_163, %c256_164] : memref<56x512xf32, #tpu.memory_space<vmem>>, vector<8x256xf32>
    tpu.vector_store %arg17[%c24_163, %c256_164], %134 {strides = array<i32>} : memref<56x512xf32, #tpu.memory_space<vmem>>, vector<8x256xf32>,
    %c4_165 = arith.constant 4 : index
    %c0_166 = arith.constant 0 : index
    %136 = vector.load %arg9[%c4_165, %c0_166] : memref<7x256xf32, #tpu.memory_space<vmem>>, vector<1x256xf32>
    %c0_167 = arith.constant 0 : index
    %c4_168 = arith.constant 4 : index
    %137 = vector.load %arg13[%c0_167, %c4_168] : memref<8x524xf32, #tpu.memory_space<vmem>>, vector<8x256xf32>
    %138 = vector.broadcast %136 : vector<1x256xf32> to vector<8x256xf32>
    %139 = arith.mulf %137, %138 : vector<8x256xf32>
    %c32_169 = arith.constant 32 : index
    %c0_170 = arith.constant 0 : index
    %140 = vector.load %arg17[%c32_169, %c0_170] : memref<56x512xf32, #tpu.memory_space<vmem>>, vector<8x256xf32>
    tpu.vector_store %arg17[%c32_169, %c0_170], %139 {strides = array<i32>} : memref<56x512xf32, #tpu.memory_space<vmem>>, vector<8x256xf32>,
    %c0_171 = arith.constant 0 : index
    %c266 = arith.constant 266 : index
    %141 = vector.load %arg13[%c0_171, %c266] : memref<8x524xf32, #tpu.memory_space<vmem>>, vector<8x256xf32>
    %142 = vector.broadcast %136 : vector<1x256xf32> to vector<8x256xf32>
    %143 = arith.mulf %141, %142 : vector<8x256xf32>
    %c32_172 = arith.constant 32 : index
    %c256_173 = arith.constant 256 : index
    %144 = vector.load %arg17[%c32_172, %c256_173] : memref<56x512xf32, #tpu.memory_space<vmem>>, vector<8x256xf32>
    tpu.vector_store %arg17[%c32_172, %c256_173], %143 {strides = array<i32>} : memref<56x512xf32, #tpu.memory_space<vmem>>, vector<8x256xf32>,
    %c5_174 = arith.constant 5 : index
    %c0_175 = arith.constant 0 : index
    %145 = vector.load %arg9[%c5_174, %c0_175] : memref<7x256xf32, #tpu.memory_space<vmem>>, vector<1x256xf32>
    %c0_176 = arith.constant 0 : index
    %c5_177 = arith.constant 5 : index
    %146 = vector.load %arg13[%c0_176, %c5_177] : memref<8x524xf32, #tpu.memory_space<vmem>>, vector<8x256xf32>
    %147 = vector.broadcast %145 : vector<1x256xf32> to vector<8x256xf32>
    %148 = arith.mulf %146, %147 : vector<8x256xf32>
    %c40_178 = arith.constant 40 : index
    %c0_179 = arith.constant 0 : index
    %149 = vector.load %arg17[%c40_178, %c0_179] : memref<56x512xf32, #tpu.memory_space<vmem>>, vector<8x256xf32>
    tpu.vector_store %arg17[%c40_178, %c0_179], %148 {strides = array<i32>} : memref<56x512xf32, #tpu.memory_space<vmem>>, vector<8x256xf32>,
    %c0_180 = arith.constant 0 : index
    %c267 = arith.constant 267 : index
    %150 = vector.load %arg13[%c0_180, %c267] : memref<8x524xf32, #tpu.memory_space<vmem>>, vector<8x256xf32>
    %151 = vector.broadcast %145 : vector<1x256xf32> to vector<8x256xf32>
    %152 = arith.mulf %150, %151 : vector<8x256xf32>
    %c40_181 = arith.constant 40 : index
    %c256_182 = arith.constant 256 : index
    %153 = vector.load %arg17[%c40_181, %c256_182] : memref<56x512xf32, #tpu.memory_space<vmem>>, vector<8x256xf32>
    tpu.vector_store %arg17[%c40_181, %c256_182], %152 {strides = array<i32>} : memref<56x512xf32, #tpu.memory_space<vmem>>, vector<8x256xf32>,
    %c6_183 = arith.constant 6 : index
    %c0_184 = arith.constant 0 : index
    %154 = vector.load %arg9[%c6_183, %c0_184] : memref<7x256xf32, #tpu.memory_space<vmem>>, vector<1x256xf32>
    %c0_185 = arith.constant 0 : index
    %c6_186 = arith.constant 6 : index
    %155 = vector.load %arg13[%c0_185, %c6_186] : memref<8x524xf32, #tpu.memory_space<vmem>>, vector<8x256xf32>
    %156 = vector.broadcast %154 : vector<1x256xf32> to vector<8x256xf32>
    %157 = arith.mulf %155, %156 : vector<8x256xf32>
    %c48_187 = arith.constant 48 : index
    %c0_188 = arith.constant 0 : index
    %158 = vector.load %arg17[%c48_187, %c0_188] : memref<56x512xf32, #tpu.memory_space<vmem>>, vector<8x256xf32>
    tpu.vector_store %arg17[%c48_187, %c0_188], %157 {strides = array<i32>} : memref<56x512xf32, #tpu.memory_space<vmem>>, vector<8x256xf32>,
    %c0_189 = arith.constant 0 : index
    %c268 = arith.constant 268 : index
    %159 = vector.load %arg13[%c0_189, %c268] : memref<8x524xf32, #tpu.memory_space<vmem>>, vector<8x256xf32>
    %160 = vector.broadcast %154 : vector<1x256xf32> to vector<8x256xf32>
    %161 = arith.mulf %159, %160 : vector<8x256xf32>
    %c48_190 = arith.constant 48 : index
    %c256_191 = arith.constant 256 : index
    %162 = vector.load %arg17[%c48_190, %c256_191] : memref<56x512xf32, #tpu.memory_space<vmem>>, vector<8x256xf32>
    tpu.vector_store %arg17[%c48_190, %c256_191], %161 {strides = array<i32>} : memref<56x512xf32, #tpu.memory_space<vmem>>, vector<8x256xf32>,
    %c0_192 = arith.constant 0 : index
    %c0_193 = arith.constant 0 : index
    %163 = vector.load %arg4[%c0_192, %c0_193] : memref<8x56xbf16, #tpu.memory_space<vmem>>, vector<8x56xbf16>
    %c0_194 = arith.constant 0 : index
    %c0_195 = arith.constant 0 : index
    %164 = vector.load %arg17[%c0_194, %c0_195] : memref<56x512xf32, #tpu.memory_space<vmem>>, vector<56x512xf32>
    %165 = arith.truncf %164 : vector<56x512xf32> to vector<56x512xbf16>
    %cst_196 = arith.constant dense<0.000000e+00> : vector<8x512xf32>
    %166 = tpu.matmul %163, %165, %cst_196 {dimension_numbers = #tpu.dot_dimension_numbers<[1], [0], [0], [1], [0, 0, 1, 1], [], []>} : vector<8x56xbf16>, vector<56x512xbf16>, vector<8x512xf32> -> vector<8x512xf32>
    %167 = vector.extract_strided_slice %166 {offsets = [0, 0], sizes = [8, 256], strides = [1, 1]} : vector<8x512xf32> to vector<8x256xf32>
    %c0_197 = arith.constant 0 : index
    %c0_198 = arith.constant 0 : index
    %168 = vector.load %arg8[%c0_197, %c0_198] : memref<8x1xf32, #tpu.memory_space<vmem>>, vector<8x1xf32>
    %169 = vector.broadcast %168 : vector<8x1xf32> to vector<8x256xf32>
    %170 = arith.addf %167, %169 : vector<8x256xf32>
    %c0_199 = arith.constant 0 : index
    %c0_200 = arith.constant 0 : index
    %c0_201 = arith.constant 0 : index
    %171 = vector.load %arg5[%c0_199, %c0_200, %c0_201] : memref<7x8x8xbf16, #tpu.memory_space<vmem>>, vector<1x8x8xbf16>
    %172 = vector.shape_cast %171 : vector<1x8x8xbf16> to vector<8x8xbf16>
    %c0_202 = arith.constant 0 : index
    %c0_203 = arith.constant 0 : index
    %173 = vector.load %arg14[%c0_202, %c0_203] : memref<8x704xf32, #tpu.memory_space<vmem>>, vector<8x256xf32>
    %174 = arith.truncf %173 : vector<8x256xf32> to vector<8x256xbf16>
    %cst_204 = arith.constant dense<0.000000e+00> : vector<8x256xf32>
    %175 = tpu.matmul %172, %174, %cst_204 {dimension_numbers = #tpu.dot_dimension_numbers<[1], [0], [0], [1], [0, 0, 1, 1], [], []>} : vector<8x8xbf16>, vector<8x256xbf16>, vector<8x256xf32> -> vector<8x256xf32>
    %176 = arith.addf %170, %175 : vector<8x256xf32>
    %c1_205 = arith.constant 1 : index
    %c0_206 = arith.constant 0 : index
    %c0_207 = arith.constant 0 : index
    %177 = vector.load %arg5[%c1_205, %c0_206, %c0_207] : memref<7x8x8xbf16, #tpu.memory_space<vmem>>, vector<1x8x8xbf16>
    %178 = vector.shape_cast %177 : vector<1x8x8xbf16> to vector<8x8xbf16>
    %c0_208 = arith.constant 0 : index
    %c16_209 = arith.constant 16 : index
    %179 = vector.load %arg14[%c0_208, %c16_209] : memref<8x704xf32, #tpu.memory_space<vmem>>, vector<8x256xf32>
    %180 = arith.truncf %179 : vector<8x256xf32> to vector<8x256xbf16>
    %cst_210 = arith.constant dense<0.000000e+00> : vector<8x256xf32>
    %181 = tpu.matmul %178, %180, %cst_210 {dimension_numbers = #tpu.dot_dimension_numbers<[1], [0], [0], [1], [0, 0, 1, 1], [], []>} : vector<8x8xbf16>, vector<8x256xbf16>, vector<8x256xf32> -> vector<8x256xf32>
    %182 = arith.addf %176, %181 : vector<8x256xf32>
    %c2_211 = arith.constant 2 : index
    %c0_212 = arith.constant 0 : index
    %c0_213 = arith.constant 0 : index
    %183 = vector.load %arg5[%c2_211, %c0_212, %c0_213] : memref<7x8x8xbf16, #tpu.memory_space<vmem>>, vector<1x8x8xbf16>
    %184 = vector.shape_cast %183 : vector<1x8x8xbf16> to vector<8x8xbf16>
    %c0_214 = arith.constant 0 : index
    %c32_215 = arith.constant 32 : index
    %185 = vector.load %arg14[%c0_214, %c32_215] : memref<8x704xf32, #tpu.memory_space<vmem>>, vector<8x256xf32>
    %186 = arith.truncf %185 : vector<8x256xf32> to vector<8x256xbf16>
    %cst_216 = arith.constant dense<0.000000e+00> : vector<8x256xf32>
    %187 = tpu.matmul %184, %186, %cst_216 {dimension_numbers = #tpu.dot_dimension_numbers<[1], [0], [0], [1], [0, 0, 1, 1], [], []>} : vector<8x8xbf16>, vector<8x256xbf16>, vector<8x256xf32> -> vector<8x256xf32>
    %188 = arith.addf %182, %187 : vector<8x256xf32>
    %c3_217 = arith.constant 3 : index
    %c0_218 = arith.constant 0 : index
    %c0_219 = arith.constant 0 : index
    %189 = vector.load %arg5[%c3_217, %c0_218, %c0_219] : memref<7x8x8xbf16, #tpu.memory_space<vmem>>, vector<1x8x8xbf16>
    %190 = vector.shape_cast %189 : vector<1x8x8xbf16> to vector<8x8xbf16>
    %c0_220 = arith.constant 0 : index
    %c48_221 = arith.constant 48 : index
    %191 = vector.load %arg14[%c0_220, %c48_221] : memref<8x704xf32, #tpu.memory_space<vmem>>, vector<8x256xf32>
    %192 = arith.truncf %191 : vector<8x256xf32> to vector<8x256xbf16>
    %cst_222 = arith.constant dense<0.000000e+00> : vector<8x256xf32>
    %193 = tpu.matmul %190, %192, %cst_222 {dimension_numbers = #tpu.dot_dimension_numbers<[1], [0], [0], [1], [0, 0, 1, 1], [], []>} : vector<8x8xbf16>, vector<8x256xbf16>, vector<8x256xf32> -> vector<8x256xf32>
    %194 = arith.addf %188, %193 : vector<8x256xf32>
    %c4_223 = arith.constant 4 : index
    %c0_224 = arith.constant 0 : index
    %c0_225 = arith.constant 0 : index
    %195 = vector.load %arg5[%c4_223, %c0_224, %c0_225] : memref<7x8x8xbf16, #tpu.memory_space<vmem>>, vector<1x8x8xbf16>
    %196 = vector.shape_cast %195 : vector<1x8x8xbf16> to vector<8x8xbf16>
    %c0_226 = arith.constant 0 : index
    %c64 = arith.constant 64 : index
    %197 = vector.load %arg14[%c0_226, %c64] : memref<8x704xf32, #tpu.memory_space<vmem>>, vector<8x256xf32>
    %198 = arith.truncf %197 : vector<8x256xf32> to vector<8x256xbf16>
    %cst_227 = arith.constant dense<0.000000e+00> : vector<8x256xf32>
    %199 = tpu.matmul %196, %198, %cst_227 {dimension_numbers = #tpu.dot_dimension_numbers<[1], [0], [0], [1], [0, 0, 1, 1], [], []>} : vector<8x8xbf16>, vector<8x256xbf16>, vector<8x256xf32> -> vector<8x256xf32>
    %200 = arith.addf %194, %199 : vector<8x256xf32>
    %c5_228 = arith.constant 5 : index
    %c0_229 = arith.constant 0 : index
    %c0_230 = arith.constant 0 : index
    %201 = vector.load %arg5[%c5_228, %c0_229, %c0_230] : memref<7x8x8xbf16, #tpu.memory_space<vmem>>, vector<1x8x8xbf16>
    %202 = vector.shape_cast %201 : vector<1x8x8xbf16> to vector<8x8xbf16>
    %c0_231 = arith.constant 0 : index
    %c80 = arith.constant 80 : index
    %203 = vector.load %arg14[%c0_231, %c80] : memref<8x704xf32, #tpu.memory_space<vmem>>, vector<8x256xf32>
    %204 = arith.truncf %203 : vector<8x256xf32> to vector<8x256xbf16>
    %cst_232 = arith.constant dense<0.000000e+00> : vector<8x256xf32>
    %205 = tpu.matmul %202, %204, %cst_232 {dimension_numbers = #tpu.dot_dimension_numbers<[1], [0], [0], [1], [0, 0, 1, 1], [], []>} : vector<8x8xbf16>, vector<8x256xbf16>, vector<8x256xf32> -> vector<8x256xf32>
    %206 = arith.addf %200, %205 : vector<8x256xf32>
    %c6_233 = arith.constant 6 : index
    %c0_234 = arith.constant 0 : index
    %c0_235 = arith.constant 0 : index
    %207 = vector.load %arg5[%c6_233, %c0_234, %c0_235] : memref<7x8x8xbf16, #tpu.memory_space<vmem>>, vector<1x8x8xbf16>
    %208 = vector.shape_cast %207 : vector<1x8x8xbf16> to vector<8x8xbf16>
    %c0_236 = arith.constant 0 : index
    %c96 = arith.constant 96 : index
    %209 = vector.load %arg14[%c0_236, %c96] : memref<8x704xf32, #tpu.memory_space<vmem>>, vector<8x256xf32>
    %210 = arith.truncf %209 : vector<8x256xf32> to vector<8x256xbf16>
    %cst_237 = arith.constant dense<0.000000e+00> : vector<8x256xf32>
    %211 = tpu.matmul %208, %210, %cst_237 {dimension_numbers = #tpu.dot_dimension_numbers<[1], [0], [0], [1], [0, 0, 1, 1], [], []>} : vector<8x8xbf16>, vector<8x256xbf16>, vector<8x256xf32> -> vector<8x256xf32>
    %212 = arith.addf %206, %211 : vector<8x256xf32>
    %cst_238 = arith.constant dense<0.000000e+00> : vector<8xf32>
    %213 = vector.multi_reduction <add>, %212, %cst_238 [1] : vector<8x256xf32> to vector<8xf32>
    %214 = vector.shape_cast %213 : vector<8xf32> to vector<8x1xf32>
    %cst_239 = arith.constant 3.906250e-03 : f32
    %215 = vector.broadcast %cst_239 : f32 to vector<8x1xf32>
    %216 = arith.mulf %214, %215 : vector<8x1xf32>
    %217 = vector.broadcast %216 : vector<8x1xf32> to vector<8x256xf32>
    %218 = arith.subf %212, %217 : vector<8x256xf32>
    %219 = arith.mulf %218, %218 : vector<8x256xf32>
    %cst_240 = arith.constant dense<0.000000e+00> : vector<8xf32>
    %220 = vector.multi_reduction <add>, %219, %cst_240 [1] : vector<8x256xf32> to vector<8xf32>
    %221 = vector.shape_cast %220 : vector<8xf32> to vector<8x1xf32>
    %cst_241 = arith.constant 3.906250e-03 : f32
    %222 = vector.broadcast %cst_241 : f32 to vector<8x1xf32>
    %223 = arith.mulf %221, %222 : vector<8x1xf32>
    %cst_242 = arith.constant 9.99999974E-6 : f32
    %224 = vector.broadcast %cst_242 : f32 to vector<8x1xf32>
    %225 = arith.addf %223, %224 : vector<8x1xf32>
    %226 = math.rsqrt %225 : vector<8x1xf32>
    %227 = vector.broadcast %226 : vector<8x1xf32> to vector<8x256xf32>
    %228 = arith.mulf %218, %227 : vector<8x256xf32>
    %cst_243 = arith.constant 2.000000e-01 : f32
    %229 = vector.broadcast %cst_243 : f32 to vector<8x256xf32>
    %230 = arith.mulf %229, %228 : vector<8x256xf32>
    %231 = arith.maximumf %228, %230 : vector<8x256xf32>
    %c0_244 = arith.constant 0 : index
    %c0_245 = arith.constant 0 : index
    %c0_246 = arith.constant 0 : index
    %232 = vector.load %arg11[%c0_244, %c0_245, %c0_246] : memref<2x8x256xf32, #tpu.memory_space<vmem>>, vector<1x8x256xf32>
    %233 = vector.shape_cast %232 : vector<1x8x256xf32> to vector<8x256xf32>
    %234 = vector.shape_cast %231 : vector<8x256xf32> to vector<1x8x256xf32>
    tpu.vector_store %arg11[%c0_244, %c0_245, %c0_246], %234 {strides = array<i32>} : memref<2x8x256xf32, #tpu.memory_space<vmem>>, vector<1x8x256xf32>,
    %235 = vector.extract_strided_slice %166 {offsets = [0, 256], sizes = [8, 256], strides = [1, 1]} : vector<8x512xf32> to vector<8x256xf32>
    %c0_247 = arith.constant 0 : index
    %c0_248 = arith.constant 0 : index
    %236 = vector.load %arg8[%c0_247, %c0_248] : memref<8x1xf32, #tpu.memory_space<vmem>>, vector<8x1xf32>
    %237 = vector.broadcast %236 : vector<8x1xf32> to vector<8x256xf32>
    %238 = arith.addf %235, %237 : vector<8x256xf32>
    %c0_249 = arith.constant 0 : index
    %c0_250 = arith.constant 0 : index
    %c0_251 = arith.constant 0 : index
    %239 = vector.load %arg5[%c0_249, %c0_250, %c0_251] : memref<7x8x8xbf16, #tpu.memory_space<vmem>>, vector<1x8x8xbf16>
    %240 = vector.shape_cast %239 : vector<1x8x8xbf16> to vector<8x8xbf16>
    %c0_252 = arith.constant 0 : index
    %c352_253 = arith.constant 352 : index
    %241 = vector.load %arg14[%c0_252, %c352_253] : memref<8x704xf32, #tpu.memory_space<vmem>>, vector<8x256xf32>
    %242 = arith.truncf %241 : vector<8x256xf32> to vector<8x256xbf16>
    %cst_254 = arith.constant dense<0.000000e+00> : vector<8x256xf32>
    %243 = tpu.matmul %240, %242, %cst_254 {dimension_numbers = #tpu.dot_dimension_numbers<[1], [0], [0], [1], [0, 0, 1, 1], [], []>} : vector<8x8xbf16>, vector<8x256xbf16>, vector<8x256xf32> -> vector<8x256xf32>
    %244 = arith.addf %238, %243 : vector<8x256xf32>
    %c1_255 = arith.constant 1 : index
    %c0_256 = arith.constant 0 : index
    %c0_257 = arith.constant 0 : index
    %245 = vector.load %arg5[%c1_255, %c0_256, %c0_257] : memref<7x8x8xbf16, #tpu.memory_space<vmem>>, vector<1x8x8xbf16>
    %246 = vector.shape_cast %245 : vector<1x8x8xbf16> to vector<8x8xbf16>
    %c0_258 = arith.constant 0 : index
    %c368 = arith.constant 368 : index
    %247 = vector.load %arg14[%c0_258, %c368] : memref<8x704xf32, #tpu.memory_space<vmem>>, vector<8x256xf32>
    %248 = arith.truncf %247 : vector<8x256xf32> to vector<8x256xbf16>
    %cst_259 = arith.constant dense<0.000000e+00> : vector<8x256xf32>
    %249 = tpu.matmul %246, %248, %cst_259 {dimension_numbers = #tpu.dot_dimension_numbers<[1], [0], [0], [1], [0, 0, 1, 1], [], []>} : vector<8x8xbf16>, vector<8x256xbf16>, vector<8x256xf32> -> vector<8x256xf32>
    %250 = arith.addf %244, %249 : vector<8x256xf32>
    %c2_260 = arith.constant 2 : index
    %c0_261 = arith.constant 0 : index
    %c0_262 = arith.constant 0 : index
    %251 = vector.load %arg5[%c2_260, %c0_261, %c0_262] : memref<7x8x8xbf16, #tpu.memory_space<vmem>>, vector<1x8x8xbf16>
    %252 = vector.shape_cast %251 : vector<1x8x8xbf16> to vector<8x8xbf16>
    %c0_263 = arith.constant 0 : index
    %c384 = arith.constant 384 : index
    %253 = vector.load %arg14[%c0_263, %c384] : memref<8x704xf32, #tpu.memory_space<vmem>>, vector<8x256xf32>
    %254 = arith.truncf %253 : vector<8x256xf32> to vector<8x256xbf16>
    %cst_264 = arith.constant dense<0.000000e+00> : vector<8x256xf32>
    %255 = tpu.matmul %252, %254, %cst_264 {dimension_numbers = #tpu.dot_dimension_numbers<[1], [0], [0], [1], [0, 0, 1, 1], [], []>} : vector<8x8xbf16>, vector<8x256xbf16>, vector<8x256xf32> -> vector<8x256xf32>
    %256 = arith.addf %250, %255 : vector<8x256xf32>
    %c3_265 = arith.constant 3 : index
    %c0_266 = arith.constant 0 : index
    %c0_267 = arith.constant 0 : index
    %257 = vector.load %arg5[%c3_265, %c0_266, %c0_267] : memref<7x8x8xbf16, #tpu.memory_space<vmem>>, vector<1x8x8xbf16>
    %258 = vector.shape_cast %257 : vector<1x8x8xbf16> to vector<8x8xbf16>
    %c0_268 = arith.constant 0 : index
    %c400 = arith.constant 400 : index
    %259 = vector.load %arg14[%c0_268, %c400] : memref<8x704xf32, #tpu.memory_space<vmem>>, vector<8x256xf32>
    %260 = arith.truncf %259 : vector<8x256xf32> to vector<8x256xbf16>
    %cst_269 = arith.constant dense<0.000000e+00> : vector<8x256xf32>
    %261 = tpu.matmul %258, %260, %cst_269 {dimension_numbers = #tpu.dot_dimension_numbers<[1], [0], [0], [1], [0, 0, 1, 1], [], []>} : vector<8x8xbf16>, vector<8x256xbf16>, vector<8x256xf32> -> vector<8x256xf32>
    %262 = arith.addf %256, %261 : vector<8x256xf32>
    %c4_270 = arith.constant 4 : index
    %c0_271 = arith.constant 0 : index
    %c0_272 = arith.constant 0 : index
    %263 = vector.load %arg5[%c4_270, %c0_271, %c0_272] : memref<7x8x8xbf16, #tpu.memory_space<vmem>>, vector<1x8x8xbf16>
    %264 = vector.shape_cast %263 : vector<1x8x8xbf16> to vector<8x8xbf16>
    %c0_273 = arith.constant 0 : index
    %c416 = arith.constant 416 : index
    %265 = vector.load %arg14[%c0_273, %c416] : memref<8x704xf32, #tpu.memory_space<vmem>>, vector<8x256xf32>
    %266 = arith.truncf %265 : vector<8x256xf32> to vector<8x256xbf16>
    %cst_274 = arith.constant dense<0.000000e+00> : vector<8x256xf32>
    %267 = tpu.matmul %264, %266, %cst_274 {dimension_numbers = #tpu.dot_dimension_numbers<[1], [0], [0], [1], [0, 0, 1, 1], [], []>} : vector<8x8xbf16>, vector<8x256xbf16>, vector<8x256xf32> -> vector<8x256xf32>
    %268 = arith.addf %262, %267 : vector<8x256xf32>
    %c5_275 = arith.constant 5 : index
    %c0_276 = arith.constant 0 : index
    %c0_277 = arith.constant 0 : index
    %269 = vector.load %arg5[%c5_275, %c0_276, %c0_277] : memref<7x8x8xbf16, #tpu.memory_space<vmem>>, vector<1x8x8xbf16>
    %270 = vector.shape_cast %269 : vector<1x8x8xbf16> to vector<8x8xbf16>
    %c0_278 = arith.constant 0 : index
    %c432 = arith.constant 432 : index
    %271 = vector.load %arg14[%c0_278, %c432] : memref<8x704xf32, #tpu.memory_space<vmem>>, vector<8x256xf32>
    %272 = arith.truncf %271 : vector<8x256xf32> to vector<8x256xbf16>
    %cst_279 = arith.constant dense<0.000000e+00> : vector<8x256xf32>
    %273 = tpu.matmul %270, %272, %cst_279 {dimension_numbers = #tpu.dot_dimension_numbers<[1], [0], [0], [1], [0, 0, 1, 1], [], []>} : vector<8x8xbf16>, vector<8x256xbf16>, vector<8x256xf32> -> vector<8x256xf32>
    %274 = arith.addf %268, %273 : vector<8x256xf32>
    %c6_280 = arith.constant 6 : index
    %c0_281 = arith.constant 0 : index
    %c0_282 = arith.constant 0 : index
    %275 = vector.load %arg5[%c6_280, %c0_281, %c0_282] : memref<7x8x8xbf16, #tpu.memory_space<vmem>>, vector<1x8x8xbf16>
    %276 = vector.shape_cast %275 : vector<1x8x8xbf16> to vector<8x8xbf16>
    %c0_283 = arith.constant 0 : index
    %c448 = arith.constant 448 : index
    %277 = vector.load %arg14[%c0_283, %c448] : memref<8x704xf32, #tpu.memory_space<vmem>>, vector<8x256xf32>
    %278 = arith.truncf %277 : vector<8x256xf32> to vector<8x256xbf16>
    %cst_284 = arith.constant dense<0.000000e+00> : vector<8x256xf32>
    %279 = tpu.matmul %276, %278, %cst_284 {dimension_numbers = #tpu.dot_dimension_numbers<[1], [0], [0], [1], [0, 0, 1, 1], [], []>} : vector<8x8xbf16>, vector<8x256xbf16>, vector<8x256xf32> -> vector<8x256xf32>
    %280 = arith.addf %274, %279 : vector<8x256xf32>
    %cst_285 = arith.constant dense<0.000000e+00> : vector<8xf32>
    %281 = vector.multi_reduction <add>, %280, %cst_285 [1] : vector<8x256xf32> to vector<8xf32>
    %282 = vector.shape_cast %281 : vector<8xf32> to vector<8x1xf32>
    %cst_286 = arith.constant 3.906250e-03 : f32
    %283 = vector.broadcast %cst_286 : f32 to vector<8x1xf32>
    %284 = arith.mulf %282, %283 : vector<8x1xf32>
    %285 = vector.broadcast %284 : vector<8x1xf32> to vector<8x256xf32>
    %286 = arith.subf %280, %285 : vector<8x256xf32>
    %287 = arith.mulf %286, %286 : vector<8x256xf32>
    %cst_287 = arith.constant dense<0.000000e+00> : vector<8xf32>
    %288 = vector.multi_reduction <add>, %287, %cst_287 [1] : vector<8x256xf32> to vector<8xf32>
    %289 = vector.shape_cast %288 : vector<8xf32> to vector<8x1xf32>
    %cst_288 = arith.constant 3.906250e-03 : f32
    %290 = vector.broadcast %cst_288 : f32 to vector<8x1xf32>
    %291 = arith.mulf %289, %290 : vector<8x1xf32>
    %cst_289 = arith.constant 9.99999974E-6 : f32
    %292 = vector.broadcast %cst_289 : f32 to vector<8x1xf32>
    %293 = arith.addf %291, %292 : vector<8x1xf32>
    %294 = math.rsqrt %293 : vector<8x1xf32>
    %295 = vector.broadcast %294 : vector<8x1xf32> to vector<8x256xf32>
    %296 = arith.mulf %286, %295 : vector<8x256xf32>
    %cst_290 = arith.constant 2.000000e-01 : f32
    %297 = vector.broadcast %cst_290 : f32 to vector<8x256xf32>
    %298 = arith.mulf %297, %296 : vector<8x256xf32>
    %299 = arith.maximumf %296, %298 : vector<8x256xf32>
    %c1_291 = arith.constant 1 : index
    %c0_292 = arith.constant 0 : index
    %c0_293 = arith.constant 0 : index
    %300 = vector.load %arg11[%c1_291, %c0_292, %c0_293] : memref<2x8x256xf32, #tpu.memory_space<vmem>>, vector<1x8x256xf32>
    %301 = vector.shape_cast %300 : vector<1x8x256xf32> to vector<8x256xf32>
    %302 = vector.shape_cast %299 : vector<8x256xf32> to vector<1x8x256xf32>
    tpu.vector_store %arg11[%c1_291, %c0_292, %c0_293], %302 {strides = array<i32>} : memref<2x8x256xf32, #tpu.memory_space<vmem>>, vector<1x8x256xf32>,
    return
  }
  func.func @transform_0(%arg0: i32) -> (i32, i32, i32) {
    %c0_i32 = arith.constant 0 : i32
    %c0_i32_0 = arith.constant 0 : i32
    %c0_i32_1 = arith.constant 0 : i32
    return %arg0, %c0_i32, %c0_i32_0 : i32, i32, i32
  }
  func.func @transform_1(%arg0: i32) -> (i32, i32) {
    %c0_i32 = arith.constant 0 : i32
    %c0_i32_0 = arith.constant 0 : i32
    %c0_i32_1 = arith.constant 0 : i32
    return %c0_i32, %c0_i32_0 : i32, i32
  }
  func.func @transform_2(%arg0: i32) -> (i32, i32) {
    %c0_i32 = arith.constant 0 : i32
    %c0_i32_0 = arith.constant 0 : i32
    %c0_i32_1 = arith.constant 0 : i32
    return %c0_i32, %c0_i32_0 : i32, i32
  }
  func.func @transform_3(%arg0: i32) -> (i32, i32) {
    %c0_i32 = arith.constant 0 : i32
    %c0_i32_0 = arith.constant 0 : i32
    %c0_i32_1 = arith.constant 0 : i32
    return %c0_i32, %c0_i32_0 : i32, i32
  }
  func.func @transform_4(%arg0: i32) -> (i32, i32, i32) {
    %c0_i32 = arith.constant 0 : i32
    %c0_i32_0 = arith.constant 0 : i32
    %c0_i32_1 = arith.constant 0 : i32
    %c0_i32_2 = arith.constant 0 : i32
    return %c0_i32, %c0_i32_0, %c0_i32_1 : i32, i32, i32
  }
  func.func @transform_5(%arg0: i32) -> (i32, i32) {
    %c0_i32 = arith.constant 0 : i32
    %c0_i32_0 = arith.constant 0 : i32
    %c0_i32_1 = arith.constant 0 : i32
    return %c0_i32, %c0_i32_0 : i32, i32
  }
  func.func @transform_6(%arg0: i32) -> (i32, i32) {
    %c0_i32 = arith.constant 0 : i32
    %c0_i32_0 = arith.constant 0 : i32
    %c0_i32_1 = arith.constant 0 : i32
    return %c0_i32, %c0_i32_0 : i32, i32
  }
  func.func @transform_7(%arg0: i32) -> (i32, i32) {
    %c0_i32 = arith.constant 0 : i32
    %c0_i32_0 = arith.constant 0 : i32
    %c0_i32_1 = arith.constant 0 : i32
    return %c0_i32, %c0_i32_0 : i32, i32
  }
  func.func @transform_8(%arg0: i32) -> (i32, i32) {
    %c0_i32 = arith.constant 0 : i32
    %c0_i32_0 = arith.constant 0 : i32
    %c0_i32_1 = arith.constant 0 : i32
    return %c0_i32, %c0_i32_0 : i32, i32
  }
  func.func @transform_9(%arg0: i32) -> (i32, i32) {
    %c0_i32 = arith.constant 0 : i32
    %c0_i32_0 = arith.constant 0 : i32
    %c0_i32_1 = arith.constant 0 : i32
    return %c0_i32, %c0_i32_0 : i32, i32
  }
  func.func @transform_10(%arg0: i32) -> (i32, i32, i32) {
    %c0_i32 = arith.constant 0 : i32
    %c0_i32_0 = arith.constant 0 : i32
    %c0_i32_1 = arith.constant 0 : i32
    return %arg0, %c0_i32, %c0_i32_0 : i32, i32, i32
  }
}

</mosaic_0001>

<llo_original>
// kernel: tpu_custom_call.1
$region0: #{tpu_custom_call.1}
  #allocation0 [shape = 'u32[]', space=smem, size = 0x4, offset = 0x4, fixed_abs, tag = 'smem constant byte address 0x4 - core index']
  #allocation1 [shape = 'u32[72,128]{1,0:T(1,128)}', space=vmem, size = 0x9000, scoped, tag = 'internal scratch']
  #allocation2 [shape = 'f32[8,716]{1,0:T(8,128)}', space=vmem, size = 0x6000, scoped, tag = 'scratch operand']
  #allocation3 [shape = 'f32[8,524]{1,0:T(8,128)}', space=vmem, size = 0x5000, scoped, tag = 'scratch operand']
  #allocation4 [shape = 'f32[8,704]{1,0:T(8,128)}', space=vmem, size = 0x6000, scoped, tag = 'scratch operand']
  #allocation5 [shape = 'f32[56,512]{1,0:T(8,128)}', space=vmem, size = 0x1c000, scoped, tag = 'scratch operand']
  #allocation6 [shape = 'f32[56,704]{1,0:T(8,128)}', space=vmem, size = 0x2a000, scoped, tag = 'scratch operand']
  #allocation7 [shape = 'f32[56,512]{1,0:T(8,128)}', space=vmem, size = 0x1c000, scoped, tag = 'scratch operand']
  %s0 = inlined_call_operand.hbm [shape: f32[2,8,256], index: 0, kind: input, shape index: {}]
  %s1 = inlined_call_operand.hbm [shape: bf16[8,56], index: 1, kind: input, shape index: {}]
  %s2 = inlined_call_operand.hbm [shape: bf16[8,56], index: 2, kind: input, shape index: {}]
  %s3 = inlined_call_operand.hbm [shape: bf16[8,56], index: 3, kind: input, shape index: {}]
  %s4 = inlined_call_operand.hbm [shape: bf16[7,8,8], index: 4, kind: input, shape index: {}]
  %s5 = inlined_call_operand.vmem [shape: f32[8,1], index: 5, kind: input, shape index: {}]
  %s6 = inlined_call_operand.vmem [shape: f32[8,1], index: 6, kind: input, shape index: {}]
  %s7 = inlined_call_operand.vmem [shape: f32[8,1], index: 7, kind: input, shape index: {}]
  %s8 = inlined_call_operand.vmem [shape: f32[7,256], index: 8, kind: input, shape index: {}]
  %s9 = inlined_call_operand.vmem [shape: f32[1,704], index: 9, kind: input, shape index: {}]
  %s10 = inlined_call_operand.hbm [shape: f32[2,8,256], index: 10, kind: output, shape index: {}]
  %s11 = sld [smem:[#allocation0]]
  $region70: #{tpu_custom_call.1} parent=0
    _
  %s13 = ssub.s32 1, %s11
  %s14 = scalar_select 0, %s13, %s11
  $region1: #{tpu_custom_call.1} parent=0
    #allocation8 [shape = 'u8[16384]{0}', space=vmem, size = 0x4000, scoped, tag = 'input window, operand 0, single buffered']
    #allocation9 [shape = 's32[1]{0}', space=sflag, size = 0x4, scoped, tag = 'scoped memory for tpu_custom_call.1']
    #allocation10 [shape = 's32[1]{0}', space=sflag, size = 0x4, scoped, tag = 'scoped memory for tpu_custom_call.1']
    #allocation11 [shape = 'u8[2048]{0}', space=vmem, size = 0x800, scoped, tag = 'input window, operand 1, single buffered']
    #allocation12 [shape = 's32[1]{0}', space=sflag, size = 0x4, scoped, tag = 'scoped memory for tpu_custom_call.1']
    #allocation13 [shape = 'u8[2048]{0}', space=vmem, size = 0x800, scoped, tag = 'input window, operand 2, single buffered']
    #allocation14 [shape = 'u8[2048]{0}', space=vmem, size = 0x800, scoped, tag = 'input window, operand 3, single buffered']
    #allocation15 [shape = 's32[1]{0}', space=sflag, size = 0x4, scoped, tag = 'scoped memory for tpu_custom_call.1']
    #allocation16 [shape = 'u8[14336]{0}', space=vmem, size = 0x3800, scoped, tag = 'input window, operand 4, single buffered']
    #allocation17 [shape = 'u8[16384]{0}', space=vmem, size = 0x4000, scoped, tag = 'output window, operand 0, single buffered']
    %15 = vsyncpa [#allocation9], 0
    %16 = vsyncpa [#allocation12], 0
    %17 = vsyncpa [#allocation15], 0
    %18 = vsyncpa [#allocation10], 0
    // Predicated region
    $region2: #{tpu_custom_call.1} parent=1 // pred_check
      _
    $region3: #{tpu_custom_call.1} parent=1 // pred_check_branch
      %20 = sbr.rel (0) target = $region5
    $region4: #{tpu_custom_call.1} parent=1 // pred_region
      %22 = vsyncadd [#allocation9], 0
      %s23 = sshll.u32 %s0, 4
      %s24 = int_to_ptr.hbm [resolvable:$true] %s23
      %s25 = sshll.u32 [#allocation8], 4
      %s26 = int_to_ptr.vmem [resolvable:$true] %s25
      %31 = dma.hbm_to_vmem [thread:$0]  %s24, 512, %s26, [#allocation9], 256, 256, 16
    $region5: #{tpu_custom_call.1} parent=1 // pred_fallthru
      _
    // Predicated region
    $region6: #{tpu_custom_call.1} parent=1 // pred_check
      _
    $region7: #{tpu_custom_call.1} parent=1 // pred_check_branch
      %33 = sbr.rel (0) target = $region9
    $region8: #{tpu_custom_call.1} parent=1 // pred_region
      %35 = vsyncadd [#allocation12], 0
      %s37 = sshll.u32 %s1, 4
      %s38 = int_to_ptr.hbm [resolvable:$true] %s37
      %s39 = sshll.u32 [#allocation11], 4
      %s40 = int_to_ptr.vmem [resolvable:$true] %s39
      %42 = dma.hbm_to_vmem [thread:$0]  %s38, 64, %s40, [#allocation12]
    $region9: #{tpu_custom_call.1} parent=1 // pred_fallthru
      _
    // Predicated region
    $region10: #{tpu_custom_call.1} parent=1 // pred_check
      _
    $region11: #{tpu_custom_call.1} parent=1 // pred_check_branch
      %44 = sbr.rel (0) target = $region13
    $region12: #{tpu_custom_call.1} parent=1 // pred_region
      %46 = vsyncadd [#allocation12], 0
      %s48 = sshll.u32 %s2, 4
      %s49 = int_to_ptr.hbm [resolvable:$true] %s48
      %s50 = sshll.u32 [#allocation13], 4
      %s51 = int_to_ptr.vmem [resolvable:$true] %s50
      %53 = dma.hbm_to_vmem [thread:$0]  %s49, 64, %s51, [#allocation12]
    $region13: #{tpu_custom_call.1} parent=1 // pred_fallthru
      _
    // Predicated region
    $region14: #{tpu_custom_call.1} parent=1 // pred_check
      _
    $region15: #{tpu_custom_call.1} parent=1 // pred_check_branch
      %55 = sbr.rel (0) target = $region17
    $region16: #{tpu_custom_call.1} parent=1 // pred_region
      %57 = vsyncadd [#allocation15], 0
      %s59 = sshll.u32 %s3, 4
      %s60 = int_to_ptr.hbm [resolvable:$true] %s59
      %s61 = sshll.u32 [#allocation14], 4
      %s62 = int_to_ptr.vmem [resolvable:$true] %s61
      %64 = dma.hbm_to_vmem [thread:$0]  %s60, 64, %s62, [#allocation15]
    $region17: #{tpu_custom_call.1} parent=1 // pred_fallthru
      _
    // Predicated region
    $region18: #{tpu_custom_call.1} parent=1 // pred_check
      _
    $region19: #{tpu_custom_call.1} parent=1 // pred_check_branch
      %66 = sbr.rel (0) target = $region21
    $region20: #{tpu_custom_call.1} parent=1 // pred_region
      %68 = vsyncadd [#allocation15], 0
      %s69 = sshll.u32 %s4, 4
      %s70 = int_to_ptr.hbm [resolvable:$true] %s69
      %s71 = sshll.u32 [#allocation16], 4
      %s72 = int_to_ptr.vmem [resolvable:$true] %s71
      %77 = dma.hbm_to_vmem [thread:$0]  %s70, 448, %s72, [#allocation15], 64, 64, 4
    $region21: #{tpu_custom_call.1} parent=1 // pred_fallthru
      _
    // Predicated region
    $region22: #{tpu_custom_call.1} parent=1 // pred_check
      _
    $region23: #{tpu_custom_call.1} parent=1 // pred_check_branch
      %79 = sbr.rel (0) target = $region25
    $region24: #{tpu_custom_call.1} parent=1 // pred_region
      _
    $region25: #{tpu_custom_call.1} parent=1 // pred_fallthru
      _
    // Predicated region
    $region26: #{tpu_custom_call.1} parent=1 // pred_check
      _
    $region27: #{tpu_custom_call.1} parent=1 // pred_check_branch
      %81 = sbr.rel (0) target = $region29
    $region28: #{tpu_custom_call.1} parent=1 // pred_region
      _
    $region29: #{tpu_custom_call.1} parent=1 // pred_fallthru
      _
    // Predicated region
    $region30: #{tpu_custom_call.1} parent=1 // pred_check
      _
    $region31: #{tpu_custom_call.1} parent=1 // pred_check_branch
      %83 = sbr.rel (0) target = $region33
    $region32: #{tpu_custom_call.1} parent=1 // pred_region
      _
    $region33: #{tpu_custom_call.1} parent=1 // pred_fallthru
      _
    // Predicated region
    $region34: #{tpu_custom_call.1} parent=1 // pred_check
      _
    $region35: #{tpu_custom_call.1} parent=1 // pred_check_branch
      %85 = sbr.rel (0) target = $region37
    $region36: #{tpu_custom_call.1} parent=1 // pred_region
      _
    $region37: #{tpu_custom_call.1} parent=1 // pred_fallthru
      _
    // Predicated region
    $region38: #{tpu_custom_call.1} parent=1 // pred_check
      _
    $region39: #{tpu_custom_call.1} parent=1 // pred_check_branch
      %87 = sbr.rel (0) target = $region41
    $region40: #{tpu_custom_call.1} parent=1 // pred_region
      _
    $region41: #{tpu_custom_call.1} parent=1 // pred_fallthru
      _
    // Predicated region
    $region42: #{tpu_custom_call.1} parent=1 // pred_check
      _
    $region43: #{tpu_custom_call.1} parent=1 // pred_check_branch
      %89 = sbr.rel (0) target = $region45
    $region44: #{tpu_custom_call.1} parent=1 // pred_region
      %91 = dma.done [#allocation9], 512
    $region45: #{tpu_custom_call.1} parent=1 // pred_fallthru
      _
    // Predicated region
    $region46: #{tpu_custom_call.1} parent=1 // pred_check
      _
    $region47: #{tpu_custom_call.1} parent=1 // pred_check_branch
      %93 = sbr.rel (0) target = $region49
    $region48: #{tpu_custom_call.1} parent=1 // pred_region
      %95 = dma.done [#allocation12], 64
    $region49: #{tpu_custom_call.1} parent=1 // pred_fallthru
      _
    // Predicated region
    $region50: #{tpu_custom_call.1} parent=1 // pred_check
      _
    $region51: #{tpu_custom_call.1} parent=1 // pred_check_branch
      %97 = sbr.rel (0) target = $region53
    $region52: #{tpu_custom_call.1} parent=1 // pred_region
      %99 = dma.done [#allocation12], 64
    $region53: #{tpu_custom_call.1} parent=1 // pred_fallthru
      _
    // Predicated region
    $region54: #{tpu_custom_call.1} parent=1 // pred_check
      _
    $region55: #{tpu_custom_call.1} parent=1 // pred_check_branch
      %101 = sbr.rel (0) target = $region57
    $region56: #{tpu_custom_call.1} parent=1 // pred_region
      %103 = dma.done [#allocation15], 64
    $region57: #{tpu_custom_call.1} parent=1 // pred_fallthru
      _
    // Predicated region
    $region58: #{tpu_custom_call.1} parent=1 // pred_check
      _
    $region59: #{tpu_custom_call.1} parent=1 // pred_check_branch
      %105 = sbr.rel (0) target = $region61
    $region60: #{tpu_custom_call.1} parent=1 // pred_region
      %107 = dma.done [#allocation15], 448
    $region61: #{tpu_custom_call.1} parent=1 // pred_fallthru
      _
    %vm109 = vcmask 416768
    %110 = vst.msk [vmem:[#allocation2] sm:$0xff] %vm109, 0.0
    %v111 = vld [vmem:[#allocation8] sm:$0xff]
    %v112 = vld [vmem:[#allocation8 + $0x8] sm:$0xff]
    %115 = vrot.lane.b32.xlu0 %v111, 51
    %v116 = vpop.permute.xlu0 %115
    %117 = vrot.lane.b32.xlu0 %v112, 51
    %v118 = vpop.permute.xlu0 %117
    %v119 = vsel %vm109, %v116, %v118
    %vm123 = vcmask 1047960
    %124 = vst.msk [vmem:[#allocation2] sm:$0xff] %vm123, %v116
    %125 = vst [vmem:[#allocation2 + $0x8] sm:$0xff] %v119
    %126 = vst.msk [vmem:[#allocation2 + $0x10] sm:$0xff] %vm109, %v118
    %vm127 = vcmask 834968
    %128 = vst.msk [vmem:[#allocation2 + $0x10] sm:$0xff] %vm127, 0.0
    %vm129 = vcmask 1048368
    %130 = vst.msk [vmem:[#allocation2 + $0x10] sm:$0xff] %vm129, 0.0
    %vm131 = vcmask 203776
    %132 = vst.msk [vmem:[#allocation2 + $0x18] sm:$0xff] %vm131, 0.0
    %s133 = scalar_lea.vmem [#allocation8], 16
    %v134 = vld [vmem:[%s133] sm:$0xff]
    %v135 = vld [vmem:[%s133 + $0x8] sm:$0xff]
    %138 = vrot.lane.b32.xlu0 %v134, 25
    %v139 = vpop.permute.xlu0 %138
    %140 = vrot.lane.b32.xlu0 %v135, 25
    %v141 = vpop.permute.xlu0 %140
    %v142 = vsel %vm131, %v139, %v141
    %vm146 = vcmask 1047752
    %147 = vst.msk [vmem:[#allocation2 + $0x18] sm:$0xff] %vm146, %v139
    %148 = vst [vmem:[#allocation2 + $0x20] sm:$0xff] %v142
    %149 = vst.msk [vmem:[#allocation2 + $0x28] sm:$0xff] %vm131, %v141
    %vm150 = vcmask 621768
    %151 = vst.msk [vmem:[#allocation2 + $0x28] sm:$0xff] %vm150, 0.0
    %v152 = vld [vmem:[#allocation2] sm:$0xff]
    %v153 = vld [vmem:[#allocation2 + $0x8] sm:$0xff]
    %v154 = vld [vmem:[#allocation2 + $0x10] sm:$0xff]
    %158 = vrot.lane.b32.xlu0 %v152, 125
    %v159 = vpop.permute.xlu0 %158
    %160 = vrot.lane.b32.xlu0 %v153, 125
    %v161 = vpop.permute.xlu0 %160
    %162 = vrot.lane.b32.xlu0 %v154, 125
    %v163 = vpop.permute.xlu0 %162
    %vm164 = vcmask 1022976
    %v165 = vsel %vm164, %v159, %v161
    %v166 = vsel %vm164, %v161, %v163
    %169 = vst [vmem:[#allocation5] sm:$0xff] %v165
    %170 = vst [vmem:[#allocation5 + $0x8] sm:$0xff] %v166
    %v171 = vld [vmem:[#allocation2] sm:$0xff]
    %v172 = vld [vmem:[#allocation2 + $0x8] sm:$0xff]
    %v173 = vld [vmem:[#allocation2 + $0x10] sm:$0xff]
    %174 = vst [vmem:[#allocation6] sm:$0xff] %v171
    %175 = vst [vmem:[#allocation6 + $0x8] sm:$0xff] %v172
    %vm176 = vcmask 785408
    %177 = vst.msk [vmem:[#allocation6 + $0x10] sm:$0xff] %vm176, %v173
    %v178 = vld [vmem:[#allocation2 + $0x10] sm:$0xff]
    %v179 = vld [vmem:[#allocation2 + $0x18] sm:$0xff]
    %v180 = vld [vmem:[#allocation2 + $0x20] sm:$0xff]
    %184 = vrot.lane.b32.xlu0 %v178, 23
    %v185 = vpop.permute.xlu0 %184
    %186 = vrot.lane.b32.xlu0 %v179, 23
    %v187 = vpop.permute.xlu0 %186
    %188 = vrot.lane.b32.xlu0 %v180, 23
    %v189 = vpop.permute.xlu0 %188
    %vm190 = vcmask 187392
    %v191 = vsel %vm190, %v185, %v187
    %v192 = vsel %vm190, %v187, %v189
    %195 = vst [vmem:[#allocation5 + $0x10] sm:$0xff] %v191
    %196 = vst [vmem:[#allocation5 + $0x18] sm:$0xff] %v192
    %v197 = vld [vmem:[#allocation2 + $0x10] sm:$0xff]
    %v198 = vld [vmem:[#allocation2 + $0x18] sm:$0xff]
    %v199 = vld [vmem:[#allocation2 + $0x20] sm:$0xff]
    %v200 = vld [vmem:[#allocation2 + $0x28] sm:$0xff]
    %205 = vrot.lane.b32.xlu0 %v197, 122
    %v206 = vpop.permute.xlu0 %205
    %207 = vrot.lane.b32.xlu0 %v198, 122
    %v208 = vpop.permute.xlu0 %207
    %209 = vrot.lane.b32.xlu0 %v199, 122
    %v210 = vpop.permute.xlu0 %209
    %211 = vrot.lane.b32.xlu0 %v200, 122
    %v212 = vpop.permute.xlu0 %211
    %vm213 = vcmask 998400
    %v214 = vsel %vm213, %v206, %v208
    %v215 = vsel %vm213, %v208, %v210
    %v216 = vsel %vm213, %v210, %v212
    %vm221 = vcmask 1048320
    %222 = vst.msk [vmem:[#allocation6 + $0x10] sm:$0xff] %vm221, %v214
    %223 = vst [vmem:[#allocation6 + $0x18] sm:$0xff] %v215
    %224 = vst [vmem:[#allocation6 + $0x20] sm:$0xff] %v216
    %vm225 = vcmask 523264
    %226 = vst.msk [vmem:[#allocation6 + $0x28] sm:$0xff] %vm225, %v212
    %v227 = vld [vmem:[#allocation2] sm:$0xff]
    %v228 = vld [vmem:[#allocation2 + $0x8] sm:$0xff]
    %v229 = vld [vmem:[#allocation2 + $0x10] sm:$0xff]
    %233 = vrot.lane.b32.xlu0 %v227, 109
    %v234 = vpop.permute.xlu0 %233
    %235 = vrot.lane.b32.xlu0 %v228, 109
    %v236 = vpop.permute.xlu0 %235
    %237 = vrot.lane.b32.xlu0 %v229, 109
    %v238 = vpop.permute.xlu0 %237
    %vm239 = vcmask 891904
    %v240 = vsel %vm239, %v234, %v236
    %v241 = vsel %vm239, %v236, %v238
    %244 = vst [vmem:[#allocation5 + $0x20] sm:$0xff] %v240
    %245 = vst [vmem:[#allocation5 + $0x28] sm:$0xff] %v241
    %v246 = vld [vmem:[#allocation2] sm:$0xff]
    %v247 = vld [vmem:[#allocation2 + $0x8] sm:$0xff]
    %v248 = vld [vmem:[#allocation2 + $0x10] sm:$0xff]
    %252 = vrot.lane.b32.xlu0 %v246, 127
    %v253 = vpop.permute.xlu0 %252
    %254 = vrot.lane.b32.xlu0 %v247, 127
    %v255 = vpop.permute.xlu0 %254
    %256 = vrot.lane.b32.xlu0 %v248, 127
    %v257 = vpop.permute.xlu0 %256
    %vm258 = vcmask 1039360
    %v259 = vsel %vm258, %v253, %v255
    %v260 = vsel %vm258, %v255, %v257
    %264 = vst [vmem:[#allocation6 + $0x30] sm:$0xff] %v259
    %265 = vst [vmem:[#allocation6 + $0x38] sm:$0xff] %v260
    %266 = vst.msk [vmem:[#allocation6 + $0x40] sm:$0xff] %vm176, %v257
    %v267 = vld [vmem:[#allocation2 + $0x10] sm:$0xff]
    %v268 = vld [vmem:[#allocation2 + $0x18] sm:$0xff]
    %v269 = vld [vmem:[#allocation2 + $0x20] sm:$0xff]
    %273 = vrot.lane.b32.xlu0 %v267, 7
    %v274 = vpop.permute.xlu0 %273
    %275 = vrot.lane.b32.xlu0 %v268, 7
    %v276 = vpop.permute.xlu0 %275
    %277 = vrot.lane.b32.xlu0 %v269, 7
    %v278 = vpop.permute.xlu0 %277
    %vm279 = vcmask 56320
    %v280 = vsel %vm279, %v274, %v276
    %v281 = vsel %vm279, %v276, %v278
    %284 = vst [vmem:[#allocation5 + $0x30] sm:$0xff] %v280
    %285 = vst [vmem:[#allocation5 + $0x38] sm:$0xff] %v281
    %v286 = vld [vmem:[#allocation2 + $0x10] sm:$0xff]
    %v287 = vld [vmem:[#allocation2 + $0x18] sm:$0xff]
    %v288 = vld [vmem:[#allocation2 + $0x20] sm:$0xff]
    %v289 = vld [vmem:[#allocation2 + $0x28] sm:$0xff]
    %294 = vrot.lane.b32.xlu0 %v286, 121
    %v295 = vpop.permute.xlu0 %294
    %296 = vrot.lane.b32.xlu0 %v287, 121
    %v297 = vpop.permute.xlu0 %296
    %298 = vrot.lane.b32.xlu0 %v288, 121
    %v299 = vpop.permute.xlu0 %298
    %300 = vrot.lane.b32.xlu0 %v289, 121
    %v301 = vpop.permute.xlu0 %300
    %vm302 = vcmask 990208
    %v303 = vsel %vm302, %v295, %v297
    %v304 = vsel %vm302, %v297, %v299
    %v305 = vsel %vm302, %v299, %v301
    %310 = vst.msk [vmem:[#allocation6 + $0x40] sm:$0xff] %vm221, %v303
    %311 = vst [vmem:[#allocation6 + $0x48] sm:$0xff] %v304
    %312 = vst [vmem:[#allocation6 + $0x50] sm:$0xff] %v305
    %313 = vst.msk [vmem:[#allocation6 + $0x58] sm:$0xff] %vm225, %v301
    %v314 = vld [vmem:[#allocation2] sm:$0xff]
    %v315 = vld [vmem:[#allocation2 + $0x8] sm:$0xff]
    %v316 = vld [vmem:[#allocation2 + $0x10] sm:$0xff]
    %320 = vrot.lane.b32.xlu0 %v314, 93
    %v321 = vpop.permute.xlu0 %320
    %322 = vrot.lane.b32.xlu0 %v315, 93
    %v323 = vpop.permute.xlu0 %322
    %324 = vrot.lane.b32.xlu0 %v316, 93
    %v325 = vpop.permute.xlu0 %324
    %vm326 = vcmask 760832
    %v327 = vsel %vm326, %v321, %v323
    %v328 = vsel %vm326, %v323, %v325
    %331 = vst [vmem:[#allocation5 + $0x40] sm:$0xff] %v327
    %332 = vst [vmem:[#allocation5 + $0x48] sm:$0xff] %v328
    %v333 = vld [vmem:[#allocation2] sm:$0xff]
    %v334 = vld [vmem:[#allocation2 + $0x8] sm:$0xff]
    %v335 = vld [vmem:[#allocation2 + $0x10] sm:$0xff]
    %339 = vrot.lane.b32.xlu0 %v333, 126
    %v340 = vpop.permute.xlu0 %339
    %341 = vrot.lane.b32.xlu0 %v334, 126
    %v342 = vpop.permute.xlu0 %341
    %343 = vrot.lane.b32.xlu0 %v335, 126
    %v344 = vpop.permute.xlu0 %343
    %vm345 = vcmask 1031168
    %v346 = vsel %vm345, %v340, %v342
    %v347 = vsel %vm345, %v342, %v344
    %351 = vst [vmem:[#allocation6 + $0x60] sm:$0xff] %v346
    %352 = vst [vmem:[#allocation6 + $0x68] sm:$0xff] %v347
    %353 = vst.msk [vmem:[#allocation6 + $0x70] sm:$0xff] %vm176, %v344
    %v354 = vld [vmem:[#allocation2 + $0x18] sm:$0xff]
    %v355 = vld [vmem:[#allocation2 + $0x20] sm:$0xff]
    %v356 = vld [vmem:[#allocation2 + $0x28] sm:$0xff]
    %360 = vrot.lane.b32.xlu0 %v354, 119
    %v361 = vpop.permute.xlu0 %360
    %362 = vrot.lane.b32.xlu0 %v355, 119
    %v363 = vpop.permute.xlu0 %362
    %364 = vrot.lane.b32.xlu0 %v356, 119
    %v365 = vpop.permute.xlu0 %364
    %vm366 = vcmask 973824
    %v367 = vsel %vm366, %v361, %v363
    %v368 = vsel %vm366, %v363, %v365
    %371 = vst [vmem:[#allocation5 + $0x50] sm:$0xff] %v367
    %372 = vst [vmem:[#allocation5 + $0x58] sm:$0xff] %v368
    %v373 = vld [vmem:[#allocation2 + $0x10] sm:$0xff]
    %v374 = vld [vmem:[#allocation2 + $0x18] sm:$0xff]
    %v375 = vld [vmem:[#allocation2 + $0x20] sm:$0xff]
    %v376 = vld [vmem:[#allocation2 + $0x28] sm:$0xff]
    %381 = vrot.lane.b32.xlu0 %v373, 120
    %v382 = vpop.permute.xlu0 %381
    %383 = vrot.lane.b32.xlu0 %v374, 120
    %v384 = vpop.permute.xlu0 %383
    %385 = vrot.lane.b32.xlu0 %v375, 120
    %v386 = vpop.permute.xlu0 %385
    %387 = vrot.lane.b32.xlu0 %v376, 120
    %v388 = vpop.permute.xlu0 %387
    %vm389 = vcmask 982016
    %v390 = vsel %vm389, %v382, %v384
    %v391 = vsel %vm389, %v384, %v386
    %v392 = vsel %vm389, %v386, %v388
    %397 = vst.msk [vmem:[#allocation6 + $0x70] sm:$0xff] %vm221, %v390
    %398 = vst [vmem:[#allocation6 + $0x78] sm:$0xff] %v391
    %399 = vst [vmem:[#allocation6 + $0x80] sm:$0xff] %v392
    %400 = vst.msk [vmem:[#allocation6 + $0x88] sm:$0xff] %vm225, %v388
    %v401 = vld [vmem:[#allocation2] sm:$0xff]
    %v402 = vld [vmem:[#allocation2 + $0x8] sm:$0xff]
    %v403 = vld [vmem:[#allocation2 + $0x10] sm:$0xff]
    %407 = vrot.lane.b32.xlu0 %v401, 77
    %v408 = vpop.permute.xlu0 %407
    %409 = vrot.lane.b32.xlu0 %v402, 77
    %v410 = vpop.permute.xlu0 %409
    %411 = vrot.lane.b32.xlu0 %v403, 77
    %v412 = vpop.permute.xlu0 %411
    %vm413 = vcmask 629760
    %v414 = vsel %vm413, %v408, %v410
    %v415 = vsel %vm413, %v410, %v412
    %418 = vst [vmem:[#allocation5 + $0x60] sm:$0xff] %v414
    %419 = vst [vmem:[#allocation5 + $0x68] sm:$0xff] %v415
    %v420 = vld [vmem:[#allocation2] sm:$0xff]
    %v421 = vld [vmem:[#allocation2 + $0x8] sm:$0xff]
    %v422 = vld [vmem:[#allocation2 + $0x10] sm:$0xff]
    %426 = vrot.lane.b32.xlu0 %v420, 125
    %v427 = vpop.permute.xlu0 %426
    %428 = vrot.lane.b32.xlu0 %v421, 125
    %v429 = vpop.permute.xlu0 %428
    %430 = vrot.lane.b32.xlu0 %v422, 125
    %v431 = vpop.permute.xlu0 %430
    %v432 = vsel %vm164, %v427, %v429
    %v433 = vsel %vm164, %v429, %v431
    %437 = vst [vmem:[#allocation6 + $0x90] sm:$0xff] %v432
    %438 = vst [vmem:[#allocation6 + $0x98] sm:$0xff] %v433
    %439 = vst.msk [vmem:[#allocation6 + $0xa0] sm:$0xff] %vm176, %v431
    %v440 = vld [vmem:[#allocation2 + $0x18] sm:$0xff]
    %v441 = vld [vmem:[#allocation2 + $0x20] sm:$0xff]
    %v442 = vld [vmem:[#allocation2 + $0x28] sm:$0xff]
    %446 = vrot.lane.b32.xlu0 %v440, 103
    %v447 = vpop.permute.xlu0 %446
    %448 = vrot.lane.b32.xlu0 %v441, 103
    %v449 = vpop.permute.xlu0 %448
    %450 = vrot.lane.b32.xlu0 %v442, 103
    %v451 = vpop.permute.xlu0 %450
    %vm452 = vcmask 842752
    %v453 = vsel %vm452, %v447, %v449
    %v454 = vsel %vm452, %v449, %v451
    %457 = vst [vmem:[#allocation5 + $0x70] sm:$0xff] %v453
    %458 = vst [vmem:[#allocation5 + $0x78] sm:$0xff] %v454
    %v459 = vld [vmem:[#allocation2 + $0x10] sm:$0xff]
    %v460 = vld [vmem:[#allocation2 + $0x18] sm:$0xff]
    %v461 = vld [vmem:[#allocation2 + $0x20] sm:$0xff]
    %v462 = vld [vmem:[#allocation2 + $0x28] sm:$0xff]
    %467 = vrot.lane.b32.xlu0 %v459, 119
    %v468 = vpop.permute.xlu0 %467
    %469 = vrot.lane.b32.xlu0 %v460, 119
    %v470 = vpop.permute.xlu0 %469
    %471 = vrot.lane.b32.xlu0 %v461, 119
    %v472 = vpop.permute.xlu0 %471
    %473 = vrot.lane.b32.xlu0 %v462, 119
    %v474 = vpop.permute.xlu0 %473
    %v475 = vsel %vm366, %v468, %v470
    %v476 = vsel %vm366, %v470, %v472
    %v477 = vsel %vm366, %v472, %v474
    %482 = vst.msk [vmem:[#allocation6 + $0xa0] sm:$0xff] %vm221, %v475
    %483 = vst [vmem:[#allocation6 + $0xa8] sm:$0xff] %v476
    %484 = vst [vmem:[#allocation6 + $0xb0] sm:$0xff] %v477
    %485 = vst.msk [vmem:[#allocation6 + $0xb8] sm:$0xff] %vm225, %v474
    %v486 = vld [vmem:[#allocation2] sm:$0xff]
    %v487 = vld [vmem:[#allocation2 + $0x8] sm:$0xff]
    %v488 = vld [vmem:[#allocation2 + $0x10] sm:$0xff]
    %492 = vrot.lane.b32.xlu0 %v486, 61
    %v493 = vpop.permute.xlu0 %492
    %494 = vrot.lane.b32.xlu0 %v487, 61
    %v495 = vpop.permute.xlu0 %494
    %496 = vrot.lane.b32.xlu0 %v488, 61
    %v497 = vpop.permute.xlu0 %496
    %vm498 = vcmask 498688
    %v499 = vsel %vm498, %v493, %v495
    %v500 = vsel %vm498, %v495, %v497
    %503 = vst [vmem:[#allocation5 + $0x80] sm:$0xff] %v499
    %504 = vst [vmem:[#allocation5 + $0x88] sm:$0xff] %v500
    %v505 = vld [vmem:[#allocation2] sm:$0xff]
    %v506 = vld [vmem:[#allocation2 + $0x8] sm:$0xff]
    %v507 = vld [vmem:[#allocation2 + $0x10] sm:$0xff]
    %511 = vrot.lane.b32.xlu0 %v505, 124
    %v512 = vpop.permute.xlu0 %511
    %513 = vrot.lane.b32.xlu0 %v506, 124
    %v514 = vpop.permute.xlu0 %513
    %515 = vrot.lane.b32.xlu0 %v507, 124
    %v516 = vpop.permute.xlu0 %515
    %vm517 = vcmask 1014784
    %v518 = vsel %vm517, %v512, %v514
    %v519 = vsel %vm517, %v514, %v516
    %523 = vst [vmem:[#allocation6 + $0xc0] sm:$0xff] %v518
    %524 = vst [vmem:[#allocation6 + $0xc8] sm:$0xff] %v519
    %525 = vst.msk [vmem:[#allocation6 + $0xd0] sm:$0xff] %vm176, %v516
    %v526 = vld [vmem:[#allocation2 + $0x18] sm:$0xff]
    %v527 = vld [vmem:[#allocation2 + $0x20] sm:$0xff]
    %v528 = vld [vmem:[#allocation2 + $0x28] sm:$0xff]
    %532 = vrot.lane.b32.xlu0 %v526, 87
    %v533 = vpop.permute.xlu0 %532
    %534 = vrot.lane.b32.xlu0 %v527, 87
    %v535 = vpop.permute.xlu0 %534
    %536 = vrot.lane.b32.xlu0 %v528, 87
    %v537 = vpop.permute.xlu0 %536
    %vm538 = vcmask 711680
    %v539 = vsel %vm538, %v533, %v535
    %v540 = vsel %vm538, %v535, %v537
    %543 = vst [vmem:[#allocation5 + $0x90] sm:$0xff] %v539
    %544 = vst [vmem:[#allocation5 + $0x98] sm:$0xff] %v540
    %v545 = vld [vmem:[#allocation2 + $0x10] sm:$0xff]
    %v546 = vld [vmem:[#allocation2 + $0x18] sm:$0xff]
    %v547 = vld [vmem:[#allocation2 + $0x20] sm:$0xff]
    %v548 = vld [vmem:[#allocation2 + $0x28] sm:$0xff]
    %553 = vrot.lane.b32.xlu0 %v545, 118
    %v554 = vpop.permute.xlu0 %553
    %555 = vrot.lane.b32.xlu0 %v546, 118
    %v556 = vpop.permute.xlu0 %555
    %557 = vrot.lane.b32.xlu0 %v547, 118
    %v558 = vpop.permute.xlu0 %557
    %559 = vrot.lane.b32.xlu0 %v548, 118
    %v560 = vpop.permute.xlu0 %559
    %vm561 = vcmask 965632
    %v562 = vsel %vm561, %v554, %v556
    %v563 = vsel %vm561, %v556, %v558
    %v564 = vsel %vm561, %v558, %v560
    %569 = vst.msk [vmem:[#allocation6 + $0xd0] sm:$0xff] %vm221, %v562
    %570 = vst [vmem:[#allocation6 + $0xd8] sm:$0xff] %v563
    %571 = vst [vmem:[#allocation6 + $0xe0] sm:$0xff] %v564
    %572 = vst.msk [vmem:[#allocation6 + $0xe8] sm:$0xff] %vm225, %v560
    %v573 = vld [vmem:[#allocation2] sm:$0xff]
    %v574 = vld [vmem:[#allocation2 + $0x8] sm:$0xff]
    %v575 = vld [vmem:[#allocation2 + $0x10] sm:$0xff]
    %579 = vrot.lane.b32.xlu0 %v573, 45
    %v580 = vpop.permute.xlu0 %579
    %581 = vrot.lane.b32.xlu0 %v574, 45
    %v582 = vpop.permute.xlu0 %581
    %583 = vrot.lane.b32.xlu0 %v575, 45
    %v584 = vpop.permute.xlu0 %583
    %vm585 = vcmask 367616
    %v586 = vsel %vm585, %v580, %v582
    %v587 = vsel %vm585, %v582, %v584
    %590 = vst [vmem:[#allocation5 + $0xa0] sm:$0xff] %v586
    %591 = vst [vmem:[#allocation5 + $0xa8] sm:$0xff] %v587
    %v592 = vld [vmem:[#allocation2] sm:$0xff]
    %v593 = vld [vmem:[#allocation2 + $0x8] sm:$0xff]
    %v594 = vld [vmem:[#allocation2 + $0x10] sm:$0xff]
    %598 = vrot.lane.b32.xlu0 %v592, 123
    %v599 = vpop.permute.xlu0 %598
    %600 = vrot.lane.b32.xlu0 %v593, 123
    %v601 = vpop.permute.xlu0 %600
    %602 = vrot.lane.b32.xlu0 %v594, 123
    %v603 = vpop.permute.xlu0 %602
    %vm604 = vcmask 1006592
    %v605 = vsel %vm604, %v599, %v601
    %v606 = vsel %vm604, %v601, %v603
    %610 = vst [vmem:[#allocation6 + $0xf0] sm:$0xff] %v605
    %611 = vst [vmem:[#allocation6 + $0xf8] sm:$0xff] %v606
    %612 = vst.msk [vmem:[#allocation6 + $0x100] sm:$0xff] %vm176, %v603
    %v613 = vld [vmem:[#allocation2 + $0x18] sm:$0xff]
    %v614 = vld [vmem:[#allocation2 + $0x20] sm:$0xff]
    %v615 = vld [vmem:[#allocation2 + $0x28] sm:$0xff]
    %619 = vrot.lane.b32.xlu0 %v613, 71
    %v620 = vpop.permute.xlu0 %619
    %621 = vrot.lane.b32.xlu0 %v614, 71
    %v622 = vpop.permute.xlu0 %621
    %623 = vrot.lane.b32.xlu0 %v615, 71
    %v624 = vpop.permute.xlu0 %623
    %vm625 = vcmask 580608
    %v626 = vsel %vm625, %v620, %v622
    %v627 = vsel %vm625, %v622, %v624
    %630 = vst [vmem:[#allocation5 + $0xb0] sm:$0xff] %v626
    %631 = vst [vmem:[#allocation5 + $0xb8] sm:$0xff] %v627
    %v632 = vld [vmem:[#allocation2 + $0x10] sm:$0xff]
    %v633 = vld [vmem:[#allocation2 + $0x18] sm:$0xff]
    %v634 = vld [vmem:[#allocation2 + $0x20] sm:$0xff]
    %v635 = vld [vmem:[#allocation2 + $0x28] sm:$0xff]
    %640 = vrot.lane.b32.xlu0 %v632, 117
    %v641 = vpop.permute.xlu0 %640
    %642 = vrot.lane.b32.xlu0 %v633, 117
    %v643 = vpop.permute.xlu0 %642
    %644 = vrot.lane.b32.xlu0 %v634, 117
    %v645 = vpop.permute.xlu0 %644
    %646 = vrot.lane.b32.xlu0 %v635, 117
    %v647 = vpop.permute.xlu0 %646
    %vm648 = vcmask 957440
    %v649 = vsel %vm648, %v641, %v643
    %v650 = vsel %vm648, %v643, %v645
    %v651 = vsel %vm648, %v645, %v647
    %656 = vst.msk [vmem:[#allocation6 + $0x100] sm:$0xff] %vm221, %v649
    %657 = vst [vmem:[#allocation6 + $0x108] sm:$0xff] %v650
    %658 = vst [vmem:[#allocation6 + $0x110] sm:$0xff] %v651
    %659 = vst.msk [vmem:[#allocation6 + $0x118] sm:$0xff] %vm225, %v647
    %v660 = vld [vmem:[#allocation2] sm:$0xff]
    %v661 = vld [vmem:[#allocation2 + $0x8] sm:$0xff]
    %v662 = vld [vmem:[#allocation2 + $0x10] sm:$0xff]
    %666 = vrot.lane.b32.xlu0 %v660, 29
    %v667 = vpop.permute.xlu0 %666
    %668 = vrot.lane.b32.xlu0 %v661, 29
    %v669 = vpop.permute.xlu0 %668
    %670 = vrot.lane.b32.xlu0 %v662, 29
    %v671 = vpop.permute.xlu0 %670
    %vm672 = vcmask 236544
    %v673 = vsel %vm672, %v667, %v669
    %v674 = vsel %vm672, %v669, %v671
    %677 = vst [vmem:[#allocation5 + $0xc0] sm:$0xff] %v673
    %678 = vst [vmem:[#allocation5 + $0xc8] sm:$0xff] %v674
    %v679 = vld [vmem:[#allocation2] sm:$0xff]
    %v680 = vld [vmem:[#allocation2 + $0x8] sm:$0xff]
    %v681 = vld [vmem:[#allocation2 + $0x10] sm:$0xff]
    %685 = vrot.lane.b32.xlu0 %v679, 122
    %v686 = vpop.permute.xlu0 %685
    %687 = vrot.lane.b32.xlu0 %v680, 122
    %v688 = vpop.permute.xlu0 %687
    %689 = vrot.lane.b32.xlu0 %v681, 122
    %v690 = vpop.permute.xlu0 %689
    %v691 = vsel %vm213, %v686, %v688
    %v692 = vsel %vm213, %v688, %v690
    %696 = vst [vmem:[#allocation6 + $0x120] sm:$0xff] %v691
    %697 = vst [vmem:[#allocation6 + $0x128] sm:$0xff] %v692
    %698 = vst.msk [vmem:[#allocation6 + $0x130] sm:$0xff] %vm176, %v690
    %v699 = vld [vmem:[#allocation2 + $0x18] sm:$0xff]
    %v700 = vld [vmem:[#allocation2 + $0x20] sm:$0xff]
    %v701 = vld [vmem:[#allocation2 + $0x28] sm:$0xff]
    %705 = vrot.lane.b32.xlu0 %v699, 55
    %v706 = vpop.permute.xlu0 %705
    %707 = vrot.lane.b32.xlu0 %v700, 55
    %v708 = vpop.permute.xlu0 %707
    %709 = vrot.lane.b32.xlu0 %v701, 55
    %v710 = vpop.permute.xlu0 %709
    %vm711 = vcmask 449536
    %v712 = vsel %vm711, %v706, %v708
    %v713 = vsel %vm711, %v708, %v710
    %716 = vst [vmem:[#allocation5 + $0xd0] sm:$0xff] %v712
    %717 = vst [vmem:[#allocation5 + $0xd8] sm:$0xff] %v713
    %v718 = vld [vmem:[#allocation2 + $0x10] sm:$0xff]
    %v719 = vld [vmem:[#allocation2 + $0x18] sm:$0xff]
    %v720 = vld [vmem:[#allocation2 + $0x20] sm:$0xff]
    %v721 = vld [vmem:[#allocation2 + $0x28] sm:$0xff]
    %726 = vrot.lane.b32.xlu0 %v718, 116
    %v727 = vpop.permute.xlu0 %726
    %728 = vrot.lane.b32.xlu0 %v719, 116
    %v729 = vpop.permute.xlu0 %728
    %730 = vrot.lane.b32.xlu0 %v720, 116
    %v731 = vpop.permute.xlu0 %730
    %732 = vrot.lane.b32.xlu0 %v721, 116
    %v733 = vpop.permute.xlu0 %732
    %vm734 = vcmask 949248
    %v735 = vsel %vm734, %v727, %v729
    %v736 = vsel %vm734, %v729, %v731
    %v737 = vsel %vm734, %v731, %v733
    %742 = vst.msk [vmem:[#allocation6 + $0x130] sm:$0xff] %vm221, %v735
    %743 = vst [vmem:[#allocation6 + $0x138] sm:$0xff] %v736
    %744 = vst [vmem:[#allocation6 + $0x140] sm:$0xff] %v737
    %745 = vst.msk [vmem:[#allocation6 + $0x148] sm:$0xff] %vm225, %v733
    %v746 = vld [vmem:[#allocation11] sm:$0xf]
    %v747 = vld [vmem:[#allocation5] sm:$0xff]
    %v748 = vld [vmem:[#allocation5 + $0x8] sm:$0xff]
    %v749 = vld [vmem:[#allocation5 + $0x10] sm:$0xff]
    %v750 = vld [vmem:[#allocation5 + $0x18] sm:$0xff]
    %v751 = vld [vmem:[#allocation5 + $0x20] sm:$0xff]
    %v752 = vld [vmem:[#allocation5 + $0x28] sm:$0xff]
    %v753 = vld [vmem:[#allocation5 + $0x30] sm:$0xff]
    %v754 = vld [vmem:[#allocation5 + $0x38] sm:$0xff]
    %v755 = vld [vmem:[#allocation5 + $0x40] sm:$0xff]
    %v756 = vld [vmem:[#allocation5 + $0x48] sm:$0xff]
    %v757 = vld [vmem:[#allocation5 + $0x50] sm:$0xff]
    %v758 = vld [vmem:[#allocation5 + $0x58] sm:$0xff]
    %v759 = vld [vmem:[#allocation5 + $0x60] sm:$0xff]
    %v760 = vld [vmem:[#allocation5 + $0x68] sm:$0xff]
    %v761 = vld [vmem:[#allocation5 + $0x70] sm:$0xff]
    %v762 = vld [vmem:[#allocation5 + $0x78] sm:$0xff]
    %v763 = vld [vmem:[#allocation5 + $0x80] sm:$0xff]
    %v764 = vld [vmem:[#allocation5 + $0x88] sm:$0xff]
    %v765 = vld [vmem:[#allocation5 + $0x90] sm:$0xff]
    %v766 = vld [vmem:[#allocation5 + $0x98] sm:$0xff]
    %v767 = vld [vmem:[#allocation5 + $0xa0] sm:$0xff]
    %v768 = vld [vmem:[#allocation5 + $0xa8] sm:$0xff]
    %v769 = vld [vmem:[#allocation5 + $0xb0] sm:$0xff]
    %v770 = vld [vmem:[#allocation5 + $0xb8] sm:$0xff]
    %v771 = vld [vmem:[#allocation5 + $0xc0] sm:$0xff]
    %v772 = vld [vmem:[#allocation5 + $0xc8] sm:$0xff]
    %v773 = vld [vmem:[#allocation5 + $0xd0] sm:$0xff]
    %v774 = vld [vmem:[#allocation5 + $0xd8] sm:$0xff]
    %v775 = vpack.c.bf16 %v751, %v747
    %v776 = vpack.c.bf16 %v752, %v748
    %v777 = vpack.c.bf16 %v753, %v749
    %v778 = vpack.c.bf16 %v754, %v750
    %v779 = vpack.c.bf16 %v759, %v755
    %v780 = vpack.c.bf16 %v760, %v756
    %v781 = vpack.c.bf16 %v761, %v757
    %v782 = vpack.c.bf16 %v762, %v758
    %v783 = vpack.c.bf16 %v767, %v763
    %v784 = vpack.c.bf16 %v768, %v764
    %v785 = vpack.c.bf16 %v769, %v765
    %v786 = vpack.c.bf16 %v770, %v766
    %v787 = vpack.c.bf16 %v771, %v771
    %v788 = vpack.c.bf16 %v772, %v772
    %v789 = vpack.c.bf16 %v773, %v773
    %v790 = vpack.c.bf16 %v774, %v774
    %v791 = vld [vmem:[%s5] sm:$0xff]
    %793 = vset.pattern.permute.xlu0 0
    %794 = vperm.xlu0 %793, %v791
    %v795 = vpop.permute.xlu0 %794
    %vm797 = vcmask 457728
    %v799 = vsel %vm797, %v746, 0
    %vm801 = vcmask 1043456
    %v803 = vsel %vm801, %v787, 0
    %v806 = vsel %vm801, %v788, 0
    %v809 = vsel %vm801, %v789, 0
    %v812 = vsel %vm801, %v790, 0
    %814 = vmatpush.bf16.msra.mxu0 0
    %815 = vmatpush.bf16.msra.mxu0 0
    %816 = vmatpush.bf16.msra.mxu0 0
    %817 = vmatpush.bf16.msra.mxu0 0
    %818 = vmatpush.bf16.msra.mxu0 %v803
    %819 = vmatpush.bf16.msra.mxu0 %v783
    %820 = vmatpush.bf16.msra.mxu0 %v779
    %821 = vmatpush.bf16.msra.mxu0 %v775
    %822 = vmatmul.bf16.gmra.mxu0 %v799
    %v823 = vpop.f32.mrf.mxu0
    %v824 = vadd.f32 %v795, %v823
    %v825 = vpop.f32.mrf.mxu0
    %826 = vdwg.mxu0
    %827 = vmatpush.bf16.msra.mxu0 0
    %828 = vmatpush.bf16.msra.mxu0 0
    %829 = vmatpush.bf16.msra.mxu0 0
    %830 = vmatpush.bf16.msra.mxu0 0
    %831 = vmatpush.bf16.msra.mxu0 %v806
    %832 = vmatpush.bf16.msra.mxu0 %v784
    %833 = vmatpush.bf16.msra.mxu0 %v780
    %834 = vmatpush.bf16.msra.mxu0 %v776
    %835 = vmatmul.bf16.gmra.mxu0 %v799
    %v836 = vpop.f32.mrf.mxu0
    %v837 = vadd.f32 %v795, %v836
    %v838 = vpop.f32.mrf.mxu0
    %839 = vdwg.mxu0
    %840 = vmatpush.bf16.msra.mxu0 0
    %841 = vmatpush.bf16.msra.mxu0 0
    %842 = vmatpush.bf16.msra.mxu0 0
    %843 = vmatpush.bf16.msra.mxu0 0
    %844 = vmatpush.bf16.msra.mxu0 %v809
    %845 = vmatpush.bf16.msra.mxu0 %v785
    %846 = vmatpush.bf16.msra.mxu0 %v781
    %847 = vmatpush.bf16.msra.mxu0 %v777
    %848 = vmatmul.bf16.gmra.mxu0 %v799
    %v849 = vpop.f32.mrf.mxu0
    %v850 = vadd.f32 %v795, %v849
    %v851 = vpop.f32.mrf.mxu0
    %852 = vdwg.mxu0
    %853 = vmatpush.bf16.msra.mxu0 0
    %854 = vmatpush.bf16.msra.mxu0 0
    %855 = vmatpush.bf16.msra.mxu0 0
    %856 = vmatpush.bf16.msra.mxu0 0
    %857 = vmatpush.bf16.msra.mxu0 %v812
    %858 = vmatpush.bf16.msra.mxu0 %v786
    %859 = vmatpush.bf16.msra.mxu0 %v782
    %860 = vmatpush.bf16.msra.mxu0 %v778
    %861 = vmatmul.bf16.gmra.mxu0 %v799
    %v862 = vpop.f32.mrf.mxu0
    %v863 = vadd.f32 %v795, %v862
    %v864 = vpop.f32.mrf.mxu0
    %865 = vdwg.mxu0
    %v866 = vld [vmem:[#allocation13] sm:$0xf]
    %v867 = vld [vmem:[#allocation6] sm:$0xff]
    %v868 = vld [vmem:[#allocation6 + $0x8] sm:$0xff]
    %v869 = vld [vmem:[#allocation6 + $0x10] sm:$0xff]
    %v870 = vld [vmem:[#allocation6 + $0x18] sm:$0xff]
    %v871 = vld [vmem:[#allocation6 + $0x20] sm:$0xff]
    %v872 = vld [vmem:[#allocation6 + $0x28] sm:$0xff]
    %v873 = vld [vmem:[#allocation6 + $0x30] sm:$0xff]
    %v874 = vld [vmem:[#allocation6 + $0x38] sm:$0xff]
    %v875 = vld [vmem:[#allocation6 + $0x40] sm:$0xff]
    %v876 = vld [vmem:[#allocation6 + $0x48] sm:$0xff]
    %v877 = vld [vmem:[#allocation6 + $0x50] sm:$0xff]
    %v878 = vld [vmem:[#allocation6 + $0x58] sm:$0xff]
    %v879 = vld [vmem:[#allocation6 + $0x60] sm:$0xff]
    %v880 = vld [vmem:[#allocation6 + $0x68] sm:$0xff]
    %v881 = vld [vmem:[#allocation6 + $0x70] sm:$0xff]
    %v882 = vld [vmem:[#allocation6 + $0x78] sm:$0xff]
    %v883 = vld [vmem:[#allocation6 + $0x80] sm:$0xff]
    %v884 = vld [vmem:[#allocation6 + $0x88] sm:$0xff]
    %v885 = vld [vmem:[#allocation6 + $0x90] sm:$0xff]
    %v886 = vld [vmem:[#allocation6 + $0x98] sm:$0xff]
    %v887 = vld [vmem:[#allocation6 + $0xa0] sm:$0xff]
    %v888 = vld [vmem:[#allocation6 + $0xa8] sm:$0xff]
    %v889 = vld [vmem:[#allocation6 + $0xb0] sm:$0xff]
    %v890 = vld [vmem:[#allocation6 + $0xb8] sm:$0xff]
    %v891 = vld [vmem:[#allocation6 + $0xc0] sm:$0xff]
    %v892 = vld [vmem:[#allocation6 + $0xc8] sm:$0xff]
    %v893 = vld [vmem:[#allocation6 + $0xd0] sm:$0xff]
    %v894 = vld [vmem:[#allocation6 + $0xd8] sm:$0xff]
    %v895 = vld [vmem:[#allocation6 + $0xe0] sm:$0xff]
    %v896 = vld [vmem:[#allocation6 + $0xe8] sm:$0xff]
    %v897 = vld [vmem:[#allocation6 + $0xf0] sm:$0xff]
    %v898 = vld [vmem:[#allocation6 + $0xf8] sm:$0xff]
    %v899 = vld [vmem:[#allocation6 + $0x100] sm:$0xff]
    %v900 = vld [vmem:[#allocation6 + $0x108] sm:$0xff]
    %v901 = vld [vmem:[#allocation6 + $0x110] sm:$0xff]
    %v902 = vld [vmem:[#allocation6 + $0x118] sm:$0xff]
    %v903 = vld [vmem:[#allocation6 + $0x120] sm:$0xff]
    %v904 = vld [vmem:[#allocation6 + $0x128] sm:$0xff]
    %v905 = vld [vmem:[#allocation6 + $0x130] sm:$0xff]
    %v906 = vld [vmem:[#allocation6 + $0x138] sm:$0xff]
    %v907 = vld [vmem:[#allocation6 + $0x140] sm:$0xff]
    %v908 = vld [vmem:[#allocation6 + $0x148] sm:$0xff]
    %v909 = vpack.c.bf16 %v873, %v867
    %v910 = vpack.c.bf16 %v874, %v868
    %v911 = vpack.c.bf16 %v875, %v869
    %v912 = vpack.c.bf16 %v876, %v870
    %v913 = vpack.c.bf16 %v877, %v871
    %v914 = vpack.c.bf16 %v878, %v872
    %v915 = vpack.c.bf16 %v885, %v879
    %v916 = vpack.c.bf16 %v886, %v880
    %v917 = vpack.c.bf16 %v887, %v881
    %v918 = vpack.c.bf16 %v888, %v882
    %v919 = vpack.c.bf16 %v889, %v883
    %v920 = vpack.c.bf16 %v890, %v884
    %v921 = vpack.c.bf16 %v897, %v891
    %v922 = vpack.c.bf16 %v898, %v892
    %v923 = vpack.c.bf16 %v899, %v893
    %v924 = vpack.c.bf16 %v900, %v894
    %v925 = vpack.c.bf16 %v901, %v895
    %v926 = vpack.c.bf16 %v902, %v896
    %v927 = vpack.c.bf16 %v903, %v903
    %v928 = vpack.c.bf16 %v904, %v904
    %v929 = vpack.c.bf16 %v905, %v905
    %v930 = vpack.c.bf16 %v906, %v906
    %v931 = vpack.c.bf16 %v907, %v907
    %v932 = vpack.c.bf16 %v908, %v908
    %v933 = vld [vmem:[%s6] sm:$0xff]
    %935 = vset.pattern.permute.xlu0 0
    %936 = vperm.xlu0 %935, %v933
    %v937 = vpop.permute.xlu0 %936
    %v940 = vsel %vm797, %v866, 0
    %v943 = vsel %vm801, %v927, 0
    %v946 = vsel %vm801, %v928, 0
    %v949 = vsel %vm801, %v929, 0
    %v952 = vsel %vm801, %v930, 0
    %v955 = vsel %vm801, %v931, 0
    %v958 = vsel %vm801, %v932, 0
    %960 = vmatpush.bf16.msra.mxu0 0
    %961 = vmatpush.bf16.msra.mxu0 0
    %962 = vmatpush.bf16.msra.mxu0 0
    %963 = vmatpush.bf16.msra.mxu0 0
    %964 = vmatpush.bf16.msra.mxu0 %v943
    %965 = vmatpush.bf16.msra.mxu0 %v921
    %966 = vmatpush.bf16.msra.mxu0 %v915
    %967 = vmatpush.bf16.msra.mxu0 %v909
    %968 = vmatmul.bf16.gmra.mxu0 %v940
    %v969 = vpop.f32.mrf.mxu0
    %v970 = vadd.f32 %v937, %v969
    %v971 = vpop.f32.mrf.mxu0
    %972 = vdwg.mxu0
    %973 = vmatpush.bf16.msra.mxu0 0
    %974 = vmatpush.bf16.msra.mxu0 0
    %975 = vmatpush.bf16.msra.mxu0 0
    %976 = vmatpush.bf16.msra.mxu0 0
    %977 = vmatpush.bf16.msra.mxu0 %v946
    %978 = vmatpush.bf16.msra.mxu0 %v922
    %979 = vmatpush.bf16.msra.mxu0 %v916
    %980 = vmatpush.bf16.msra.mxu0 %v910
    %981 = vmatmul.bf16.gmra.mxu0 %v940
    %v982 = vpop.f32.mrf.mxu0
    %v983 = vadd.f32 %v937, %v982
    %v984 = vpop.f32.mrf.mxu0
    %985 = vdwg.mxu0
    %986 = vmatpush.bf16.msra.mxu0 0
    %987 = vmatpush.bf16.msra.mxu0 0
    %988 = vmatpush.bf16.msra.mxu0 0
    %989 = vmatpush.bf16.msra.mxu0 0
    %990 = vmatpush.bf16.msra.mxu0 %v949
    %991 = vmatpush.bf16.msra.mxu0 %v923
    %992 = vmatpush.bf16.msra.mxu0 %v917
    %993 = vmatpush.bf16.msra.mxu0 %v911
    %994 = vmatmul.bf16.gmra.mxu0 %v940
    %v995 = vpop.f32.mrf.mxu0
    %v996 = vadd.f32 %v937, %v995
    %v997 = vpop.f32.mrf.mxu0
    %998 = vdwg.mxu0
    %999 = vmatpush.bf16.msra.mxu0 0
    %1000 = vmatpush.bf16.msra.mxu0 0
    %1001 = vmatpush.bf16.msra.mxu0 0
    %1002 = vmatpush.bf16.msra.mxu0 0
    %1003 = vmatpush.bf16.msra.mxu0 %v952
    %1004 = vmatpush.bf16.msra.mxu0 %v924
    %1005 = vmatpush.bf16.msra.mxu0 %v918
    %1006 = vmatpush.bf16.msra.mxu0 %v912
    %1007 = vmatmul.bf16.gmra.mxu0 %v940
    %v1008 = vpop.f32.mrf.mxu0
    %v1009 = vadd.f32 %v937, %v1008
    %v1010 = vpop.f32.mrf.mxu0
    %1011 = vdwg.mxu0
    %1012 = vmatpush.bf16.msra.mxu0 0
    %1013 = vmatpush.bf16.msra.mxu0 0
    %1014 = vmatpush.bf16.msra.mxu0 0
    %1015 = vmatpush.bf16.msra.mxu0 0
    %1016 = vmatpush.bf16.msra.mxu0 %v955
    %1017 = vmatpush.bf16.msra.mxu0 %v925
    %1018 = vmatpush.bf16.msra.mxu0 %v919
    %1019 = vmatpush.bf16.msra.mxu0 %v913
    %1020 = vmatmul.bf16.gmra.mxu0 %v940
    %v1021 = vpop.f32.mrf.mxu0
    %v1022 = vadd.f32 %v937, %v1021
    %v1023 = vpop.f32.mrf.mxu0
    %1024 = vdwg.mxu0
    %1025 = vmatpush.bf16.msra.mxu0 0
    %1026 = vmatpush.bf16.msra.mxu0 0
    %1027 = vmatpush.bf16.msra.mxu0 0
    %1028 = vmatpush.bf16.msra.mxu0 0
    %1029 = vmatpush.bf16.msra.mxu0 %v958
    %1030 = vmatpush.bf16.msra.mxu0 %v926
    %1031 = vmatpush.bf16.msra.mxu0 %v920
    %1032 = vmatpush.bf16.msra.mxu0 %v914
    %1033 = vmatmul.bf16.gmra.mxu0 %v940
    %v1034 = vpop.f32.mrf.mxu0
    %v1035 = vadd.f32 %v937, %v1034
    %v1036 = vpop.f32.mrf.mxu0
    %1037 = vdwg.mxu0
    %v1038 = vld [vmem:[%s9] sm:$0x3f]
    %v1040 = vperm.slane %v1038, 0
    %v1041 = vperm.slane %v1038, 1
    %v1042 = vperm.slane %v1038, 2
    %v1043 = vperm.slane %v1038, 3
    %v1044 = vperm.slane %v1038, 4
    %v1045 = vperm.slane %v1038, 5
    %v1052 = vmul.f32 %v970, %v1040
    %v1053 = vmul.f32 %v983, %v1041
    %v1054 = vmul.f32 %v996, %v1042
    %v1055 = vmul.f32 %v1009, %v1043
    %v1056 = vmul.f32 %v1022, %v1044
    %v1057 = vmul.f32 %v1035, %v1045
    %1058 = vst [vmem:[#allocation4] sm:$0xff] %v1052
    %1059 = vst [vmem:[#allocation4 + $0x8] sm:$0xff] %v1053
    %1060 = vst [vmem:[#allocation4 + $0x10] sm:$0xff] %v1054
    %1061 = vst [vmem:[#allocation4 + $0x18] sm:$0xff] %v1055
    %1062 = vst [vmem:[#allocation4 + $0x20] sm:$0xff] %v1056
    %1063 = vst.msk [vmem:[#allocation4 + $0x28] sm:$0xff] %vm225, %v1057
    %vm1064 = vcmask 23552
    %1065 = vst.msk [vmem:[#allocation3] sm:$0xff] %vm1064, 0.0
    %1068 = vrot.lane.b32.xlu0 %v824, 3
    %v1069 = vpop.permute.xlu0 %1068
    %1070 = vrot.lane.b32.xlu0 %v837, 3
    %v1071 = vpop.permute.xlu0 %1070
    %v1072 = vsel %vm1064, %v1069, %v1071
    %vm1076 = vcmask 1047576
    %1077 = vst.msk [vmem:[#allocation3] sm:$0xff] %vm1076, %v1069
    %1078 = vst [vmem:[#allocation3 + $0x8] sm:$0xff] %v1072
    %1079 = vst.msk [vmem:[#allocation3 + $0x10] sm:$0xff] %vm1064, %v1071
    %vm1080 = vcmask 48152
    %1081 = vst.msk [vmem:[#allocation3 + $0x10] sm:$0xff] %vm1080, 0.0
    %vm1082 = vcmask 72752
    %1083 = vst.msk [vmem:[#allocation3 + $0x10] sm:$0xff] %vm1082, 0.0
    %1086 = vrot.lane.b32.xlu0 %v850, 9
    %v1087 = vpop.permute.xlu0 %1086
    %1088 = vrot.lane.b32.xlu0 %v863, 9
    %v1089 = vpop.permute.xlu0 %1088
    %vm1090 = vcmask 72704
    %v1091 = vsel %vm1090, %v1087, %v1089
    %vm1095 = vcmask 1047624
    %1096 = vst.msk [vmem:[#allocation3 + $0x10] sm:$0xff] %vm1095, %v1087
    %1097 = vst [vmem:[#allocation3 + $0x18] sm:$0xff] %v1091
    %1098 = vst.msk [vmem:[#allocation3 + $0x20] sm:$0xff] %vm1090, %v1089
    %vm1099 = vcmask 97352
    %1100 = vst.msk [vmem:[#allocation3 + $0x20] sm:$0xff] %vm1099, 0.0
    %v1101 = vld [vmem:[%s8] ss:$8 sm:$0x3]
    %v1102 = vld [vmem:[#allocation3] sm:$0xff]
    %v1103 = vld [vmem:[#allocation3 + $0x8] sm:$0xff]
    %v1105 = vperm.slane %v1101, 0
    %v1106 = vperm.slane %v1101, 1
    %v1109 = vmul.f32 %v1102, %v1105
    %v1110 = vmul.f32 %v1103, %v1106
    %1111 = vst [vmem:[#allocation7] sm:$0xff] %v1109
    %1112 = vst [vmem:[#allocation7 + $0x8] sm:$0xff] %v1110
    %v1113 = vld [vmem:[#allocation3 + $0x10] sm:$0xff]
    %v1114 = vld [vmem:[#allocation3 + $0x18] sm:$0xff]
    %v1115 = vld [vmem:[#allocation3 + $0x20] sm:$0xff]
    %1116 = vrot.lane.b32.xlu0 %v1105, 6
    %v1117 = vpop.permute.xlu0 %1116
    %1118 = vrot.lane.b32.xlu0 %v1106, 6
    %v1119 = vpop.permute.xlu0 %1118
    %vm1120 = vcmask 48128
    %v1121 = vsel %vm1120, %v1117, %v1119
    %v1125 = vmul.f32 %v1113, %v1117
    %v1126 = vmul.f32 %v1114, %v1121
    %v1127 = vmul.f32 %v1115, %v1119
    %1131 = vrot.lane.b32.xlu0 %v1125, 122
    %v1132 = vpop.permute.xlu0 %1131
    %1133 = vrot.lane.b32.xlu0 %v1126, 122
    %v1134 = vpop.permute.xlu0 %1133
    %1135 = vrot.lane.b32.xlu0 %v1127, 122
    %v1136 = vpop.permute.xlu0 %1135
    %v1137 = vsel %vm213, %v1132, %v1134
    %v1138 = vsel %vm213, %v1134, %v1136
    %1141 = vst [vmem:[#allocation7 + $0x10] sm:$0xff] %v1137
    %1142 = vst [vmem:[#allocation7 + $0x18] sm:$0xff] %v1138
    %s1143 = scalar_lea.vmem %s8, 1
    %v1144 = vld [vmem:[%s1143] ss:$8 sm:$0x3]
    %v1145 = vld [vmem:[#allocation3] sm:$0xff]
    %v1146 = vld [vmem:[#allocation3 + $0x8] sm:$0xff]
    %v1147 = vld [vmem:[#allocation3 + $0x10] sm:$0xff]
    %v1149 = vperm.slane %v1144, 0
    %v1150 = vperm.slane %v1144, 1
    %1151 = vrot.lane.b32.xlu0 %v1149, 1
    %v1152 = vpop.permute.xlu0 %1151
    %1153 = vrot.lane.b32.xlu0 %v1150, 1
    %v1154 = vpop.permute.xlu0 %1153
    %vm1155 = vcmask 7168
    %v1156 = vsel %vm1155, %v1152, %v1154
    %v1160 = vmul.f32 %v1145, %v1152
    %v1161 = vmul.f32 %v1146, %v1156
    %v1162 = vmul.f32 %v1147, %v1154
    %1166 = vrot.lane.b32.xlu0 %v1160, 127
    %v1167 = vpop.permute.xlu0 %1166
    %1168 = vrot.lane.b32.xlu0 %v1161, 127
    %v1169 = vpop.permute.xlu0 %1168
    %1170 = vrot.lane.b32.xlu0 %v1162, 127
    %v1171 = vpop.permute.xlu0 %1170
    %v1172 = vsel %vm258, %v1167, %v1169
    %v1173 = vsel %vm258, %v1169, %v1171
    %1176 = vst [vmem:[#allocation7 + $0x20] sm:$0xff] %v1172
    %1177 = vst [vmem:[#allocation7 + $0x28] sm:$0xff] %v1173
    %v1178 = vld [vmem:[#allocation3 + $0x10] sm:$0xff]
    %v1179 = vld [vmem:[#allocation3 + $0x18] sm:$0xff]
    %v1180 = vld [vmem:[#allocation3 + $0x20] sm:$0xff]
    %1181 = vrot.lane.b32.xlu0 %v1149, 7
    %v1182 = vpop.permute.xlu0 %1181
    %1183 = vrot.lane.b32.xlu0 %v1150, 7
    %v1184 = vpop.permute.xlu0 %1183
    %v1185 = vsel %vm279, %v1182, %v1184
    %v1189 = vmul.f32 %v1178, %v1182
    %v1190 = vmul.f32 %v1179, %v1185
    %v1191 = vmul.f32 %v1180, %v1184
    %1195 = vrot.lane.b32.xlu0 %v1189, 121
    %v1196 = vpop.permute.xlu0 %1195
    %1197 = vrot.lane.b32.xlu0 %v1190, 121
    %v1198 = vpop.permute.xlu0 %1197
    %1199 = vrot.lane.b32.xlu0 %v1191, 121
    %v1200 = vpop.permute.xlu0 %1199
    %v1201 = vsel %vm302, %v1196, %v1198
    %v1202 = vsel %vm302, %v1198, %v1200
    %1205 = vst [vmem:[#allocation7 + $0x30] sm:$0xff] %v1201
    %1206 = vst [vmem:[#allocation7 + $0x38] sm:$0xff] %v1202
    %s1207 = scalar_lea.vmem %s8, 2
    %v1208 = vld [vmem:[%s1207] ss:$8 sm:$0x3]
    %v1209 = vld [vmem:[#allocation3] sm:$0xff]
    %v1210 = vld [vmem:[#allocation3 + $0x8] sm:$0xff]
    %v1211 = vld [vmem:[#allocation3 + $0x10] sm:$0xff]
    %v1213 = vperm.slane %v1208, 0
    %v1214 = vperm.slane %v1208, 1
    %1215 = vrot.lane.b32.xlu0 %v1213, 2
    %v1216 = vpop.permute.xlu0 %1215
    %1217 = vrot.lane.b32.xlu0 %v1214, 2
    %v1218 = vpop.permute.xlu0 %1217
    %vm1219 = vcmask 15360
    %v1220 = vsel %vm1219, %v1216, %v1218
    %v1224 = vmul.f32 %v1209, %v1216
    %v1225 = vmul.f32 %v1210, %v1220
    %v1226 = vmul.f32 %v1211, %v1218
    %1230 = vrot.lane.b32.xlu0 %v1224, 126
    %v1231 = vpop.permute.xlu0 %1230
    %1232 = vrot.lane.b32.xlu0 %v1225, 126
    %v1233 = vpop.permute.xlu0 %1232
    %1234 = vrot.lane.b32.xlu0 %v1226, 126
    %v1235 = vpop.permute.xlu0 %1234
    %v1236 = vsel %vm345, %v1231, %v1233
    %v1237 = vsel %vm345, %v1233, %v1235
    %1240 = vst [vmem:[#allocation7 + $0x40] sm:$0xff] %v1236
    %1241 = vst [vmem:[#allocation7 + $0x48] sm:$0xff] %v1237
    %v1242 = vld [vmem:[#allocation3 + $0x10] sm:$0xff]
    %v1243 = vld [vmem:[#allocation3 + $0x18] sm:$0xff]
    %v1244 = vld [vmem:[#allocation3 + $0x20] sm:$0xff]
    %1245 = vrot.lane.b32.xlu0 %v1213, 8
    %v1246 = vpop.permute.xlu0 %1245
    %1247 = vrot.lane.b32.xlu0 %v1214, 8
    %v1248 = vpop.permute.xlu0 %1247
    %vm1249 = vcmask 64512
    %v1250 = vsel %vm1249, %v1246, %v1248
    %v1254 = vmul.f32 %v1242, %v1246
    %v1255 = vmul.f32 %v1243, %v1250
    %v1256 = vmul.f32 %v1244, %v1248
    %1260 = vrot.lane.b32.xlu0 %v1254, 120
    %v1261 = vpop.permute.xlu0 %1260
    %1262 = vrot.lane.b32.xlu0 %v1255, 120
    %v1263 = vpop.permute.xlu0 %1262
    %1264 = vrot.lane.b32.xlu0 %v1256, 120
    %v1265 = vpop.permute.xlu0 %1264
    %v1266 = vsel %vm389, %v1261, %v1263
    %v1267 = vsel %vm389, %v1263, %v1265
    %1270 = vst [vmem:[#allocation7 + $0x50] sm:$0xff] %v1266
    %1271 = vst [vmem:[#allocation7 + $0x58] sm:$0xff] %v1267
    %s1272 = scalar_lea.vmem %s8, 3
    %v1273 = vld [vmem:[%s1272] ss:$8 sm:$0x3]
    %v1274 = vld [vmem:[#allocation3] sm:$0xff]
    %v1275 = vld [vmem:[#allocation3 + $0x8] sm:$0xff]
    %v1276 = vld [vmem:[#allocation3 + $0x10] sm:$0xff]
    %v1278 = vperm.slane %v1273, 0
    %v1279 = vperm.slane %v1273, 1
    %1280 = vrot.lane.b32.xlu0 %v1278, 3
    %v1281 = vpop.permute.xlu0 %1280
    %1282 = vrot.lane.b32.xlu0 %v1279, 3
    %v1283 = vpop.permute.xlu0 %1282
    %v1284 = vsel %vm1064, %v1281, %v1283
    %v1288 = vmul.f32 %v1274, %v1281
    %v1289 = vmul.f32 %v1275, %v1284
    %v1290 = vmul.f32 %v1276, %v1283
    %1294 = vrot.lane.b32.xlu0 %v1288, 125
    %v1295 = vpop.permute.xlu0 %1294
    %1296 = vrot.lane.b32.xlu0 %v1289, 125
    %v1297 = vpop.permute.xlu0 %1296
    %1298 = vrot.lane.b32.xlu0 %v1290, 125
    %v1299 = vpop.permute.xlu0 %1298
    %v1300 = vsel %vm164, %v1295, %v1297
    %v1301 = vsel %vm164, %v1297, %v1299
    %1304 = vst [vmem:[#allocation7 + $0x60] sm:$0xff] %v1300
    %1305 = vst [vmem:[#allocation7 + $0x68] sm:$0xff] %v1301
    %v1306 = vld [vmem:[#allocation3 + $0x10] sm:$0xff]
    %v1307 = vld [vmem:[#allocation3 + $0x18] sm:$0xff]
    %v1308 = vld [vmem:[#allocation3 + $0x20] sm:$0xff]
    %1309 = vrot.lane.b32.xlu0 %v1278, 9
    %v1310 = vpop.permute.xlu0 %1309
    %1311 = vrot.lane.b32.xlu0 %v1279, 9
    %v1312 = vpop.permute.xlu0 %1311
    %v1313 = vsel %vm1090, %v1310, %v1312
    %v1317 = vmul.f32 %v1306, %v1310
    %v1318 = vmul.f32 %v1307, %v1313
    %v1319 = vmul.f32 %v1308, %v1312
    %1323 = vrot.lane.b32.xlu0 %v1317, 119
    %v1324 = vpop.permute.xlu0 %1323
    %1325 = vrot.lane.b32.xlu0 %v1318, 119
    %v1326 = vpop.permute.xlu0 %1325
    %1327 = vrot.lane.b32.xlu0 %v1319, 119
    %v1328 = vpop.permute.xlu0 %1327
    %v1329 = vsel %vm366, %v1324, %v1326
    %v1330 = vsel %vm366, %v1326, %v1328
    %1333 = vst [vmem:[#allocation7 + $0x70] sm:$0xff] %v1329
    %1334 = vst [vmem:[#allocation7 + $0x78] sm:$0xff] %v1330
    %s1335 = scalar_lea.vmem %s8, 4
    %v1336 = vld [vmem:[%s1335] ss:$8 sm:$0x3]
    %v1337 = vld [vmem:[#allocation3] sm:$0xff]
    %v1338 = vld [vmem:[#allocation3 + $0x8] sm:$0xff]
    %v1339 = vld [vmem:[#allocation3 + $0x10] sm:$0xff]
    %v1341 = vperm.slane %v1336, 0
    %v1342 = vperm.slane %v1336, 1
    %1343 = vrot.lane.b32.xlu0 %v1341, 4
    %v1344 = vpop.permute.xlu0 %1343
    %1345 = vrot.lane.b32.xlu0 %v1342, 4
    %v1346 = vpop.permute.xlu0 %1345
    %vm1347 = vcmask 31744
    %v1348 = vsel %vm1347, %v1344, %v1346
    %v1352 = vmul.f32 %v1337, %v1344
    %v1353 = vmul.f32 %v1338, %v1348
    %v1354 = vmul.f32 %v1339, %v1346
    %1358 = vrot.lane.b32.xlu0 %v1352, 124
    %v1359 = vpop.permute.xlu0 %1358
    %1360 = vrot.lane.b32.xlu0 %v1353, 124
    %v1361 = vpop.permute.xlu0 %1360
    %1362 = vrot.lane.b32.xlu0 %v1354, 124
    %v1363 = vpop.permute.xlu0 %1362
    %v1364 = vsel %vm517, %v1359, %v1361
    %v1365 = vsel %vm517, %v1361, %v1363
    %1368 = vst [vmem:[#allocation7 + $0x80] sm:$0xff] %v1364
    %1369 = vst [vmem:[#allocation7 + $0x88] sm:$0xff] %v1365
    %v1370 = vld [vmem:[#allocation3 + $0x10] sm:$0xff]
    %v1371 = vld [vmem:[#allocation3 + $0x18] sm:$0xff]
    %v1372 = vld [vmem:[#allocation3 + $0x20] sm:$0xff]
    %1373 = vrot.lane.b32.xlu0 %v1341, 10
    %v1374 = vpop.permute.xlu0 %1373
    %1375 = vrot.lane.b32.xlu0 %v1342, 10
    %v1376 = vpop.permute.xlu0 %1375
    %vm1377 = vcmask 80896
    %v1378 = vsel %vm1377, %v1374, %v1376
    %v1382 = vmul.f32 %v1370, %v1374
    %v1383 = vmul.f32 %v1371, %v1378
    %v1384 = vmul.f32 %v1372, %v1376
    %1388 = vrot.lane.b32.xlu0 %v1382, 118
    %v1389 = vpop.permute.xlu0 %1388
    %1390 = vrot.lane.b32.xlu0 %v1383, 118
    %v1391 = vpop.permute.xlu0 %1390
    %1392 = vrot.lane.b32.xlu0 %v1384, 118
    %v1393 = vpop.permute.xlu0 %1392
    %v1394 = vsel %vm561, %v1389, %v1391
    %v1395 = vsel %vm561, %v1391, %v1393
    %1398 = vst [vmem:[#allocation7 + $0x90] sm:$0xff] %v1394
    %1399 = vst [vmem:[#allocation7 + $0x98] sm:$0xff] %v1395
    %s1400 = scalar_lea.vmem %s8, 5
    %v1401 = vld [vmem:[%s1400] ss:$8 sm:$0x3]
    %v1402 = vld [vmem:[#allocation3] sm:$0xff]
    %v1403 = vld [vmem:[#allocation3 + $0x8] sm:$0xff]
    %v1404 = vld [vmem:[#allocation3 + $0x10] sm:$0xff]
    %v1406 = vperm.slane %v1401, 0
    %v1407 = vperm.slane %v1401, 1
    %1408 = vrot.lane.b32.xlu0 %v1406, 5
    %v1409 = vpop.permute.xlu0 %1408
    %1410 = vrot.lane.b32.xlu0 %v1407, 5
    %v1411 = vpop.permute.xlu0 %1410
    %vm1412 = vcmask 39936
    %v1413 = vsel %vm1412, %v1409, %v1411
    %v1417 = vmul.f32 %v1402, %v1409
    %v1418 = vmul.f32 %v1403, %v1413
    %v1419 = vmul.f32 %v1404, %v1411
    %1423 = vrot.lane.b32.xlu0 %v1417, 123
    %v1424 = vpop.permute.xlu0 %1423
    %1425 = vrot.lane.b32.xlu0 %v1418, 123
    %v1426 = vpop.permute.xlu0 %1425
    %1427 = vrot.lane.b32.xlu0 %v1419, 123
    %v1428 = vpop.permute.xlu0 %1427
    %v1429 = vsel %vm604, %v1424, %v1426
    %v1430 = vsel %vm604, %v1426, %v1428
    %1433 = vst [vmem:[#allocation7 + $0xa0] sm:$0xff] %v1429
    %1434 = vst [vmem:[#allocation7 + $0xa8] sm:$0xff] %v1430
    %v1435 = vld [vmem:[#allocation3 + $0x10] sm:$0xff]
    %v1436 = vld [vmem:[#allocation3 + $0x18] sm:$0xff]
    %v1437 = vld [vmem:[#allocation3 + $0x20] sm:$0xff]
    %1438 = vrot.lane.b32.xlu0 %v1406, 11
    %v1439 = vpop.permute.xlu0 %1438
    %1440 = vrot.lane.b32.xlu0 %v1407, 11
    %v1441 = vpop.permute.xlu0 %1440
    %vm1442 = vcmask 89088
    %v1443 = vsel %vm1442, %v1439, %v1441
    %v1447 = vmul.f32 %v1435, %v1439
    %v1448 = vmul.f32 %v1436, %v1443
    %v1449 = vmul.f32 %v1437, %v1441
    %1453 = vrot.lane.b32.xlu0 %v1447, 117
    %v1454 = vpop.permute.xlu0 %1453
    %1455 = vrot.lane.b32.xlu0 %v1448, 117
    %v1456 = vpop.permute.xlu0 %1455
    %1457 = vrot.lane.b32.xlu0 %v1449, 117
    %v1458 = vpop.permute.xlu0 %1457
    %v1459 = vsel %vm648, %v1454, %v1456
    %v1460 = vsel %vm648, %v1456, %v1458
    %1463 = vst [vmem:[#allocation7 + $0xb0] sm:$0xff] %v1459
    %1464 = vst [vmem:[#allocation7 + $0xb8] sm:$0xff] %v1460
    %s1465 = scalar_lea.vmem %s8, 6
    %v1466 = vld [vmem:[%s1465] ss:$8 sm:$0x3]
    %v1467 = vld [vmem:[#allocation3] sm:$0xff]
    %v1468 = vld [vmem:[#allocation3 + $0x8] sm:$0xff]
    %v1469 = vld [vmem:[#allocation3 + $0x10] sm:$0xff]
    %v1471 = vperm.slane %v1466, 0
    %v1472 = vperm.slane %v1466, 1
    %1473 = vrot.lane.b32.xlu0 %v1471, 6
    %v1474 = vpop.permute.xlu0 %1473
    %1475 = vrot.lane.b32.xlu0 %v1472, 6
    %v1476 = vpop.permute.xlu0 %1475
    %v1477 = vsel %vm1120, %v1474, %v1476
    %v1481 = vmul.f32 %v1467, %v1474
    %v1482 = vmul.f32 %v1468, %v1477
    %v1483 = vmul.f32 %v1469, %v1476
    %1487 = vrot.lane.b32.xlu0 %v1481, 122
    %v1488 = vpop.permute.xlu0 %1487
    %1489 = vrot.lane.b32.xlu0 %v1482, 122
    %v1490 = vpop.permute.xlu0 %1489
    %1491 = vrot.lane.b32.xlu0 %v1483, 122
    %v1492 = vpop.permute.xlu0 %1491
    %v1493 = vsel %vm213, %v1488, %v1490
    %v1494 = vsel %vm213, %v1490, %v1492
    %1497 = vst [vmem:[#allocation7 + $0xc0] sm:$0xff] %v1493
    %1498 = vst [vmem:[#allocation7 + $0xc8] sm:$0xff] %v1494
    %v1499 = vld [vmem:[#allocation3 + $0x10] sm:$0xff]
    %v1500 = vld [vmem:[#allocation3 + $0x18] sm:$0xff]
    %v1501 = vld [vmem:[#allocation3 + $0x20] sm:$0xff]
    %1502 = vrot.lane.b32.xlu0 %v1471, 12
    %v1503 = vpop.permute.xlu0 %1502
    %1504 = vrot.lane.b32.xlu0 %v1472, 12
    %v1505 = vpop.permute.xlu0 %1504
    %vm1506 = vcmask 97280
    %v1507 = vsel %vm1506, %v1503, %v1505
    %v1511 = vmul.f32 %v1499, %v1503
    %v1512 = vmul.f32 %v1500, %v1507
    %v1513 = vmul.f32 %v1501, %v1505
    %1517 = vrot.lane.b32.xlu0 %v1511, 116
    %v1518 = vpop.permute.xlu0 %1517
    %1519 = vrot.lane.b32.xlu0 %v1512, 116
    %v1520 = vpop.permute.xlu0 %1519
    %1521 = vrot.lane.b32.xlu0 %v1513, 116
    %v1522 = vpop.permute.xlu0 %1521
    %v1523 = vsel %vm734, %v1518, %v1520
    %v1524 = vsel %vm734, %v1520, %v1522
    %1527 = vst [vmem:[#allocation7 + $0xd0] sm:$0xff] %v1523
    %1528 = vst [vmem:[#allocation7 + $0xd8] sm:$0xff] %v1524
    %v1529 = vld [vmem:[#allocation14] sm:$0xf]
    %v1530 = vld [vmem:[#allocation7] sm:$0xff]
    %v1531 = vld [vmem:[#allocation7 + $0x8] sm:$0xff]
    %v1532 = vld [vmem:[#allocation7 + $0x10] sm:$0xff]
    %v1533 = vld [vmem:[#allocation7 + $0x18] sm:$0xff]
    %v1534 = vld [vmem:[#allocation7 + $0x20] sm:$0xff]
    %v1535 = vld [vmem:[#allocation7 + $0x28] sm:$0xff]
    %v1536 = vld [vmem:[#allocation7 + $0x30] sm:$0xff]
    %v1537 = vld [vmem:[#allocation7 + $0x38] sm:$0xff]
    %v1538 = vld [vmem:[#allocation7 + $0x40] sm:$0xff]
    %v1539 = vld [vmem:[#allocation7 + $0x48] sm:$0xff]
    %v1540 = vld [vmem:[#allocation7 + $0x50] sm:$0xff]
    %v1541 = vld [vmem:[#allocation7 + $0x58] sm:$0xff]
    %v1542 = vld [vmem:[#allocation7 + $0x60] sm:$0xff]
    %v1543 = vld [vmem:[#allocation7 + $0x68] sm:$0xff]
    %v1544 = vld [vmem:[#allocation7 + $0x70] sm:$0xff]
    %v1545 = vld [vmem:[#allocation7 + $0x78] sm:$0xff]
    %v1546 = vld [vmem:[#allocation7 + $0x80] sm:$0xff]
    %v1547 = vld [vmem:[#allocation7 + $0x88] sm:$0xff]
    %v1548 = vld [vmem:[#allocation7 + $0x90] sm:$0xff]
    %v1549 = vld [vmem:[#allocation7 + $0x98] sm:$0xff]
    %v1550 = vld [vmem:[#allocation7 + $0xa0] sm:$0xff]
    %v1551 = vld [vmem:[#allocation7 + $0xa8] sm:$0xff]
    %v1552 = vld [vmem:[#allocation7 + $0xb0] sm:$0xff]
    %v1553 = vld [vmem:[#allocation7 + $0xb8] sm:$0xff]
    %v1554 = vld [vmem:[#allocation7 + $0xc0] sm:$0xff]
    %v1555 = vld [vmem:[#allocation7 + $0xc8] sm:$0xff]
    %v1556 = vld [vmem:[#allocation7 + $0xd0] sm:$0xff]
    %v1557 = vld [vmem:[#allocation7 + $0xd8] sm:$0xff]
    %v1558 = vpack.c.bf16 %v1534, %v1530
    %v1559 = vpack.c.bf16 %v1535, %v1531
    %v1560 = vpack.c.bf16 %v1536, %v1532
    %v1561 = vpack.c.bf16 %v1537, %v1533
    %v1562 = vpack.c.bf16 %v1542, %v1538
    %v1563 = vpack.c.bf16 %v1543, %v1539
    %v1564 = vpack.c.bf16 %v1544, %v1540
    %v1565 = vpack.c.bf16 %v1545, %v1541
    %v1566 = vpack.c.bf16 %v1550, %v1546
    %v1567 = vpack.c.bf16 %v1551, %v1547
    %v1568 = vpack.c.bf16 %v1552, %v1548
    %v1569 = vpack.c.bf16 %v1553, %v1549
    %v1570 = vpack.c.bf16 %v1554, %v1554
    %v1571 = vpack.c.bf16 %v1555, %v1555
    %v1572 = vpack.c.bf16 %v1556, %v1556
    %v1573 = vpack.c.bf16 %v1557, %v1557
    %v1575 = vsel %vm797, %v1529, 0
    %v1578 = vsel %vm801, %v1570, 0
    %v1581 = vsel %vm801, %v1571, 0
    %v1584 = vsel %vm801, %v1572, 0
    %v1587 = vsel %vm801, %v1573, 0
    %1589 = vmatpush.bf16.msra.mxu0 0
    %1590 = vmatpush.bf16.msra.mxu0 0
    %1591 = vmatpush.bf16.msra.mxu0 0
    %1592 = vmatpush.bf16.msra.mxu0 0
    %1593 = vmatpush.bf16.msra.mxu0 %v1578
    %1594 = vmatpush.bf16.msra.mxu0 %v1566
    %1595 = vmatpush.bf16.msra.mxu0 %v1562
    %1596 = vmatpush.bf16.msra.mxu0 %v1558
    %1597 = vmatmul.bf16.gmra.mxu0 %v1575
    %v1598 = vpop.f32.mrf.mxu0
    %v1599 = vadd.f32 0.0, %v1598
    %v1600 = vpop.f32.mrf.mxu0
    %1601 = vdwg.mxu0
    %1602 = vmatpush.bf16.msra.mxu0 0
    %1603 = vmatpush.bf16.msra.mxu0 0
    %1604 = vmatpush.bf16.msra.mxu0 0
    %1605 = vmatpush.bf16.msra.mxu0 0
    %1606 = vmatpush.bf16.msra.mxu0 %v1581
    %1607 = vmatpush.bf16.msra.mxu0 %v1567
    %1608 = vmatpush.bf16.msra.mxu0 %v1563
    %1609 = vmatpush.bf16.msra.mxu0 %v1559
    %1610 = vmatmul.bf16.gmra.mxu0 %v1575
    %v1611 = vpop.f32.mrf.mxu0
    %v1612 = vadd.f32 0.0, %v1611
    %v1613 = vpop.f32.mrf.mxu0
    %1614 = vdwg.mxu0
    %1615 = vmatpush.bf16.msra.mxu0 0
    %1616 = vmatpush.bf16.msra.mxu0 0
    %1617 = vmatpush.bf16.msra.mxu0 0
    %1618 = vmatpush.bf16.msra.mxu0 0
    %1619 = vmatpush.bf16.msra.mxu0 %v1584
    %1620 = vmatpush.bf16.msra.mxu0 %v1568
    %1621 = vmatpush.bf16.msra.mxu0 %v1564
    %1622 = vmatpush.bf16.msra.mxu0 %v1560
    %1623 = vmatmul.bf16.gmra.mxu0 %v1575
    %v1624 = vpop.f32.mrf.mxu0
    %v1625 = vadd.f32 0.0, %v1624
    %v1626 = vpop.f32.mrf.mxu0
    %1627 = vdwg.mxu0
    %1628 = vmatpush.bf16.msra.mxu0 0
    %1629 = vmatpush.bf16.msra.mxu0 0
    %1630 = vmatpush.bf16.msra.mxu0 0
    %1631 = vmatpush.bf16.msra.mxu0 0
    %1632 = vmatpush.bf16.msra.mxu0 %v1587
    %1633 = vmatpush.bf16.msra.mxu0 %v1569
    %1634 = vmatpush.bf16.msra.mxu0 %v1565
    %1635 = vmatpush.bf16.msra.mxu0 %v1561
    %1636 = vmatmul.bf16.gmra.mxu0 %v1575
    %v1637 = vpop.f32.mrf.mxu0
    %v1638 = vadd.f32 0.0, %v1637
    %v1639 = vpop.f32.mrf.mxu0
    %1640 = vdwg.mxu0
    %v1641 = vld [vmem:[%s7] sm:$0xff]
    %1643 = vset.pattern.permute.xlu0 0
    %1644 = vperm.xlu0 %1643, %v1641
    %v1645 = vpop.permute.xlu0 %1644
    %v1647 = vadd.f32 %v1599, %v1645
    %v1648 = vadd.f32 %v1612, %v1645
    %v1649 = vld [vmem:[#allocation16] sm:$0xf]
    %v1650 = vld [vmem:[#allocation4] sm:$0xff]
    %v1651 = vld [vmem:[#allocation4 + $0x8] sm:$0xff]
    %v1652 = vpack.c.bf16 %v1650, %v1650
    %v1653 = vpack.c.bf16 %v1651, %v1651
    %v1655 = vsel %vm1249, %v1649, 0
    %v1658 = vsel %vm801, %v1652, 0
    %v1661 = vsel %vm801, %v1653, 0
    %1663 = vmatpush.bf16.msra.mxu0 0
    %1664 = vmatpush.bf16.msra.mxu0 0
    %1665 = vmatpush.bf16.msra.mxu0 0
    %1666 = vmatpush.bf16.msra.mxu0 0
    %1667 = vmatpush.bf16.msra.mxu0 0
    %1668 = vmatpush.bf16.msra.mxu0 0
    %1669 = vmatpush.bf16.msra.mxu0 0
    %1670 = vmatpush.bf16.msra.mxu0 %v1658
    %1671 = vmatmul.bf16.gmra.mxu0 %v1655
    %v1672 = vpop.f32.mrf.mxu0
    %v1673 = vadd.f32 0.0, %v1672
    %v1674 = vpop.f32.mrf.mxu0
    %1675 = vdwg.mxu0
    %1676 = vmatpush.bf16.msra.mxu0 0
    %1677 = vmatpush.bf16.msra.mxu0 0
    %1678 = vmatpush.bf16.msra.mxu0 0
    %1679 = vmatpush.bf16.msra.mxu0 0
    %1680 = vmatpush.bf16.msra.mxu0 0
    %1681 = vmatpush.bf16.msra.mxu0 0
    %1682 = vmatpush.bf16.msra.mxu0 0
    %1683 = vmatpush.bf16.msra.mxu0 %v1661
    %1684 = vmatmul.bf16.gmra.mxu0 %v1655
    %v1685 = vpop.f32.mrf.mxu0
    %v1686 = vadd.f32 0.0, %v1685
    %v1687 = vpop.f32.mrf.mxu0
    %1688 = vdwg.mxu0
    %v1689 = vadd.f32 %v1647, %v1673
    %v1690 = vadd.f32 %v1648, %v1686
    %s1691 = scalar_lea.vmem [#allocation16], 4
    %v1692 = vld [vmem:[%s1691] sm:$0xf]
    %v1693 = vld [vmem:[#allocation4] sm:$0xff]
    %v1694 = vld [vmem:[#allocation4 + $0x8] sm:$0xff]
    %v1695 = vld [vmem:[#allocation4 + $0x10] sm:$0xff]
    %v1696 = vpack.c.bf16 %v1693, %v1693
    %v1697 = vpack.c.bf16 %v1694, %v1694
    %v1698 = vpack.c.bf16 %v1695, %v1695
    %1702 = vrot.lane.b32.xlu0 %v1696, 112
    %v1703 = vpop.permute.xlu0 %1702
    %1704 = vrot.lane.b32.xlu0 %v1697, 112
    %v1705 = vpop.permute.xlu0 %1704
    %1706 = vrot.lane.b32.xlu0 %v1698, 112
    %v1707 = vpop.permute.xlu0 %1706
    %vm1708 = vcmask 916480
    %v1709 = vsel %vm1708, %v1703, %v1705
    %v1710 = vsel %vm1708, %v1705, %v1707
    %v1712 = vsel %vm1249, %v1692, 0
    %v1715 = vsel %vm801, %v1709, 0
    %v1718 = vsel %vm801, %v1710, 0
    %1720 = vmatpush.bf16.msra.mxu0 0
    %1721 = vmatpush.bf16.msra.mxu0 0
    %1722 = vmatpush.bf16.msra.mxu0 0
    %1723 = vmatpush.bf16.msra.mxu0 0
    %1724 = vmatpush.bf16.msra.mxu0 0
    %1725 = vmatpush.bf16.msra.mxu0 0
    %1726 = vmatpush.bf16.msra.mxu0 0
    %1727 = vmatpush.bf16.msra.mxu0 %v1715
    %1728 = vmatmul.bf16.gmra.mxu0 %v1712
    %v1729 = vpop.f32.mrf.mxu0
    %v1730 = vadd.f32 0.0, %v1729
    %v1731 = vpop.f32.mrf.mxu0
    %1732 = vdwg.mxu0
    %1733 = vmatpush.bf16.msra.mxu0 0
    %1734 = vmatpush.bf16.msra.mxu0 0
    %1735 = vmatpush.bf16.msra.mxu0 0
    %1736 = vmatpush.bf16.msra.mxu0 0
    %1737 = vmatpush.bf16.msra.mxu0 0
    %1738 = vmatpush.bf16.msra.mxu0 0
    %1739 = vmatpush.bf16.msra.mxu0 0
    %1740 = vmatpush.bf16.msra.mxu0 %v1718
    %1741 = vmatmul.bf16.gmra.mxu0 %v1712
    %v1742 = vpop.f32.mrf.mxu0
    %v1743 = vadd.f32 0.0, %v1742
    %v1744 = vpop.f32.mrf.mxu0
    %1745 = vdwg.mxu0
    %v1746 = vadd.f32 %v1689, %v1730
    %v1747 = vadd.f32 %v1690, %v1743
    %s1748 = scalar_lea.vmem [#allocation16], 8
    %v1749 = vld [vmem:[%s1748] sm:$0xf]
    %1750 = vrot.lane.b32.xlu0 %v1696, 96
    %v1751 = vpop.permute.xlu0 %1750
    %1752 = vrot.lane.b32.xlu0 %v1697, 96
    %v1753 = vpop.permute.xlu0 %1752
    %1754 = vrot.lane.b32.xlu0 %v1698, 96
    %v1755 = vpop.permute.xlu0 %1754
    %vm1756 = vcmask 785408
    %v1757 = vsel %vm1756, %v1751, %v1753
    %v1758 = vsel %vm1756, %v1753, %v1755
    %v1760 = vsel %vm1249, %v1749, 0
    %v1763 = vsel %vm801, %v1757, 0
    %v1766 = vsel %vm801, %v1758, 0
    %1768 = vmatpush.bf16.msra.mxu0 0
    %1769 = vmatpush.bf16.msra.mxu0 0
    %1770 = vmatpush.bf16.msra.mxu0 0
    %1771 = vmatpush.bf16.msra.mxu0 0
    %1772 = vmatpush.bf16.msra.mxu0 0
    %1773 = vmatpush.bf16.msra.mxu0 0
    %1774 = vmatpush.bf16.msra.mxu0 0
    %1775 = vmatpush.bf16.msra.mxu0 %v1763
    %1776 = vmatmul.bf16.gmra.mxu0 %v1760
    %v1777 = vpop.f32.mrf.mxu0
    %v1778 = vadd.f32 0.0, %v1777
    %v1779 = vpop.f32.mrf.mxu0
    %1780 = vdwg.mxu0
    %1781 = vmatpush.bf16.msra.mxu0 0
    %1782 = vmatpush.bf16.msra.mxu0 0
    %1783 = vmatpush.bf16.msra.mxu0 0
    %1784 = vmatpush.bf16.msra.mxu0 0
    %1785 = vmatpush.bf16.msra.mxu0 0
    %1786 = vmatpush.bf16.msra.mxu0 0
    %1787 = vmatpush.bf16.msra.mxu0 0
    %1788 = vmatpush.bf16.msra.mxu0 %v1766
    %1789 = vmatmul.bf16.gmra.mxu0 %v1760
    %v1790 = vpop.f32.mrf.mxu0
    %v1791 = vadd.f32 0.0, %v1790
    %v1792 = vpop.f32.mrf.mxu0
    %1793 = vdwg.mxu0
    %v1794 = vadd.f32 %v1746, %v1778
    %v1795 = vadd.f32 %v1747, %v1791
    %s1796 = scalar_lea.vmem [#allocation16], 12
    %v1797 = vld [vmem:[%s1796] sm:$0xf]
    %1798 = vrot.lane.b32.xlu0 %v1696, 80
    %v1799 = vpop.permute.xlu0 %1798
    %1800 = vrot.lane.b32.xlu0 %v1697, 80
    %v1801 = vpop.permute.xlu0 %1800
    %1802 = vrot.lane.b32.xlu0 %v1698, 80
    %v1803 = vpop.permute.xlu0 %1802
    %vm1804 = vcmask 654336
    %v1805 = vsel %vm1804, %v1799, %v1801
    %v1806 = vsel %vm1804, %v1801, %v1803
    %v1808 = vsel %vm1249, %v1797, 0
    %v1811 = vsel %vm801, %v1805, 0
    %v1814 = vsel %vm801, %v1806, 0
    %1816 = vmatpush.bf16.msra.mxu0 0
    %1817 = vmatpush.bf16.msra.mxu0 0
    %1818 = vmatpush.bf16.msra.mxu0 0
    %1819 = vmatpush.bf16.msra.mxu0 0
    %1820 = vmatpush.bf16.msra.mxu0 0
    %1821 = vmatpush.bf16.msra.mxu0 0
    %1822 = vmatpush.bf16.msra.mxu0 0
    %1823 = vmatpush.bf16.msra.mxu0 %v1811
    %1824 = vmatmul.bf16.gmra.mxu0 %v1808
    %v1825 = vpop.f32.mrf.mxu0
    %v1826 = vadd.f32 0.0, %v1825
    %v1827 = vpop.f32.mrf.mxu0
    %1828 = vdwg.mxu0
    %1829 = vmatpush.bf16.msra.mxu0 0
    %1830 = vmatpush.bf16.msra.mxu0 0
    %1831 = vmatpush.bf16.msra.mxu0 0
    %1832 = vmatpush.bf16.msra.mxu0 0
    %1833 = vmatpush.bf16.msra.mxu0 0
    %1834 = vmatpush.bf16.msra.mxu0 0
    %1835 = vmatpush.bf16.msra.mxu0 0
    %1836 = vmatpush.bf16.msra.mxu0 %v1814
    %1837 = vmatmul.bf16.gmra.mxu0 %v1808
    %v1838 = vpop.f32.mrf.mxu0
    %v1839 = vadd.f32 0.0, %v1838
    %v1840 = vpop.f32.mrf.mxu0
    %1841 = vdwg.mxu0
    %v1842 = vadd.f32 %v1794, %v1826
    %v1843 = vadd.f32 %v1795, %v1839
    %s1844 = scalar_lea.vmem [#allocation16], 16
    %v1845 = vld [vmem:[%s1844] sm:$0xf]
    %1846 = vrot.lane.b32.xlu0 %v1696, 64
    %v1847 = vpop.permute.xlu0 %1846
    %1848 = vrot.lane.b32.xlu0 %v1697, 64
    %v1849 = vpop.permute.xlu0 %1848
    %1850 = vrot.lane.b32.xlu0 %v1698, 64
    %v1851 = vpop.permute.xlu0 %1850
    %vm1852 = vcmask 523264
    %v1853 = vsel %vm1852, %v1847, %v1849
    %v1854 = vsel %vm1852, %v1849, %v1851
    %v1856 = vsel %vm1249, %v1845, 0
    %v1859 = vsel %vm801, %v1853, 0
    %v1862 = vsel %vm801, %v1854, 0
    %1864 = vmatpush.bf16.msra.mxu0 0
    %1865 = vmatpush.bf16.msra.mxu0 0
    %1866 = vmatpush.bf16.msra.mxu0 0
    %1867 = vmatpush.bf16.msra.mxu0 0
    %1868 = vmatpush.bf16.msra.mxu0 0
    %1869 = vmatpush.bf16.msra.mxu0 0
    %1870 = vmatpush.bf16.msra.mxu0 0
    %1871 = vmatpush.bf16.msra.mxu0 %v1859
    %1872 = vmatmul.bf16.gmra.mxu0 %v1856
    %v1873 = vpop.f32.mrf.mxu0
    %v1874 = vadd.f32 0.0, %v1873
    %v1875 = vpop.f32.mrf.mxu0
    %1876 = vdwg.mxu0
    %1877 = vmatpush.bf16.msra.mxu0 0
    %1878 = vmatpush.bf16.msra.mxu0 0
    %1879 = vmatpush.bf16.msra.mxu0 0
    %1880 = vmatpush.bf16.msra.mxu0 0
    %1881 = vmatpush.bf16.msra.mxu0 0
    %1882 = vmatpush.bf16.msra.mxu0 0
    %1883 = vmatpush.bf16.msra.mxu0 0
    %1884 = vmatpush.bf16.msra.mxu0 %v1862
    %1885 = vmatmul.bf16.gmra.mxu0 %v1856
    %v1886 = vpop.f32.mrf.mxu0
    %v1887 = vadd.f32 0.0, %v1886
    %v1888 = vpop.f32.mrf.mxu0
    %1889 = vdwg.mxu0
    %v1890 = vadd.f32 %v1842, %v1874
    %v1891 = vadd.f32 %v1843, %v1887
    %s1892 = scalar_lea.vmem [#allocation16], 20
    %v1893 = vld [vmem:[%s1892] sm:$0xf]
    %1894 = vrot.lane.b32.xlu0 %v1696, 48
    %v1895 = vpop.permute.xlu0 %1894
    %1896 = vrot.lane.b32.xlu0 %v1697, 48
    %v1897 = vpop.permute.xlu0 %1896
    %1898 = vrot.lane.b32.xlu0 %v1698, 48
    %v1899 = vpop.permute.xlu0 %1898
    %vm1900 = vcmask 392192
    %v1901 = vsel %vm1900, %v1895, %v1897
    %v1902 = vsel %vm1900, %v1897, %v1899
    %v1904 = vsel %vm1249, %v1893, 0
    %v1907 = vsel %vm801, %v1901, 0
    %v1910 = vsel %vm801, %v1902, 0
    %1912 = vmatpush.bf16.msra.mxu0 0
    %1913 = vmatpush.bf16.msra.mxu0 0
    %1914 = vmatpush.bf16.msra.mxu0 0
    %1915 = vmatpush.bf16.msra.mxu0 0
    %1916 = vmatpush.bf16.msra.mxu0 0
    %1917 = vmatpush.bf16.msra.mxu0 0
    %1918 = vmatpush.bf16.msra.mxu0 0
    %1919 = vmatpush.bf16.msra.mxu0 %v1907
    %1920 = vmatmul.bf16.gmra.mxu0 %v1904
    %v1921 = vpop.f32.mrf.mxu0
    %v1922 = vadd.f32 0.0, %v1921
    %v1923 = vpop.f32.mrf.mxu0
    %1924 = vdwg.mxu0
    %1925 = vmatpush.bf16.msra.mxu0 0
    %1926 = vmatpush.bf16.msra.mxu0 0
    %1927 = vmatpush.bf16.msra.mxu0 0
    %1928 = vmatpush.bf16.msra.mxu0 0
    %1929 = vmatpush.bf16.msra.mxu0 0
    %1930 = vmatpush.bf16.msra.mxu0 0
    %1931 = vmatpush.bf16.msra.mxu0 0
    %1932 = vmatpush.bf16.msra.mxu0 %v1910
    %1933 = vmatmul.bf16.gmra.mxu0 %v1904
    %v1934 = vpop.f32.mrf.mxu0
    %v1935 = vadd.f32 0.0, %v1934
    %v1936 = vpop.f32.mrf.mxu0
    %1937 = vdwg.mxu0
    %v1938 = vadd.f32 %v1890, %v1922
    %v1939 = vadd.f32 %v1891, %v1935
    %s1940 = scalar_lea.vmem [#allocation16], 24
    %v1941 = vld [vmem:[%s1940] sm:$0xf]
    %1942 = vrot.lane.b32.xlu0 %v1696, 32
    %v1943 = vpop.permute.xlu0 %1942
    %1944 = vrot.lane.b32.xlu0 %v1697, 32
    %v1945 = vpop.permute.xlu0 %1944
    %1946 = vrot.lane.b32.xlu0 %v1698, 32
    %v1947 = vpop.permute.xlu0 %1946
    %vm1948 = vcmask 261120
    %v1949 = vsel %vm1948, %v1943, %v1945
    %v1950 = vsel %vm1948, %v1945, %v1947
    %v1952 = vsel %vm1249, %v1941, 0
    %v1955 = vsel %vm801, %v1949, 0
    %v1958 = vsel %vm801, %v1950, 0
    %1960 = vmatpush.bf16.msra.mxu0 0
    %1961 = vmatpush.bf16.msra.mxu0 0
    %1962 = vmatpush.bf16.msra.mxu0 0
    %1963 = vmatpush.bf16.msra.mxu0 0
    %1964 = vmatpush.bf16.msra.mxu0 0
    %1965 = vmatpush.bf16.msra.mxu0 0
    %1966 = vmatpush.bf16.msra.mxu0 0
    %1967 = vmatpush.bf16.msra.mxu0 %v1955
    %1968 = vmatmul.bf16.gmra.mxu0 %v1952
    %v1969 = vpop.f32.mrf.mxu0
    %v1970 = vadd.f32 0.0, %v1969
    %v1971 = vpop.f32.mrf.mxu0
    %1972 = vdwg.mxu0
    %1973 = vmatpush.bf16.msra.mxu0 0
    %1974 = vmatpush.bf16.msra.mxu0 0
    %1975 = vmatpush.bf16.msra.mxu0 0
    %1976 = vmatpush.bf16.msra.mxu0 0
    %1977 = vmatpush.bf16.msra.mxu0 0
    %1978 = vmatpush.bf16.msra.mxu0 0
    %1979 = vmatpush.bf16.msra.mxu0 0
    %1980 = vmatpush.bf16.msra.mxu0 %v1958
    %1981 = vmatmul.bf16.gmra.mxu0 %v1952
    %v1982 = vpop.f32.mrf.mxu0
    %v1983 = vadd.f32 0.0, %v1982
    %v1984 = vpop.f32.mrf.mxu0
    %1985 = vdwg.mxu0
    %v1986 = vadd.f32 %v1938, %v1970
    %v1987 = vadd.f32 %v1939, %v1983
    %v1988 = vadd.f32 %v1986, %v1987
    %1989 = vadd.xlane.f32.xlu0 %v1988
    %v1990 = vpop.xlane.xlu0 %1989
    %v1991 = vmul.f32 %v1990, 0.00390625
    %v1992 = vsub.f32 %v1986, %v1991
    %v1993 = vsub.f32 %v1987, %v1991
    %v1994 = vmul.f32 %v1992, %v1992
    %v1995 = vmul.f32 %v1993, %v1993
    %v1996 = vadd.f32 %v1994, %v1995
    %1997 = vadd.xlane.f32.xlu0 %v1996
    %v1998 = vpop.xlane.xlu0 %1997
    %v1999 = vmul.f32 %v1998, 0.00390625
    %v2000 = vadd.f32 %v1999, 1e-05
    %v2001 = vrsqrt.pop %v2000
    %v2002 = vmul.f32 %v2001, %v2000
    %v2003 = vmul.f32 %v2002, %v2001
    %v2004 = vmul.f32 0.5, %v2003
    %v2005 = vsub.f32 1.5, %v2004
    %v2006 = vmul.f32 %v2001, %v2005
    %vm2007 = vweird.f32 %v2000
    %vm2008 = vweird.f32 %v2001
    %vm2009 = vmor %vm2007, %vm2008
    %v2010 = vsel %vm2009, %v2001, %v2006
    %v2011 = vmul.f32 %v1992, %v2010
    %v2012 = vmul.f32 %v1993, %v2010
    %v2013 = vmul.f32 %v2011, 0.2
    %v2014 = vmul.f32 %v2012, 0.2
    %v2015 = vmax.f32 %v2011, %v2013
    %v2016 = vmax.f32 %v2012, %v2014
    %2017 = vst [vmem:[#allocation17] sm:$0xff] %v2015
    %2018 = vst [vmem:[#allocation17 + $0x8] sm:$0xff] %v2016
    %v2019 = vld [vmem:[%s7] sm:$0xff]
    %2021 = vset.pattern.permute.xlu0 0
    %2022 = vperm.xlu0 %2021, %v2019
    %v2023 = vpop.permute.xlu0 %2022
    %v2025 = vadd.f32 %v1625, %v2023
    %v2026 = vadd.f32 %v1638, %v2023
    %v2027 = vld [vmem:[#allocation16] sm:$0xf]
    %v2028 = vld [vmem:[#allocation4 + $0x10] sm:$0xff]
    %v2029 = vld [vmem:[#allocation4 + $0x18] sm:$0xff]
    %v2030 = vld [vmem:[#allocation4 + $0x20] sm:$0xff]
    %v2031 = vpack.c.bf16 %v2028, %v2028
    %v2032 = vpack.c.bf16 %v2029, %v2029
    %v2033 = vpack.c.bf16 %v2030, %v2030
    %2037 = vrot.lane.b32.xlu0 %v2031, 32
    %v2038 = vpop.permute.xlu0 %2037
    %2039 = vrot.lane.b32.xlu0 %v2032, 32
    %v2040 = vpop.permute.xlu0 %2039
    %2041 = vrot.lane.b32.xlu0 %v2033, 32
    %v2042 = vpop.permute.xlu0 %2041
    %v2043 = vsel %vm1948, %v2038, %v2040
    %v2044 = vsel %vm1948, %v2040, %v2042
    %v2046 = vsel %vm1249, %v2027, 0
    %v2049 = vsel %vm801, %v2043, 0
    %v2052 = vsel %vm801, %v2044, 0
    %2054 = vmatpush.bf16.msra.mxu0 0
    %2055 = vmatpush.bf16.msra.mxu0 0
    %2056 = vmatpush.bf16.msra.mxu0 0
    %2057 = vmatpush.bf16.msra.mxu0 0
    %2058 = vmatpush.bf16.msra.mxu0 0
    %2059 = vmatpush.bf16.msra.mxu0 0
    %2060 = vmatpush.bf16.msra.mxu0 0
    %2061 = vmatpush.bf16.msra.mxu0 %v2049
    %2062 = vmatmul.bf16.gmra.mxu0 %v2046
    %v2063 = vpop.f32.mrf.mxu0
    %v2064 = vadd.f32 0.0, %v2063
    %v2065 = vpop.f32.mrf.mxu0
    %2066 = vdwg.mxu0
    %2067 = vmatpush.bf16.msra.mxu0 0
    %2068 = vmatpush.bf16.msra.mxu0 0
    %2069 = vmatpush.bf16.msra.mxu0 0
    %2070 = vmatpush.bf16.msra.mxu0 0
    %2071 = vmatpush.bf16.msra.mxu0 0
    %2072 = vmatpush.bf16.msra.mxu0 0
    %2073 = vmatpush.bf16.msra.mxu0 0
    %2074 = vmatpush.bf16.msra.mxu0 %v2052
    %2075 = vmatmul.bf16.gmra.mxu0 %v2046
    %v2076 = vpop.f32.mrf.mxu0
    %v2077 = vadd.f32 0.0, %v2076
    %v2078 = vpop.f32.mrf.mxu0
    %2079 = vdwg.mxu0
    %v2080 = vadd.f32 %v2025, %v2064
    %v2081 = vadd.f32 %v2026, %v2077
    %v2082 = vld [vmem:[%s1691] sm:$0xf]
    %2083 = vrot.lane.b32.xlu0 %v2031, 16
    %v2084 = vpop.permute.xlu0 %2083
    %2085 = vrot.lane.b32.xlu0 %v2032, 16
    %v2086 = vpop.permute.xlu0 %2085
    %2087 = vrot.lane.b32.xlu0 %v2033, 16
    %v2088 = vpop.permute.xlu0 %2087
    %vm2089 = vcmask 130048
    %v2090 = vsel %vm2089, %v2084, %v2086
    %v2091 = vsel %vm2089, %v2086, %v2088
    %v2093 = vsel %vm1249, %v2082, 0
    %v2096 = vsel %vm801, %v2090, 0
    %v2099 = vsel %vm801, %v2091, 0
    %2101 = vmatpush.bf16.msra.mxu0 0
    %2102 = vmatpush.bf16.msra.mxu0 0
    %2103 = vmatpush.bf16.msra.mxu0 0
    %2104 = vmatpush.bf16.msra.mxu0 0
    %2105 = vmatpush.bf16.msra.mxu0 0
    %2106 = vmatpush.bf16.msra.mxu0 0
    %2107 = vmatpush.bf16.msra.mxu0 0
    %2108 = vmatpush.bf16.msra.mxu0 %v2096
    %2109 = vmatmul.bf16.gmra.mxu0 %v2093
    %v2110 = vpop.f32.mrf.mxu0
    %v2111 = vadd.f32 0.0, %v2110
    %v2112 = vpop.f32.mrf.mxu0
    %2113 = vdwg.mxu0
    %2114 = vmatpush.bf16.msra.mxu0 0
    %2115 = vmatpush.bf16.msra.mxu0 0
    %2116 = vmatpush.bf16.msra.mxu0 0
    %2117 = vmatpush.bf16.msra.mxu0 0
    %2118 = vmatpush.bf16.msra.mxu0 0
    %2119 = vmatpush.bf16.msra.mxu0 0
    %2120 = vmatpush.bf16.msra.mxu0 0
    %2121 = vmatpush.bf16.msra.mxu0 %v2099
    %2122 = vmatmul.bf16.gmra.mxu0 %v2093
    %v2123 = vpop.f32.mrf.mxu0
    %v2124 = vadd.f32 0.0, %v2123
    %v2125 = vpop.f32.mrf.mxu0
    %2126 = vdwg.mxu0
    %v2127 = vadd.f32 %v2080, %v2111
    %v2128 = vadd.f32 %v2081, %v2124
    %v2129 = vld [vmem:[%s1748] sm:$0xf]
    %v2131 = vsel %vm1249, %v2129, 0
    %v2134 = vsel %vm801, %v2032, 0
    %v2137 = vsel %vm801, %v2033, 0
    %2139 = vmatpush.bf16.msra.mxu0 0
    %2140 = vmatpush.bf16.msra.mxu0 0
    %2141 = vmatpush.bf16.msra.mxu0 0
    %2142 = vmatpush.bf16.msra.mxu0 0
    %2143 = vmatpush.bf16.msra.mxu0 0
    %2144 = vmatpush.bf16.msra.mxu0 0
    %2145 = vmatpush.bf16.msra.mxu0 0
    %2146 = vmatpush.bf16.msra.mxu0 %v2134
    %2147 = vmatmul.bf16.gmra.mxu0 %v2131
    %v2148 = vpop.f32.mrf.mxu0
    %v2149 = vadd.f32 0.0, %v2148
    %v2150 = vpop.f32.mrf.mxu0
    %2151 = vdwg.mxu0
    %2152 = vmatpush.bf16.msra.mxu0 0
    %2153 = vmatpush.bf16.msra.mxu0 0
    %2154 = vmatpush.bf16.msra.mxu0 0
    %2155 = vmatpush.bf16.msra.mxu0 0
    %2156 = vmatpush.bf16.msra.mxu0 0
    %2157 = vmatpush.bf16.msra.mxu0 0
    %2158 = vmatpush.bf16.msra.mxu0 0
    %2159 = vmatpush.bf16.msra.mxu0 %v2137
    %2160 = vmatmul.bf16.gmra.mxu0 %v2131
    %v2161 = vpop.f32.mrf.mxu0
    %v2162 = vadd.f32 0.0, %v2161
    %v2163 = vpop.f32.mrf.mxu0
    %2164 = vdwg.mxu0
    %v2165 = vadd.f32 %v2127, %v2149
    %v2166 = vadd.f32 %v2128, %v2162
    %v2167 = vld [vmem:[%s1796] sm:$0xf]
    %v2168 = vld [vmem:[#allocation4 + $0x18] sm:$0xff]
    %v2169 = vld [vmem:[#allocation4 + $0x20] sm:$0xff]
    %v2170 = vld [vmem:[#allocation4 + $0x28] sm:$0xff]
    %v2171 = vpack.c.bf16 %v2168, %v2168
    %v2172 = vpack.c.bf16 %v2169, %v2169
    %v2173 = vpack.c.bf16 %v2170, %v2170
    %2177 = vrot.lane.b32.xlu0 %v2171, 112
    %v2178 = vpop.permute.xlu0 %2177
    %2179 = vrot.lane.b32.xlu0 %v2172, 112
    %v2180 = vpop.permute.xlu0 %2179
    %2181 = vrot.lane.b32.xlu0 %v2173, 112
    %v2182 = vpop.permute.xlu0 %2181
    %v2183 = vsel %vm1708, %v2178, %v2180
    %v2184 = vsel %vm1708, %v2180, %v2182
    %v2186 = vsel %vm1249, %v2167, 0
    %v2189 = vsel %vm801, %v2183, 0
    %v2192 = vsel %vm801, %v2184, 0
    %2194 = vmatpush.bf16.msra.mxu0 0
    %2195 = vmatpush.bf16.msra.mxu0 0
    %2196 = vmatpush.bf16.msra.mxu0 0
    %2197 = vmatpush.bf16.msra.mxu0 0
    %2198 = vmatpush.bf16.msra.mxu0 0
    %2199 = vmatpush.bf16.msra.mxu0 0
    %2200 = vmatpush.bf16.msra.mxu0 0
    %2201 = vmatpush.bf16.msra.mxu0 %v2189
    %2202 = vmatmul.bf16.gmra.mxu0 %v2186
    %v2203 = vpop.f32.mrf.mxu0
    %v2204 = vadd.f32 0.0, %v2203
    %v2205 = vpop.f32.mrf.mxu0
    %2206 = vdwg.mxu0
    %2207 = vmatpush.bf16.msra.mxu0 0
    %2208 = vmatpush.bf16.msra.mxu0 0
    %2209 = vmatpush.bf16.msra.mxu0 0
    %2210 = vmatpush.bf16.msra.mxu0 0
    %2211 = vmatpush.bf16.msra.mxu0 0
    %2212 = vmatpush.bf16.msra.mxu0 0
    %2213 = vmatpush.bf16.msra.mxu0 0
    %2214 = vmatpush.bf16.msra.mxu0 %v2192
    %2215 = vmatmul.bf16.gmra.mxu0 %v2186
    %v2216 = vpop.f32.mrf.mxu0
    %v2217 = vadd.f32 0.0, %v2216
    %v2218 = vpop.f32.mrf.mxu0
    %2219 = vdwg.mxu0
    %v2220 = vadd.f32 %v2165, %v2204
    %v2221 = vadd.f32 %v2166, %v2217
    %v2222 = vld [vmem:[%s1844] sm:$0xf]
    %2223 = vrot.lane.b32.xlu0 %v2171, 96
    %v2224 = vpop.permute.xlu0 %2223
    %2225 = vrot.lane.b32.xlu0 %v2172, 96
    %v2226 = vpop.permute.xlu0 %2225
    %2227 = vrot.lane.b32.xlu0 %v2173, 96
    %v2228 = vpop.permute.xlu0 %2227
    %v2229 = vsel %vm1756, %v2224, %v2226
    %v2230 = vsel %vm1756, %v2226, %v2228
    %v2232 = vsel %vm1249, %v2222, 0
    %v2235 = vsel %vm801, %v2229, 0
    %v2238 = vsel %vm801, %v2230, 0
    %2240 = vmatpush.bf16.msra.mxu0 0
    %2241 = vmatpush.bf16.msra.mxu0 0
    %2242 = vmatpush.bf16.msra.mxu0 0
    %2243 = vmatpush.bf16.msra.mxu0 0
    %2244 = vmatpush.bf16.msra.mxu0 0
    %2245 = vmatpush.bf16.msra.mxu0 0
    %2246 = vmatpush.bf16.msra.mxu0 0
    %2247 = vmatpush.bf16.msra.mxu0 %v2235
    %2248 = vmatmul.bf16.gmra.mxu0 %v2232
    %v2249 = vpop.f32.mrf.mxu0
    %v2250 = vadd.f32 0.0, %v2249
    %v2251 = vpop.f32.mrf.mxu0
    %2252 = vdwg.mxu0
    %2253 = vmatpush.bf16.msra.mxu0 0
    %2254 = vmatpush.bf16.msra.mxu0 0
    %2255 = vmatpush.bf16.msra.mxu0 0
    %2256 = vmatpush.bf16.msra.mxu0 0
    %2257 = vmatpush.bf16.msra.mxu0 0
    %2258 = vmatpush.bf16.msra.mxu0 0
    %2259 = vmatpush.bf16.msra.mxu0 0
    %2260 = vmatpush.bf16.msra.mxu0 %v2238
    %2261 = vmatmul.bf16.gmra.mxu0 %v2232
    %v2262 = vpop.f32.mrf.mxu0
    %v2263 = vadd.f32 0.0, %v2262
    %v2264 = vpop.f32.mrf.mxu0
    %2265 = vdwg.mxu0
    %v2266 = vadd.f32 %v2220, %v2250
    %v2267 = vadd.f32 %v2221, %v2263
    %v2268 = vld [vmem:[%s1892] sm:$0xf]
    %2269 = vrot.lane.b32.xlu0 %v2171, 80
    %v2270 = vpop.permute.xlu0 %2269
    %2271 = vrot.lane.b32.xlu0 %v2172, 80
    %v2272 = vpop.permute.xlu0 %2271
    %2273 = vrot.lane.b32.xlu0 %v2173, 80
    %v2274 = vpop.permute.xlu0 %2273
    %v2275 = vsel %vm1804, %v2270, %v2272
    %v2276 = vsel %vm1804, %v2272, %v2274
    %v2278 = vsel %vm1249, %v2268, 0
    %v2281 = vsel %vm801, %v2275, 0
    %v2284 = vsel %vm801, %v2276, 0
    %2286 = vmatpush.bf16.msra.mxu0 0
    %2287 = vmatpush.bf16.msra.mxu0 0
    %2288 = vmatpush.bf16.msra.mxu0 0
    %2289 = vmatpush.bf16.msra.mxu0 0
    %2290 = vmatpush.bf16.msra.mxu0 0
    %2291 = vmatpush.bf16.msra.mxu0 0
    %2292 = vmatpush.bf16.msra.mxu0 0
    %2293 = vmatpush.bf16.msra.mxu0 %v2281
    %2294 = vmatmul.bf16.gmra.mxu0 %v2278
    %v2295 = vpop.f32.mrf.mxu0
    %v2296 = vadd.f32 0.0, %v2295
    %v2297 = vpop.f32.mrf.mxu0
    %2298 = vdwg.mxu0
    %2299 = vmatpush.bf16.msra.mxu0 0
    %2300 = vmatpush.bf16.msra.mxu0 0
    %2301 = vmatpush.bf16.msra.mxu0 0
    %2302 = vmatpush.bf16.msra.mxu0 0
    %2303 = vmatpush.bf16.msra.mxu0 0
    %2304 = vmatpush.bf16.msra.mxu0 0
    %2305 = vmatpush.bf16.msra.mxu0 0
    %2306 = vmatpush.bf16.msra.mxu0 %v2284
    %2307 = vmatmul.bf16.gmra.mxu0 %v2278
    %v2308 = vpop.f32.mrf.mxu0
    %v2309 = vadd.f32 0.0, %v2308
    %v2310 = vpop.f32.mrf.mxu0
    %2311 = vdwg.mxu0
    %v2312 = vadd.f32 %v2266, %v2296
    %v2313 = vadd.f32 %v2267, %v2309
    %v2314 = vld [vmem:[%s1940] sm:$0xf]
    %2315 = vrot.lane.b32.xlu0 %v2171, 64
    %v2316 = vpop.permute.xlu0 %2315
    %2317 = vrot.lane.b32.xlu0 %v2172, 64
    %v2318 = vpop.permute.xlu0 %2317
    %2319 = vrot.lane.b32.xlu0 %v2173, 64
    %v2320 = vpop.permute.xlu0 %2319
    %v2321 = vsel %vm1852, %v2316, %v2318
    %v2322 = vsel %vm1852, %v2318, %v2320
    %v2324 = vsel %vm1249, %v2314, 0
    %v2327 = vsel %vm801, %v2321, 0
    %v2330 = vsel %vm801, %v2322, 0
    %2332 = vmatpush.bf16.msra.mxu0 0
    %2333 = vmatpush.bf16.msra.mxu0 0
    %2334 = vmatpush.bf16.msra.mxu0 0
    %2335 = vmatpush.bf16.msra.mxu0 0
    %2336 = vmatpush.bf16.msra.mxu0 0
    %2337 = vmatpush.bf16.msra.mxu0 0
    %2338 = vmatpush.bf16.msra.mxu0 0
    %2339 = vmatpush.bf16.msra.mxu0 %v2327
    %2340 = vmatmul.bf16.gmra.mxu0 %v2324
    %v2341 = vpop.f32.mrf.mxu0
    %v2342 = vadd.f32 0.0, %v2341
    %v2343 = vpop.f32.mrf.mxu0
    %2344 = vdwg.mxu0
    %2345 = vmatpush.bf16.msra.mxu0 0
    %2346 = vmatpush.bf16.msra.mxu0 0
    %2347 = vmatpush.bf16.msra.mxu0 0
    %2348 = vmatpush.bf16.msra.mxu0 0
    %2349 = vmatpush.bf16.msra.mxu0 0
    %2350 = vmatpush.bf16.msra.mxu0 0
    %2351 = vmatpush.bf16.msra.mxu0 0
    %2352 = vmatpush.bf16.msra.mxu0 %v2330
    %2353 = vmatmul.bf16.gmra.mxu0 %v2324
    %v2354 = vpop.f32.mrf.mxu0
    %v2355 = vadd.f32 0.0, %v2354
    %v2356 = vpop.f32.mrf.mxu0
    %2357 = vdwg.mxu0
    %v2358 = vadd.f32 %v2312, %v2342
    %v2359 = vadd.f32 %v2313, %v2355
    %v2360 = vadd.f32 %v2358, %v2359
    %2361 = vadd.xlane.f32.xlu0 %v2360
    %v2362 = vpop.xlane.xlu0 %2361
    %v2363 = vmul.f32 %v2362, 0.00390625
    %v2364 = vsub.f32 %v2358, %v2363
    %v2365 = vsub.f32 %v2359, %v2363
    %v2366 = vmul.f32 %v2364, %v2364
    %v2367 = vmul.f32 %v2365, %v2365
    %v2368 = vadd.f32 %v2366, %v2367
    %2369 = vadd.xlane.f32.xlu0 %v2368
    %v2370 = vpop.xlane.xlu0 %2369
    %v2371 = vmul.f32 %v2370, 0.00390625
    %v2372 = vadd.f32 %v2371, 1e-05
    %v2373 = vrsqrt.pop %v2372
    %v2374 = vmul.f32 %v2373, %v2372
    %v2375 = vmul.f32 %v2374, %v2373
    %v2376 = vmul.f32 0.5, %v2375
    %v2377 = vsub.f32 1.5, %v2376
    %v2378 = vmul.f32 %v2373, %v2377
    %vm2379 = vweird.f32 %v2372
    %vm2380 = vweird.f32 %v2373
    %vm2381 = vmor %vm2379, %vm2380
    %v2382 = vsel %vm2381, %v2373, %v2378
    %v2383 = vmul.f32 %v2364, %v2382
    %v2384 = vmul.f32 %v2365, %v2382
    %v2385 = vmul.f32 %v2383, 0.2
    %v2386 = vmul.f32 %v2384, 0.2
    %v2387 = vmax.f32 %v2383, %v2385
    %v2388 = vmax.f32 %v2384, %v2386
    %s2389 = scalar_lea.vmem [#allocation17], 16
    %2390 = vst [vmem:[%s2389] sm:$0xff] %v2387
    %2391 = vst [vmem:[%s2389 + $0x8] sm:$0xff] %v2388
    // Predicated region
    $region62: #{tpu_custom_call.1} parent=1 // pred_check
      _
    $region63: #{tpu_custom_call.1} parent=1 // pred_check_branch
      %2393 = sbr.rel (0) target = $region65
    $region64: #{tpu_custom_call.1} parent=1 // pred_region
      %2395 = vsyncadd [#allocation10], 0
      %s2396 = sshll.u32 [#allocation17], 4
      %s2397 = int_to_ptr.vmem [resolvable:$true] %s2396
      %s2398 = sshll.u32 %s10, 4
      %s2399 = int_to_ptr.hbm [resolvable:$true] %s2398
      %2404 = dma.vmem_to_hbm [thread:$0]  %s2397, 512, %s2399, [#allocation10], 256, 256, 16
    $region65: #{tpu_custom_call.1} parent=1 // pred_fallthru
      _
    // Predicated region
    $region66: #{tpu_custom_call.1} parent=1 // pred_check
      _
    $region67: #{tpu_custom_call.1} parent=1 // pred_check_branch
      %2406 = sbr.rel (0) target = $region69
    $region68: #{tpu_custom_call.1} parent=1 // pred_region
      %2408 = dma.done [#allocation10], 512
    $region69: #{tpu_custom_call.1} parent=1 // pred_fallthru
      _
    %2409 = vsyncpa [#allocation9], 1
    %2410 = vsyncpa [#allocation12], 1
    %2411 = vsyncpa [#allocation15], 1
    %2412 = vsyncpa [#allocation10], 1

</llo_original>
